<compile_context>
chip_gen: v7x
topology: tpu7x:2x2x1
jax: 0.10.0
libtpu: 0.0.40
codegen_flags: <defaults>
</compile_context>

<pallas_src>
import numpy as np
import jax
import jax.numpy as jnp
from jax import lax
from jax.experimental import pallas as pl
from jax.experimental.pallas import tpu as pltpu


# ----------------------------- configuration --------------------------------
VOCAB = 128          # summary / document vocab size (lane-dense = 128)
HIDDEN = 32          # model hidden size
NUM_TYPES = 8        # token-type embedding rows
MAX_INPUT_LEN = 16
MAX_OUTPUT_LEN = 8
SUM_MAX_NUM_SENT = 3
BATCH = 4            # documents per kernel launch in the demo

# Packed-parameter row offsets (all row groups (8,128)-tile aligned).
BIAS_ROW = HIDDEN                    # row 32 holds b1 (pack_a) / bout (pack_b)
TYPE_OFF = 40                        # pack_a rows [40, 48)  : type_emb (8, 32)
TOK_OFF = 48                         # pack_a rows [48, 176) : tok_emb (128, 32)
PACK_A_ROWS = TOK_OFF + VOCAB        # 176
PACK_B_ROWS = 40                     # wout rows [0,32), bout row 32, zero-pad


# --------------------------- synthetic tokenizer -----------------------------
class CustomTokenizer:
    SPECIALS = {'[PAD]': 0, '[START]': 1, '[END]': 2, '[FILL]': 3,
                '.': 4, '?': 5, '!': 6}

    def __init__(self, vocab_size=VOCAB):
        self.vocab_size = vocab_size
        self._inv = {v: k for k, v in self.SPECIALS.items()}

    def token_to_id(self, tok):
        if tok in self.SPECIALS:
            return self.SPECIALS[tok]
        return 7 + (ord(tok[0]) % (self.vocab_size - 7))

    def encode(self, document):
        # Returns [tokens, token_types] just like the original (2, L) layout.
        tokens, types, t = [], [], 0
        for ch in document:
            tokens.append(self.token_to_id(ch))
            types.append(t)
            if ch in '.?!':
                t += 1
        return [tokens, types]

    def decode(self, ids):
        return " ".join(self._inv.get(i, "<%d>" % i) for i in ids)


# --------------------------- greedy summarizer -------------------------------
class GreedySummarizerPallas:
    """JAX/Pallas re-implementation of GreedySummarizer.forward semantics.

    The whole greedy decode loop (decoder embedding gather, hidden projection,
    vocab projection, log_softmax, argmax feedback, '.?!' type bump) runs inside
    a single batched Pallas TPU kernel; the [END]/[FILL] loop break is applied
    host-side on the returned per-step log-probs (post-stop rows are computed
    but never consumed, which is numerically identical for all returned rows).
    """

    def __init__(self, params, document_tokenizer, summary_tokenizer,
                 max_input_length, max_output_length,
                 summary_max_num_sentences, with_token_types=True):
        self.with_token_types = with_token_types
        self.doc_tokenizer = document_tokenizer
        self.sum_tokenizer = summary_tokenizer
        self._fill_token_id = document_tokenizer.token_to_id('[FILL]')
        self.max_input_length = max_input_length
        self.max_output_length = max_output_length
        self.sum_max_num_sent = summary_max_num_sentences
        self.start = summary_tokenizer.token_to_id('[START]')
        self.end = [summary_tokenizer.token_to_id(m) for m in ['[END]', '[FILL]']]
        self.type_changers = [summary_tokenizer.token_to_id(m) for m in '.?!']
        self.pack_a, self.pack_b = self._pack_params(params)
        self._decode = jax.jit(self._build_decode_fn())

    # ----------------------- parameter packing (2 DMAs) ----------------------
    @staticmethod
    def _pack_params(params):
        pack_a = np.zeros((PACK_A_ROWS, HIDDEN), np.float32)
        pack_a[0:HIDDEN, :] = np.asarray(params['w1'], np.float32)
        pack_a[BIAS_ROW, :] = np.asarray(params['b1'], np.float32).reshape(-1)
        pack_a[TYPE_OFF:TYPE_OFF + NUM_TYPES, :] = np.asarray(
            params['type_emb'], np.float32)
        pack_a[TOK_OFF:TOK_OFF + VOCAB, :] = np.asarray(
            params['tok_emb'], np.float32)

        pack_b = np.zeros((PACK_B_ROWS, VOCAB), np.float32)
        pack_b[0:HIDDEN, :] = np.asarray(params['wout'], np.float32)
        pack_b[BIAS_ROW, :] = np.asarray(params['bout'], np.float32).reshape(-1)
        return jnp.asarray(pack_a), jnp.asarray(pack_b)

    # ------------------------- fused decode kernel ---------------------------
    def _build_decode_fn(self):
        start_id = int(self.start)
        changer_ids = tuple(int(c) for c in self.type_changers)
        max_in = int(self.max_input_length)
        max_out = int(self.max_output_length)
        max_sent = int(self.sum_max_num_sent)
        with_types = bool(self.with_token_types)
        int_max = int(np.iinfo(np.int32).max)

        def kernel(toks_ref, types_ref, pack_a_ref, pack_b_ref, logp_ref):
            b = pl.program_id(0)

            # -------- hoisted loop-invariants (built once per document) ------
            lanes_v = lax.broadcasted_iota(jnp.int32, (1, VOCAB), 1)       # (1,128)
            type_rows = lax.broadcasted_iota(jnp.int32, (NUM_TYPES, 1), 0)  # (8,1)

            w1 = pack_a_ref[0:HIDDEN, :]                                   # (32,32)
            b1 = pack_a_ref[BIAS_ROW:BIAS_ROW + 1, :]                      # (1,32)
            type_emb = pack_a_ref[TYPE_OFF:TYPE_OFF + NUM_TYPES, :]        # (8,32)
            tok_emb = pack_a_ref[TOK_OFF:TOK_OFF + VOCAB, :]               # (128,32)
            wout = pack_b_ref[0:HIDDEN, :]                                 # (32,128)
            bout = pack_b_ref[BIAS_ROW:BIAS_ROW + 1, :]                    # (1,128)

            # -------- encoder mean-pool, fused in-kernel ----------------------
            # mean_i(tok_emb[t_i] + type_emb[y_i])
            #   == (sum_i onehot(t_i)) @ tok_emb / L  +  (sum_i onehot(y_i)).type_emb / L
            # Token ids come from SMEM (scalar prefetch); one-hot counts go
            # through the otherwise-idle MXU.  Averages over [FILL] padding rows
            # too, matching the synthetic surrogate model (design choice).
            tok_cnt = jnp.zeros((1, VOCAB), jnp.float32)
            typ_cnt = jnp.zeros((NUM_TYPES, 1), jnp.float32)
            for i in range(max_in):
                tok_cnt = tok_cnt + (lanes_v == toks_ref[b, i]).astype(jnp.float32)
                if with_types:
                    typ_cnt = typ_cnt + (type_rows == types_ref[b, i]).astype(
                        jnp.float32)
            ctx = jnp.dot(tok_cnt, tok_emb, preferred_element_type=jnp.float32)
            if with_types:
                ctx = ctx + jnp.sum(typ_cnt * type_emb, axis=0, keepdims=True)
            ctx = ctx * (1.0 / max_in)                                     # (1,32)

            # -------- greedy decode loop (static unroll, vreg-resident state) --
            last_oh = (lanes_v == start_id).astype(jnp.float32)            # (1,128)
            cur_type = jnp.zeros((1, 1), jnp.int32)

            for s in range(max_out):
                # Decoder token embedding via one-hot MXU matmul (no VPU/XLU
                # masked-sum gather on the 128-row table).
                dec = jnp.dot(last_oh, tok_emb,
                              preferred_element_type=jnp.float32)          # (1,32)
                if with_types:
                    ty_eff = jnp.minimum(cur_type, NUM_TYPES - 1)
                    ty_mask = (type_rows == ty_eff).astype(jnp.float32)    # (8,1)
                    dec = dec + jnp.sum(ty_mask * type_emb, axis=0, keepdims=True)

                h = jnp.tanh(jnp.dot(dec + ctx, w1,
                                     preferred_element_type=jnp.float32) + b1)
                logits = jnp.dot(h, wout,
                                 preferred_element_type=jnp.float32) + bout

                # log_softmax (== prediction[0, -1, :].log_softmax(dim=-1)).
                m = jnp.max(logits, axis=-1, keepdims=True)
                lse = jnp.log(jnp.sum(jnp.exp(logits - m), axis=-1,
                                      keepdims=True)) + m
                logp = logits - lse

                # Direct lane-dense row store (static offset -> static slice).
                logp_ref[pl.ds(s, 1), :] = logp

                if s + 1 < max_out:
                    # First-occurrence argmax over logp.  max(logp) == m - lse
                    # bitwise, so the softmax max is reused (one XLU min only).
                    picked = jnp.where(logp == (m - lse), lanes_v, int_max)
                    idx = jnp.min(picked, axis=-1, keepdims=True)          # (1,1)
                    last_oh = (lanes_v == idx).astype(jnp.float32)
                    if with_types:
                        is_ch = (idx == changer_ids[0])
                        for c in changer_ids[1:]:
                            is_ch = is_ch | (idx == c)
                        cur_type = jnp.where(is_ch & (cur_type < max_sent),
                                             cur_type + 1, cur_type)

        pack_a_shape = (PACK_A_ROWS, HIDDEN)
        pack_b_shape = (PACK_B_ROWS, VOCAB)

        def decode_fn(pack_a, pack_b, toks, types):
            batch = toks.shape[0]
            grid_spec = pltpu.PrefetchScalarGridSpec(
                num_scalar_prefetch=2,            # toks, types -> SMEM
                grid=(batch,),
                in_specs=[
                    # Constant index maps: weights DMA'd once, VMEM-resident
                    # across every document in the grid.
                    pl.BlockSpec(pack_a_shape, lambda d, t, y: (0, 0)),
                    pl.BlockSpec(pack_b_shape, lambda d, t, y: (0, 0)),
                ],
                out_specs=pl.BlockSpec((max_out, VOCAB), lambda d, t, y: (d, 0)),
            )
            logp = pl.pallas_call(
                kernel,
                out_shape=jax.ShapeDtypeStruct((batch * max_out, VOCAB),
                                               jnp.float32),
                grid_spec=grid_spec,
                compiler_params=pltpu.CompilerParams(
                    dimension_semantics=("parallel",)),   # shard docs over TCs
            )(toks, types, pack_a, pack_b)
            return logp.reshape(batch, max_out, VOCAB)

        return decode_fn

    # ------------------------------ host glue --------------------------------
    def _encode_pad(self, document):
        enc = np.array(self.doc_tokenizer.encode(document))
        shape = enc.shape
        if shape[-1] < self.max_input_length:
            arr = np.ones((2, self.max_input_length)) * self._fill_token_id
            arr[:, :shape[-1]] = enc[:, :shape[-1]]
            enc = arr
        elif shape[-1] > self.max_input_length:
            enc = enc[:, :self.max_input_length]
        return enc.astype(np.int64)

    def forward_batch(self, documents):
        assert all(isinstance(d, str) for d in documents), 'documents must be str.'
        encs = [self._encode_pad(d) for d in documents]
        toks = np.stack([e[0] for e in encs]).astype(np.int32)
        types = np.clip(np.stack([e[1] for e in encs]).astype(np.int32),
                        0, NUM_TYPES - 1)

        # One kernel launch, one host sync for the whole batch of generations.
        logp = self._decode(self.pack_a, self.pack_b,
                            jnp.asarray(toks), jnp.asarray(types))
        logp_host = np.asarray(jax.device_get(logp))

        summaries = []
        for d in range(len(documents)):
            output_tokens_list = [self.start]
            current_type = 0
            for s in range(self.max_output_length):
                pred = int(np.argmax(logp_host[d, s]))
                output_tokens_list.append(pred)
                if self.with_token_types:
                    if pred in self.type_changers and current_type < self.sum_max_num_sent:
                        current_type += 1
                if pred in self.end:
                    break
            summaries.append(self.sum_tokenizer.decode(output_tokens_list))
        return summaries, logp

    def forward(self, document):
        assert isinstance(document, str), 'input document must be str.'
        summaries, _ = self.forward_batch([document])
        return summaries[0]

    __call__ = forward


# --------------------------------- params ------------------------------------
def init_params(key):
    k1, k2, k3, k4 = jax.random.split(key, 4)
    scale = 0.1
    return {
        'tok_emb':  scale * jax.random.normal(k1, (VOCAB, HIDDEN), jnp.float32),
        'type_emb': scale * jax.random.normal(k2, (NUM_TYPES, HIDDEN), jnp.float32),
        'w1':       scale * jax.random.normal(k3, (HIDDEN, HIDDEN), jnp.float32),
        'b1':       jnp.zeros((1, HIDDEN), jnp.float32),
        'wout':     scale * jax.random.normal(k4, (HIDDEN, VOCAB), jnp.float32),
        'bout':     jnp.zeros((1, VOCAB), jnp.float32),
    }


# ----------------------------- pure-numpy reference ---------------------------
def reference_greedy(params, document, doc_tok, sum_tok,
                     max_in, max_out, max_sent, with_types=True):
    p = {k: np.asarray(v) for k, v in params.items()}
    fill = doc_tok.token_to_id('[FILL]')
    enc = np.array(doc_tok.encode(document))
    L = enc.shape[-1]
    if L < max_in:
        arr = np.ones((2, max_in)) * fill
        arr[:, :L] = enc[:, :L]
        enc = arr
    elif L > max_in:
        enc = enc[:, :max_in]
    enc = enc.astype(np.int64)
    toks = enc[0].astype(np.int32)
    types = np.clip(enc[1].astype(np.int32), 0, NUM_TYPES - 1)
    enc_emb = p['tok_emb'][toks] + p['type_emb'][types]
    ctx = enc_emb.mean(axis=0, keepdims=True)

    start = sum_tok.token_to_id('[START]')
    ends = [sum_tok.token_to_id(m) for m in ['[END]', '[FILL]']]
    changers = [sum_tok.token_to_id(m) for m in '.?!']

    out, cur, logps = [start], 0, []
    for _ in range(max_out):
        dec = p['tok_emb'][out[-1]] + p['type_emb'][min(cur, NUM_TYPES - 1)]
        h = np.tanh((dec[None, :] + ctx) @ p['w1'] + p['b1'])
        logits = h @ p['wout'] + p['bout']
        m = logits.max(axis=-1, keepdims=True)
        lse = np.log(np.exp(logits - m).sum(axis=-1, keepdims=True)) + m
        logp = logits - lse
        pred = int(np.argmax(logp[0]))
        logps.append(logp[0])
        out.append(pred)
        if with_types and pred in changers and cur < max_sent:
            cur += 1
        if pred in ends:
            break
    return out, np.stack(logps)


# ----------------------------------- main -------------------------------------
if __name__ == "__main__":
    key = jax.random.PRNGKey(0)
    params = init_params(key)

    doc_tok = CustomTokenizer(VOCAB)
    sum_tok = CustomTokenizer(VOCAB)

    summarizer = GreedySummarizerPallas(
        params, doc_tok, sum_tok,
        max_input_length=MAX_INPUT_LEN,
        max_output_length=MAX_OUTPUT_LEN,
        summary_max_num_sentences=SUM_MAX_NUM_SENT,
        with_token_types=True,
    )

    documents = [
        "jax pallas tpu. fast kernels!",
        "greedy decoding on tpu? yes.",
        "tiny surrogate seq2seq model.",
        "hello world! summarize me. now?",
    ]

    # One batched kernel launch for all documents.
    summaries, logp = summarizer.forward_batch(documents)
    jax.block_until_ready(logp)
    logp_host = np.asarray(jax.device_get(logp))

    # Verify every document against the pure-numpy greedy reference.
    for d, doc in enumerate(documents):
        ref_tokens, ref_logp = reference_greedy(
            params, doc, doc_tok, sum_tok,
            MAX_INPUT_LEN, MAX_OUTPUT_LEN, SUM_MAX_NUM_SENT, with_types=True)
        assert summaries[d] == sum_tok.decode(ref_tokens), (d, summaries[d], ref_tokens)
        n_gen = ref_logp.shape[0]
        assert np.isfinite(logp_host[d, :n_gen]).all(), d
        assert np.allclose(logp_host[d, :n_gen], ref_logp, atol=1e-4, rtol=1e-4), d
        assert np.array_equal(np.argmax(logp_host[d, :n_gen], axis=-1),
                              np.asarray(ref_tokens[1:], dtype=np.int64)), d

    print("KERNEL_OK")
</pallas_src>

<mosaic_0001>
module attributes {stable_mosaic.version = 11 : i64} {
  func.func @kernel(%arg0: i32, %arg1: memref<4x16xi32, #tpu.memory_space<smem>>, %arg2: memref<4x16xi32, #tpu.memory_space<smem>>, %arg3: memref<176x32xf32, #tpu.memory_space<vmem>>, %arg4: memref<40x128xf32, #tpu.memory_space<vmem>>, %arg5: memref<8x128xf32, #tpu.memory_space<vmem>>) attributes {dimension_semantics = [#tpu.dimension_semantics<parallel>], iteration_bounds = array<i64: 4>, scalar_prefetch = 2 : i64, scratch_operands = 0 : i64, tpu.core_type = #tpu.core_type<tc>, window_params = [{pipeline_mode = #tpu.pipeline_mode<synchronous>, transform_indices = @transform_0, window_bounds = array<i64: 176, 32>}, {pipeline_mode = #tpu.pipeline_mode<synchronous>, transform_indices = @transform_1, window_bounds = array<i64: 40, 128>}, {transform_indices = @transform_2, window_bounds = array<i64: 8, 128>}]} {
    %0 = tpu.iota {dimensions = array<i32: 1>} : vector<1x128xi32>
    %1 = tpu.iota {dimensions = array<i32: 0>} : vector<8x1xi32>
    %c0 = arith.constant 0 : index
    %c0_0 = arith.constant 0 : index
    %2 = vector.load %arg3[%c0, %c0_0] : memref<176x32xf32, #tpu.memory_space<vmem>>, vector<32x32xf32>
    %c32 = arith.constant 32 : index
    %c0_1 = arith.constant 0 : index
    %3 = vector.load %arg3[%c32, %c0_1] : memref<176x32xf32, #tpu.memory_space<vmem>>, vector<1x32xf32>
    %c40 = arith.constant 40 : index
    %c0_2 = arith.constant 0 : index
    %4 = vector.load %arg3[%c40, %c0_2] : memref<176x32xf32, #tpu.memory_space<vmem>>, vector<8x32xf32>
    %c48 = arith.constant 48 : index
    %c0_3 = arith.constant 0 : index
    %5 = vector.load %arg3[%c48, %c0_3] : memref<176x32xf32, #tpu.memory_space<vmem>>, vector<128x32xf32>
    %c0_4 = arith.constant 0 : index
    %c0_5 = arith.constant 0 : index
    %6 = vector.load %arg4[%c0_4, %c0_5] : memref<40x128xf32, #tpu.memory_space<vmem>>, vector<32x128xf32>
    %c32_6 = arith.constant 32 : index
    %c0_7 = arith.constant 0 : index
    %7 = vector.load %arg4[%c32_6, %c0_7] : memref<40x128xf32, #tpu.memory_space<vmem>>, vector<1x128xf32>
    %cst = arith.constant 0.000000e+00 : f32
    %8 = vector.broadcast %cst : f32 to vector<1x128xf32>
    %cst_8 = arith.constant 0.000000e+00 : f32
    %9 = vector.broadcast %cst_8 : f32 to vector<8x1xf32>
    %10 = arith.index_cast %arg0 : i32 to index
    %c0_9 = arith.constant 0 : index
    %11 = memref.load %arg1[%10, %c0_9] : memref<4x16xi32, #tpu.memory_space<smem>>
    %12 = vector.broadcast %11 : i32 to vector<1x128xi32>
    %13 = arith.cmpi eq, %0, %12 : vector<1x128xi32>
    %14 = arith.extui %13 : vector<1x128xi1> to vector<1x128xi32>
    %15 = arith.sitofp %14 : vector<1x128xi32> to vector<1x128xf32>
    %16 = arith.addf %8, %15 : vector<1x128xf32>
    %17 = arith.index_cast %arg0 : i32 to index
    %c0_10 = arith.constant 0 : index
    %18 = memref.load %arg2[%17, %c0_10] : memref<4x16xi32, #tpu.memory_space<smem>>
    %19 = vector.broadcast %18 : i32 to vector<8x1xi32>
    %20 = arith.cmpi eq, %1, %19 : vector<8x1xi32>
    %21 = arith.extui %20 : vector<8x1xi1> to vector<8x1xi32>
    %22 = arith.sitofp %21 : vector<8x1xi32> to vector<8x1xf32>
    %23 = arith.addf %9, %22 : vector<8x1xf32>
    %24 = arith.index_cast %arg0 : i32 to index
    %c1 = arith.constant 1 : index
    %25 = memref.load %arg1[%24, %c1] : memref<4x16xi32, #tpu.memory_space<smem>>
    %26 = vector.broadcast %25 : i32 to vector<1x128xi32>
    %27 = arith.cmpi eq, %0, %26 : vector<1x128xi32>
    %28 = arith.extui %27 : vector<1x128xi1> to vector<1x128xi32>
    %29 = arith.sitofp %28 : vector<1x128xi32> to vector<1x128xf32>
    %30 = arith.addf %16, %29 : vector<1x128xf32>
    %31 = arith.index_cast %arg0 : i32 to index
    %c1_11 = arith.constant 1 : index
    %32 = memref.load %arg2[%31, %c1_11] : memref<4x16xi32, #tpu.memory_space<smem>>
    %33 = vector.broadcast %32 : i32 to vector<8x1xi32>
    %34 = arith.cmpi eq, %1, %33 : vector<8x1xi32>
    %35 = arith.extui %34 : vector<8x1xi1> to vector<8x1xi32>
    %36 = arith.sitofp %35 : vector<8x1xi32> to vector<8x1xf32>
    %37 = arith.addf %23, %36 : vector<8x1xf32>
    %38 = arith.index_cast %arg0 : i32 to index
    %c2 = arith.constant 2 : index
    %39 = memref.load %arg1[%38, %c2] : memref<4x16xi32, #tpu.memory_space<smem>>
    %40 = vector.broadcast %39 : i32 to vector<1x128xi32>
    %41 = arith.cmpi eq, %0, %40 : vector<1x128xi32>
    %42 = arith.extui %41 : vector<1x128xi1> to vector<1x128xi32>
    %43 = arith.sitofp %42 : vector<1x128xi32> to vector<1x128xf32>
    %44 = arith.addf %30, %43 : vector<1x128xf32>
    %45 = arith.index_cast %arg0 : i32 to index
    %c2_12 = arith.constant 2 : index
    %46 = memref.load %arg2[%45, %c2_12] : memref<4x16xi32, #tpu.memory_space<smem>>
    %47 = vector.broadcast %46 : i32 to vector<8x1xi32>
    %48 = arith.cmpi eq, %1, %47 : vector<8x1xi32>
    %49 = arith.extui %48 : vector<8x1xi1> to vector<8x1xi32>
    %50 = arith.sitofp %49 : vector<8x1xi32> to vector<8x1xf32>
    %51 = arith.addf %37, %50 : vector<8x1xf32>
    %52 = arith.index_cast %arg0 : i32 to index
    %c3 = arith.constant 3 : index
    %53 = memref.load %arg1[%52, %c3] : memref<4x16xi32, #tpu.memory_space<smem>>
    %54 = vector.broadcast %53 : i32 to vector<1x128xi32>
    %55 = arith.cmpi eq, %0, %54 : vector<1x128xi32>
    %56 = arith.extui %55 : vector<1x128xi1> to vector<1x128xi32>
    %57 = arith.sitofp %56 : vector<1x128xi32> to vector<1x128xf32>
    %58 = arith.addf %44, %57 : vector<1x128xf32>
    %59 = arith.index_cast %arg0 : i32 to index
    %c3_13 = arith.constant 3 : index
    %60 = memref.load %arg2[%59, %c3_13] : memref<4x16xi32, #tpu.memory_space<smem>>
    %61 = vector.broadcast %60 : i32 to vector<8x1xi32>
    %62 = arith.cmpi eq, %1, %61 : vector<8x1xi32>
    %63 = arith.extui %62 : vector<8x1xi1> to vector<8x1xi32>
    %64 = arith.sitofp %63 : vector<8x1xi32> to vector<8x1xf32>
    %65 = arith.addf %51, %64 : vector<8x1xf32>
    %66 = arith.index_cast %arg0 : i32 to index
    %c4 = arith.constant 4 : index
    %67 = memref.load %arg1[%66, %c4] : memref<4x16xi32, #tpu.memory_space<smem>>
    %68 = vector.broadcast %67 : i32 to vector<1x128xi32>
    %69 = arith.cmpi eq, %0, %68 : vector<1x128xi32>
    %70 = arith.extui %69 : vector<1x128xi1> to vector<1x128xi32>
    %71 = arith.sitofp %70 : vector<1x128xi32> to vector<1x128xf32>
    %72 = arith.addf %58, %71 : vector<1x128xf32>
    %73 = arith.index_cast %arg0 : i32 to index
    %c4_14 = arith.constant 4 : index
    %74 = memref.load %arg2[%73, %c4_14] : memref<4x16xi32, #tpu.memory_space<smem>>
    %75 = vector.broadcast %74 : i32 to vector<8x1xi32>
    %76 = arith.cmpi eq, %1, %75 : vector<8x1xi32>
    %77 = arith.extui %76 : vector<8x1xi1> to vector<8x1xi32>
    %78 = arith.sitofp %77 : vector<8x1xi32> to vector<8x1xf32>
    %79 = arith.addf %65, %78 : vector<8x1xf32>
    %80 = arith.index_cast %arg0 : i32 to index
    %c5 = arith.constant 5 : index
    %81 = memref.load %arg1[%80, %c5] : memref<4x16xi32, #tpu.memory_space<smem>>
    %82 = vector.broadcast %81 : i32 to vector<1x128xi32>
    %83 = arith.cmpi eq, %0, %82 : vector<1x128xi32>
    %84 = arith.extui %83 : vector<1x128xi1> to vector<1x128xi32>
    %85 = arith.sitofp %84 : vector<1x128xi32> to vector<1x128xf32>
    %86 = arith.addf %72, %85 : vector<1x128xf32>
    %87 = arith.index_cast %arg0 : i32 to index
    %c5_15 = arith.constant 5 : index
    %88 = memref.load %arg2[%87, %c5_15] : memref<4x16xi32, #tpu.memory_space<smem>>
    %89 = vector.broadcast %88 : i32 to vector<8x1xi32>
    %90 = arith.cmpi eq, %1, %89 : vector<8x1xi32>
    %91 = arith.extui %90 : vector<8x1xi1> to vector<8x1xi32>
    %92 = arith.sitofp %91 : vector<8x1xi32> to vector<8x1xf32>
    %93 = arith.addf %79, %92 : vector<8x1xf32>
    %94 = arith.index_cast %arg0 : i32 to index
    %c6 = arith.constant 6 : index
    %95 = memref.load %arg1[%94, %c6] : memref<4x16xi32, #tpu.memory_space<smem>>
    %96 = vector.broadcast %95 : i32 to vector<1x128xi32>
    %97 = arith.cmpi eq, %0, %96 : vector<1x128xi32>
    %98 = arith.extui %97 : vector<1x128xi1> to vector<1x128xi32>
    %99 = arith.sitofp %98 : vector<1x128xi32> to vector<1x128xf32>
    %100 = arith.addf %86, %99 : vector<1x128xf32>
    %101 = arith.index_cast %arg0 : i32 to index
    %c6_16 = arith.constant 6 : index
    %102 = memref.load %arg2[%101, %c6_16] : memref<4x16xi32, #tpu.memory_space<smem>>
    %103 = vector.broadcast %102 : i32 to vector<8x1xi32>
    %104 = arith.cmpi eq, %1, %103 : vector<8x1xi32>
    %105 = arith.extui %104 : vector<8x1xi1> to vector<8x1xi32>
    %106 = arith.sitofp %105 : vector<8x1xi32> to vector<8x1xf32>
    %107 = arith.addf %93, %106 : vector<8x1xf32>
    %108 = arith.index_cast %arg0 : i32 to index
    %c7 = arith.constant 7 : index
    %109 = memref.load %arg1[%108, %c7] : memref<4x16xi32, #tpu.memory_space<smem>>
    %110 = vector.broadcast %109 : i32 to vector<1x128xi32>
    %111 = arith.cmpi eq, %0, %110 : vector<1x128xi32>
    %112 = arith.extui %111 : vector<1x128xi1> to vector<1x128xi32>
    %113 = arith.sitofp %112 : vector<1x128xi32> to vector<1x128xf32>
    %114 = arith.addf %100, %113 : vector<1x128xf32>
    %115 = arith.index_cast %arg0 : i32 to index
    %c7_17 = arith.constant 7 : index
    %116 = memref.load %arg2[%115, %c7_17] : memref<4x16xi32, #tpu.memory_space<smem>>
    %117 = vector.broadcast %116 : i32 to vector<8x1xi32>
    %118 = arith.cmpi eq, %1, %117 : vector<8x1xi32>
    %119 = arith.extui %118 : vector<8x1xi1> to vector<8x1xi32>
    %120 = arith.sitofp %119 : vector<8x1xi32> to vector<8x1xf32>
    %121 = arith.addf %107, %120 : vector<8x1xf32>
    %122 = arith.index_cast %arg0 : i32 to index
    %c8 = arith.constant 8 : index
    %123 = memref.load %arg1[%122, %c8] : memref<4x16xi32, #tpu.memory_space<smem>>
    %124 = vector.broadcast %123 : i32 to vector<1x128xi32>
    %125 = arith.cmpi eq, %0, %124 : vector<1x128xi32>
    %126 = arith.extui %125 : vector<1x128xi1> to vector<1x128xi32>
    %127 = arith.sitofp %126 : vector<1x128xi32> to vector<1x128xf32>
    %128 = arith.addf %114, %127 : vector<1x128xf32>
    %129 = arith.index_cast %arg0 : i32 to index
    %c8_18 = arith.constant 8 : index
    %130 = memref.load %arg2[%129, %c8_18] : memref<4x16xi32, #tpu.memory_space<smem>>
    %131 = vector.broadcast %130 : i32 to vector<8x1xi32>
    %132 = arith.cmpi eq, %1, %131 : vector<8x1xi32>
    %133 = arith.extui %132 : vector<8x1xi1> to vector<8x1xi32>
    %134 = arith.sitofp %133 : vector<8x1xi32> to vector<8x1xf32>
    %135 = arith.addf %121, %134 : vector<8x1xf32>
    %136 = arith.index_cast %arg0 : i32 to index
    %c9 = arith.constant 9 : index
    %137 = memref.load %arg1[%136, %c9] : memref<4x16xi32, #tpu.memory_space<smem>>
    %138 = vector.broadcast %137 : i32 to vector<1x128xi32>
    %139 = arith.cmpi eq, %0, %138 : vector<1x128xi32>
    %140 = arith.extui %139 : vector<1x128xi1> to vector<1x128xi32>
    %141 = arith.sitofp %140 : vector<1x128xi32> to vector<1x128xf32>
    %142 = arith.addf %128, %141 : vector<1x128xf32>
    %143 = arith.index_cast %arg0 : i32 to index
    %c9_19 = arith.constant 9 : index
    %144 = memref.load %arg2[%143, %c9_19] : memref<4x16xi32, #tpu.memory_space<smem>>
    %145 = vector.broadcast %144 : i32 to vector<8x1xi32>
    %146 = arith.cmpi eq, %1, %145 : vector<8x1xi32>
    %147 = arith.extui %146 : vector<8x1xi1> to vector<8x1xi32>
    %148 = arith.sitofp %147 : vector<8x1xi32> to vector<8x1xf32>
    %149 = arith.addf %135, %148 : vector<8x1xf32>
    %150 = arith.index_cast %arg0 : i32 to index
    %c10 = arith.constant 10 : index
    %151 = memref.load %arg1[%150, %c10] : memref<4x16xi32, #tpu.memory_space<smem>>
    %152 = vector.broadcast %151 : i32 to vector<1x128xi32>
    %153 = arith.cmpi eq, %0, %152 : vector<1x128xi32>
    %154 = arith.extui %153 : vector<1x128xi1> to vector<1x128xi32>
    %155 = arith.sitofp %154 : vector<1x128xi32> to vector<1x128xf32>
    %156 = arith.addf %142, %155 : vector<1x128xf32>
    %157 = arith.index_cast %arg0 : i32 to index
    %c10_20 = arith.constant 10 : index
    %158 = memref.load %arg2[%157, %c10_20] : memref<4x16xi32, #tpu.memory_space<smem>>
    %159 = vector.broadcast %158 : i32 to vector<8x1xi32>
    %160 = arith.cmpi eq, %1, %159 : vector<8x1xi32>
    %161 = arith.extui %160 : vector<8x1xi1> to vector<8x1xi32>
    %162 = arith.sitofp %161 : vector<8x1xi32> to vector<8x1xf32>
    %163 = arith.addf %149, %162 : vector<8x1xf32>
    %164 = arith.index_cast %arg0 : i32 to index
    %c11 = arith.constant 11 : index
    %165 = memref.load %arg1[%164, %c11] : memref<4x16xi32, #tpu.memory_space<smem>>
    %166 = vector.broadcast %165 : i32 to vector<1x128xi32>
    %167 = arith.cmpi eq, %0, %166 : vector<1x128xi32>
    %168 = arith.extui %167 : vector<1x128xi1> to vector<1x128xi32>
    %169 = arith.sitofp %168 : vector<1x128xi32> to vector<1x128xf32>
    %170 = arith.addf %156, %169 : vector<1x128xf32>
    %171 = arith.index_cast %arg0 : i32 to index
    %c11_21 = arith.constant 11 : index
    %172 = memref.load %arg2[%171, %c11_21] : memref<4x16xi32, #tpu.memory_space<smem>>
    %173 = vector.broadcast %172 : i32 to vector<8x1xi32>
    %174 = arith.cmpi eq, %1, %173 : vector<8x1xi32>
    %175 = arith.extui %174 : vector<8x1xi1> to vector<8x1xi32>
    %176 = arith.sitofp %175 : vector<8x1xi32> to vector<8x1xf32>
    %177 = arith.addf %163, %176 : vector<8x1xf32>
    %178 = arith.index_cast %arg0 : i32 to index
    %c12 = arith.constant 12 : index
    %179 = memref.load %arg1[%178, %c12] : memref<4x16xi32, #tpu.memory_space<smem>>
    %180 = vector.broadcast %179 : i32 to vector<1x128xi32>
    %181 = arith.cmpi eq, %0, %180 : vector<1x128xi32>
    %182 = arith.extui %181 : vector<1x128xi1> to vector<1x128xi32>
    %183 = arith.sitofp %182 : vector<1x128xi32> to vector<1x128xf32>
    %184 = arith.addf %170, %183 : vector<1x128xf32>
    %185 = arith.index_cast %arg0 : i32 to index
    %c12_22 = arith.constant 12 : index
    %186 = memref.load %arg2[%185, %c12_22] : memref<4x16xi32, #tpu.memory_space<smem>>
    %187 = vector.broadcast %186 : i32 to vector<8x1xi32>
    %188 = arith.cmpi eq, %1, %187 : vector<8x1xi32>
    %189 = arith.extui %188 : vector<8x1xi1> to vector<8x1xi32>
    %190 = arith.sitofp %189 : vector<8x1xi32> to vector<8x1xf32>
    %191 = arith.addf %177, %190 : vector<8x1xf32>
    %192 = arith.index_cast %arg0 : i32 to index
    %c13 = arith.constant 13 : index
    %193 = memref.load %arg1[%192, %c13] : memref<4x16xi32, #tpu.memory_space<smem>>
    %194 = vector.broadcast %193 : i32 to vector<1x128xi32>
    %195 = arith.cmpi eq, %0, %194 : vector<1x128xi32>
    %196 = arith.extui %195 : vector<1x128xi1> to vector<1x128xi32>
    %197 = arith.sitofp %196 : vector<1x128xi32> to vector<1x128xf32>
    %198 = arith.addf %184, %197 : vector<1x128xf32>
    %199 = arith.index_cast %arg0 : i32 to index
    %c13_23 = arith.constant 13 : index
    %200 = memref.load %arg2[%199, %c13_23] : memref<4x16xi32, #tpu.memory_space<smem>>
    %201 = vector.broadcast %200 : i32 to vector<8x1xi32>
    %202 = arith.cmpi eq, %1, %201 : vector<8x1xi32>
    %203 = arith.extui %202 : vector<8x1xi1> to vector<8x1xi32>
    %204 = arith.sitofp %203 : vector<8x1xi32> to vector<8x1xf32>
    %205 = arith.addf %191, %204 : vector<8x1xf32>
    %206 = arith.index_cast %arg0 : i32 to index
    %c14 = arith.constant 14 : index
    %207 = memref.load %arg1[%206, %c14] : memref<4x16xi32, #tpu.memory_space<smem>>
    %208 = vector.broadcast %207 : i32 to vector<1x128xi32>
    %209 = arith.cmpi eq, %0, %208 : vector<1x128xi32>
    %210 = arith.extui %209 : vector<1x128xi1> to vector<1x128xi32>
    %211 = arith.sitofp %210 : vector<1x128xi32> to vector<1x128xf32>
    %212 = arith.addf %198, %211 : vector<1x128xf32>
    %213 = arith.index_cast %arg0 : i32 to index
    %c14_24 = arith.constant 14 : index
    %214 = memref.load %arg2[%213, %c14_24] : memref<4x16xi32, #tpu.memory_space<smem>>
    %215 = vector.broadcast %214 : i32 to vector<8x1xi32>
    %216 = arith.cmpi eq, %1, %215 : vector<8x1xi32>
    %217 = arith.extui %216 : vector<8x1xi1> to vector<8x1xi32>
    %218 = arith.sitofp %217 : vector<8x1xi32> to vector<8x1xf32>
    %219 = arith.addf %205, %218 : vector<8x1xf32>
    %220 = arith.index_cast %arg0 : i32 to index
    %c15 = arith.constant 15 : index
    %221 = memref.load %arg1[%220, %c15] : memref<4x16xi32, #tpu.memory_space<smem>>
    %222 = vector.broadcast %221 : i32 to vector<1x128xi32>
    %223 = arith.cmpi eq, %0, %222 : vector<1x128xi32>
    %224 = arith.extui %223 : vector<1x128xi1> to vector<1x128xi32>
    %225 = arith.sitofp %224 : vector<1x128xi32> to vector<1x128xf32>
    %226 = arith.addf %212, %225 : vector<1x128xf32>
    %227 = arith.index_cast %arg0 : i32 to index
    %c15_25 = arith.constant 15 : index
    %228 = memref.load %arg2[%227, %c15_25] : memref<4x16xi32, #tpu.memory_space<smem>>
    %229 = vector.broadcast %228 : i32 to vector<8x1xi32>
    %230 = arith.cmpi eq, %1, %229 : vector<8x1xi32>
    %231 = arith.extui %230 : vector<8x1xi1> to vector<8x1xi32>
    %232 = arith.sitofp %231 : vector<8x1xi32> to vector<8x1xf32>
    %233 = arith.addf %219, %232 : vector<8x1xf32>
    %cst_26 = arith.constant dense<0.000000e+00> : vector<1x32xf32>
    %234 = tpu.matmul %226, %5, %cst_26 {dimension_numbers = #tpu.dot_dimension_numbers<[1], [0], [0], [1], [0, 0, 1, 1], [], []>} : vector<1x128xf32>, vector<128x32xf32>, vector<1x32xf32> -> vector<1x32xf32>
    %235 = vector.broadcast %233 : vector<8x1xf32> to vector<8x32xf32>
    %236 = arith.mulf %235, %4 : vector<8x32xf32>
    %cst_27 = arith.constant dense<0.000000e+00> : vector<32xf32>
    %237 = vector.multi_reduction <add>, %236, %cst_27 [0] : vector<8x32xf32> to vector<32xf32>
    %238 = vector.shape_cast %237 : vector<32xf32> to vector<1x32xf32>
    %239 = arith.addf %234, %238 : vector<1x32xf32>
    %cst_28 = arith.constant 6.250000e-02 : f32
    %240 = vector.broadcast %cst_28 : f32 to vector<1x32xf32>
    %241 = arith.mulf %239, %240 : vector<1x32xf32>
    %c1_i32 = arith.constant 1 : i32
    %242 = vector.broadcast %c1_i32 : i32 to vector<1x128xi32>
    %243 = arith.cmpi eq, %0, %242 : vector<1x128xi32>
    %244 = arith.extui %243 : vector<1x128xi1> to vector<1x128xi32>
    %245 = arith.sitofp %244 : vector<1x128xi32> to vector<1x128xf32>
    %c0_i32 = arith.constant 0 : i32
    %246 = vector.broadcast %c0_i32 : i32 to vector<1x1xi32>
    %cst_29 = arith.constant dense<0.000000e+00> : vector<1x32xf32>
    %247 = tpu.matmul %245, %5, %cst_29 {dimension_numbers = #tpu.dot_dimension_numbers<[1], [0], [0], [1], [0, 0, 1, 1], [], []>} : vector<1x128xf32>, vector<128x32xf32>, vector<1x32xf32> -> vector<1x32xf32>
    %c7_i32 = arith.constant 7 : i32
    %248 = vector.broadcast %c7_i32 : i32 to vector<1x1xi32>
    %249 = arith.minsi %246, %248 : vector<1x1xi32>
    %250 = vector.broadcast %249 : vector<1x1xi32> to vector<8x1xi32>
    %251 = arith.cmpi eq, %1, %250 : vector<8x1xi32>
    %252 = arith.extui %251 : vector<8x1xi1> to vector<8x1xi32>
    %253 = arith.sitofp %252 : vector<8x1xi32> to vector<8x1xf32>
    %254 = vector.broadcast %253 : vector<8x1xf32> to vector<8x32xf32>
    %255 = arith.mulf %254, %4 : vector<8x32xf32>
    %cst_30 = arith.constant dense<0.000000e+00> : vector<32xf32>
    %256 = vector.multi_reduction <add>, %255, %cst_30 [0] : vector<8x32xf32> to vector<32xf32>
    %257 = vector.shape_cast %256 : vector<32xf32> to vector<1x32xf32>
    %258 = arith.addf %247, %257 : vector<1x32xf32>
    %259 = arith.addf %258, %241 : vector<1x32xf32>
    %cst_31 = arith.constant dense<0.000000e+00> : vector<1x32xf32>
    %260 = tpu.matmul %259, %2, %cst_31 {dimension_numbers = #tpu.dot_dimension_numbers<[1], [0], [0], [1], [0, 0, 1, 1], [], []>} : vector<1x32xf32>, vector<32x32xf32>, vector<1x32xf32> -> vector<1x32xf32>
    %261 = arith.addf %260, %3 : vector<1x32xf32>
    %262 = math.tanh %261 : vector<1x32xf32>
    %cst_32 = arith.constant dense<0.000000e+00> : vector<1x128xf32>
    %263 = tpu.matmul %262, %6, %cst_32 {dimension_numbers = #tpu.dot_dimension_numbers<[1], [0], [0], [1], [0, 0, 1, 1], [], []>} : vector<1x32xf32>, vector<32x128xf32>, vector<1x128xf32> -> vector<1x128xf32>
    %264 = arith.addf %263, %7 : vector<1x128xf32>
    %cst_33 = arith.constant dense<0xFF800000> : vector<1xf32>
    %265 = vector.multi_reduction <maximumf>, %264, %cst_33 [1] : vector<1x128xf32> to vector<1xf32>
    %266 = vector.shape_cast %265 : vector<1xf32> to vector<1x1xf32>
    %267 = vector.broadcast %266 : vector<1x1xf32> to vector<1x128xf32>
    %268 = arith.subf %264, %267 : vector<1x128xf32>
    %269 = math.exp %268 : vector<1x128xf32>
    %cst_34 = arith.constant dense<0.000000e+00> : vector<1xf32>
    %270 = vector.multi_reduction <add>, %269, %cst_34 [1] : vector<1x128xf32> to vector<1xf32>
    %271 = vector.shape_cast %270 : vector<1xf32> to vector<1x1xf32>
    %272 = math.log %271 : vector<1x1xf32>
    %273 = arith.addf %272, %266 : vector<1x1xf32>
    %274 = vector.broadcast %273 : vector<1x1xf32> to vector<1x128xf32>
    %275 = arith.subf %264, %274 : vector<1x128xf32>
    %c0_35 = arith.constant 0 : index
    %c0_36 = arith.constant 0 : index
    %276 = vector.load %arg5[%c0_35, %c0_36] : memref<8x128xf32, #tpu.memory_space<vmem>>, vector<1x128xf32>
    tpu.vector_store %arg5[%c0_35, %c0_36], %275 {strides = array<i32>} : memref<8x128xf32, #tpu.memory_space<vmem>>, vector<1x128xf32>,
    %277 = arith.subf %266, %273 : vector<1x1xf32>
    %278 = vector.broadcast %277 : vector<1x1xf32> to vector<1x128xf32>
    %279 = arith.cmpf oeq, %275, %278 : vector<1x128xf32>
    %c2147483647_i32 = arith.constant 2147483647 : i32
    %280 = vector.broadcast %c2147483647_i32 : i32 to vector<1x128xi32>
    %281 = arith.select %279, %0, %280 : vector<1x128xi1>, vector<1x128xi32>
    %cst_37 = arith.constant dense<2147483647> : vector<1xi32>
    %282 = vector.multi_reduction <minsi>, %281, %cst_37 [1] : vector<1x128xi32> to vector<1xi32>
    %283 = vector.shape_cast %282 : vector<1xi32> to vector<1x1xi32>
    %284 = vector.broadcast %283 : vector<1x1xi32> to vector<1x128xi32>
    %285 = arith.cmpi eq, %0, %284 : vector<1x128xi32>
    %286 = arith.extui %285 : vector<1x128xi1> to vector<1x128xi32>
    %287 = arith.sitofp %286 : vector<1x128xi32> to vector<1x128xf32>
    %c4_i32 = arith.constant 4 : i32
    %288 = vector.broadcast %c4_i32 : i32 to vector<1x1xi32>
    %289 = arith.cmpi eq, %283, %288 : vector<1x1xi32>
    %c5_i32 = arith.constant 5 : i32
    %290 = vector.broadcast %c5_i32 : i32 to vector<1x1xi32>
    %291 = arith.cmpi eq, %283, %290 : vector<1x1xi32>
    %292 = arith.ori %289, %291 : vector<1x1xi1>
    %c6_i32 = arith.constant 6 : i32
    %293 = vector.broadcast %c6_i32 : i32 to vector<1x1xi32>
    %294 = arith.cmpi eq, %283, %293 : vector<1x1xi32>
    %295 = arith.ori %292, %294 : vector<1x1xi1>
    %c3_i32 = arith.constant 3 : i32
    %296 = vector.broadcast %c3_i32 : i32 to vector<1x1xi32>
    %297 = arith.cmpi slt, %246, %296 : vector<1x1xi32>
    %298 = arith.andi %295, %297 : vector<1x1xi1>
    %c1_i32_38 = arith.constant 1 : i32
    %299 = vector.broadcast %c1_i32_38 : i32 to vector<1x1xi32>
    %300 = arith.addi %246, %299 : vector<1x1xi32>
    %301 = arith.select %298, %300, %246 : vector<1x1xi1>, vector<1x1xi32>
    %cst_39 = arith.constant dense<0.000000e+00> : vector<1x32xf32>
    %302 = tpu.matmul %287, %5, %cst_39 {dimension_numbers = #tpu.dot_dimension_numbers<[1], [0], [0], [1], [0, 0, 1, 1], [], []>} : vector<1x128xf32>, vector<128x32xf32>, vector<1x32xf32> -> vector<1x32xf32>
    %c7_i32_40 = arith.constant 7 : i32
    %303 = vector.broadcast %c7_i32_40 : i32 to vector<1x1xi32>
    %304 = arith.minsi %301, %303 : vector<1x1xi32>
    %305 = vector.broadcast %304 : vector<1x1xi32> to vector<8x1xi32>
    %306 = arith.cmpi eq, %1, %305 : vector<8x1xi32>
    %307 = arith.extui %306 : vector<8x1xi1> to vector<8x1xi32>
    %308 = arith.sitofp %307 : vector<8x1xi32> to vector<8x1xf32>
    %309 = vector.broadcast %308 : vector<8x1xf32> to vector<8x32xf32>
    %310 = arith.mulf %309, %4 : vector<8x32xf32>
    %cst_41 = arith.constant dense<0.000000e+00> : vector<32xf32>
    %311 = vector.multi_reduction <add>, %310, %cst_41 [0] : vector<8x32xf32> to vector<32xf32>
    %312 = vector.shape_cast %311 : vector<32xf32> to vector<1x32xf32>
    %313 = arith.addf %302, %312 : vector<1x32xf32>
    %314 = arith.addf %313, %241 : vector<1x32xf32>
    %cst_42 = arith.constant dense<0.000000e+00> : vector<1x32xf32>
    %315 = tpu.matmul %314, %2, %cst_42 {dimension_numbers = #tpu.dot_dimension_numbers<[1], [0], [0], [1], [0, 0, 1, 1], [], []>} : vector<1x32xf32>, vector<32x32xf32>, vector<1x32xf32> -> vector<1x32xf32>
    %316 = arith.addf %315, %3 : vector<1x32xf32>
    %317 = math.tanh %316 : vector<1x32xf32>
    %cst_43 = arith.constant dense<0.000000e+00> : vector<1x128xf32>
    %318 = tpu.matmul %317, %6, %cst_43 {dimension_numbers = #tpu.dot_dimension_numbers<[1], [0], [0], [1], [0, 0, 1, 1], [], []>} : vector<1x32xf32>, vector<32x128xf32>, vector<1x128xf32> -> vector<1x128xf32>
    %319 = arith.addf %318, %7 : vector<1x128xf32>
    %cst_44 = arith.constant dense<0xFF800000> : vector<1xf32>
    %320 = vector.multi_reduction <maximumf>, %319, %cst_44 [1] : vector<1x128xf32> to vector<1xf32>
    %321 = vector.shape_cast %320 : vector<1xf32> to vector<1x1xf32>
    %322 = vector.broadcast %321 : vector<1x1xf32> to vector<1x128xf32>
    %323 = arith.subf %319, %322 : vector<1x128xf32>
    %324 = math.exp %323 : vector<1x128xf32>
    %cst_45 = arith.constant dense<0.000000e+00> : vector<1xf32>
    %325 = vector.multi_reduction <add>, %324, %cst_45 [1] : vector<1x128xf32> to vector<1xf32>
    %326 = vector.shape_cast %325 : vector<1xf32> to vector<1x1xf32>
    %327 = math.log %326 : vector<1x1xf32>
    %328 = arith.addf %327, %321 : vector<1x1xf32>
    %329 = vector.broadcast %328 : vector<1x1xf32> to vector<1x128xf32>
    %330 = arith.subf %319, %329 : vector<1x128xf32>
    %c1_46 = arith.constant 1 : index
    %c0_47 = arith.constant 0 : index
    %331 = vector.load %arg5[%c1_46, %c0_47] : memref<8x128xf32, #tpu.memory_space<vmem>>, vector<1x128xf32>
    tpu.vector_store %arg5[%c1_46, %c0_47], %330 {strides = array<i32>} : memref<8x128xf32, #tpu.memory_space<vmem>>, vector<1x128xf32>,
    %332 = arith.subf %321, %328 : vector<1x1xf32>
    %333 = vector.broadcast %332 : vector<1x1xf32> to vector<1x128xf32>
    %334 = arith.cmpf oeq, %330, %333 : vector<1x128xf32>
    %c2147483647_i32_48 = arith.constant 2147483647 : i32
    %335 = vector.broadcast %c2147483647_i32_48 : i32 to vector<1x128xi32>
    %336 = arith.select %334, %0, %335 : vector<1x128xi1>, vector<1x128xi32>
    %cst_49 = arith.constant dense<2147483647> : vector<1xi32>
    %337 = vector.multi_reduction <minsi>, %336, %cst_49 [1] : vector<1x128xi32> to vector<1xi32>
    %338 = vector.shape_cast %337 : vector<1xi32> to vector<1x1xi32>
    %339 = vector.broadcast %338 : vector<1x1xi32> to vector<1x128xi32>
    %340 = arith.cmpi eq, %0, %339 : vector<1x128xi32>
    %341 = arith.extui %340 : vector<1x128xi1> to vector<1x128xi32>
    %342 = arith.sitofp %341 : vector<1x128xi32> to vector<1x128xf32>
    %c4_i32_50 = arith.constant 4 : i32
    %343 = vector.broadcast %c4_i32_50 : i32 to vector<1x1xi32>
    %344 = arith.cmpi eq, %338, %343 : vector<1x1xi32>
    %c5_i32_51 = arith.constant 5 : i32
    %345 = vector.broadcast %c5_i32_51 : i32 to vector<1x1xi32>
    %346 = arith.cmpi eq, %338, %345 : vector<1x1xi32>
    %347 = arith.ori %344, %346 : vector<1x1xi1>
    %c6_i32_52 = arith.constant 6 : i32
    %348 = vector.broadcast %c6_i32_52 : i32 to vector<1x1xi32>
    %349 = arith.cmpi eq, %338, %348 : vector<1x1xi32>
    %350 = arith.ori %347, %349 : vector<1x1xi1>
    %c3_i32_53 = arith.constant 3 : i32
    %351 = vector.broadcast %c3_i32_53 : i32 to vector<1x1xi32>
    %352 = arith.cmpi slt, %301, %351 : vector<1x1xi32>
    %353 = arith.andi %350, %352 : vector<1x1xi1>
    %c1_i32_54 = arith.constant 1 : i32
    %354 = vector.broadcast %c1_i32_54 : i32 to vector<1x1xi32>
    %355 = arith.addi %301, %354 : vector<1x1xi32>
    %356 = arith.select %353, %355, %301 : vector<1x1xi1>, vector<1x1xi32>
    %cst_55 = arith.constant dense<0.000000e+00> : vector<1x32xf32>
    %357 = tpu.matmul %342, %5, %cst_55 {dimension_numbers = #tpu.dot_dimension_numbers<[1], [0], [0], [1], [0, 0, 1, 1], [], []>} : vector<1x128xf32>, vector<128x32xf32>, vector<1x32xf32> -> vector<1x32xf32>
    %c7_i32_56 = arith.constant 7 : i32
    %358 = vector.broadcast %c7_i32_56 : i32 to vector<1x1xi32>
    %359 = arith.minsi %356, %358 : vector<1x1xi32>
    %360 = vector.broadcast %359 : vector<1x1xi32> to vector<8x1xi32>
    %361 = arith.cmpi eq, %1, %360 : vector<8x1xi32>
    %362 = arith.extui %361 : vector<8x1xi1> to vector<8x1xi32>
    %363 = arith.sitofp %362 : vector<8x1xi32> to vector<8x1xf32>
    %364 = vector.broadcast %363 : vector<8x1xf32> to vector<8x32xf32>
    %365 = arith.mulf %364, %4 : vector<8x32xf32>
    %cst_57 = arith.constant dense<0.000000e+00> : vector<32xf32>
    %366 = vector.multi_reduction <add>, %365, %cst_57 [0] : vector<8x32xf32> to vector<32xf32>
    %367 = vector.shape_cast %366 : vector<32xf32> to vector<1x32xf32>
    %368 = arith.addf %357, %367 : vector<1x32xf32>
    %369 = arith.addf %368, %241 : vector<1x32xf32>
    %cst_58 = arith.constant dense<0.000000e+00> : vector<1x32xf32>
    %370 = tpu.matmul %369, %2, %cst_58 {dimension_numbers = #tpu.dot_dimension_numbers<[1], [0], [0], [1], [0, 0, 1, 1], [], []>} : vector<1x32xf32>, vector<32x32xf32>, vector<1x32xf32> -> vector<1x32xf32>
    %371 = arith.addf %370, %3 : vector<1x32xf32>
    %372 = math.tanh %371 : vector<1x32xf32>
    %cst_59 = arith.constant dense<0.000000e+00> : vector<1x128xf32>
    %373 = tpu.matmul %372, %6, %cst_59 {dimension_numbers = #tpu.dot_dimension_numbers<[1], [0], [0], [1], [0, 0, 1, 1], [], []>} : vector<1x32xf32>, vector<32x128xf32>, vector<1x128xf32> -> vector<1x128xf32>
    %374 = arith.addf %373, %7 : vector<1x128xf32>
    %cst_60 = arith.constant dense<0xFF800000> : vector<1xf32>
    %375 = vector.multi_reduction <maximumf>, %374, %cst_60 [1] : vector<1x128xf32> to vector<1xf32>
    %376 = vector.shape_cast %375 : vector<1xf32> to vector<1x1xf32>
    %377 = vector.broadcast %376 : vector<1x1xf32> to vector<1x128xf32>
    %378 = arith.subf %374, %377 : vector<1x128xf32>
    %379 = math.exp %378 : vector<1x128xf32>
    %cst_61 = arith.constant dense<0.000000e+00> : vector<1xf32>
    %380 = vector.multi_reduction <add>, %379, %cst_61 [1] : vector<1x128xf32> to vector<1xf32>
    %381 = vector.shape_cast %380 : vector<1xf32> to vector<1x1xf32>
    %382 = math.log %381 : vector<1x1xf32>
    %383 = arith.addf %382, %376 : vector<1x1xf32>
    %384 = vector.broadcast %383 : vector<1x1xf32> to vector<1x128xf32>
    %385 = arith.subf %374, %384 : vector<1x128xf32>
    %c2_62 = arith.constant 2 : index
    %c0_63 = arith.constant 0 : index
    %386 = vector.load %arg5[%c2_62, %c0_63] : memref<8x128xf32, #tpu.memory_space<vmem>>, vector<1x128xf32>
    tpu.vector_store %arg5[%c2_62, %c0_63], %385 {strides = array<i32>} : memref<8x128xf32, #tpu.memory_space<vmem>>, vector<1x128xf32>,
    %387 = arith.subf %376, %383 : vector<1x1xf32>
    %388 = vector.broadcast %387 : vector<1x1xf32> to vector<1x128xf32>
    %389 = arith.cmpf oeq, %385, %388 : vector<1x128xf32>
    %c2147483647_i32_64 = arith.constant 2147483647 : i32
    %390 = vector.broadcast %c2147483647_i32_64 : i32 to vector<1x128xi32>
    %391 = arith.select %389, %0, %390 : vector<1x128xi1>, vector<1x128xi32>
    %cst_65 = arith.constant dense<2147483647> : vector<1xi32>
    %392 = vector.multi_reduction <minsi>, %391, %cst_65 [1] : vector<1x128xi32> to vector<1xi32>
    %393 = vector.shape_cast %392 : vector<1xi32> to vector<1x1xi32>
    %394 = vector.broadcast %393 : vector<1x1xi32> to vector<1x128xi32>
    %395 = arith.cmpi eq, %0, %394 : vector<1x128xi32>
    %396 = arith.extui %395 : vector<1x128xi1> to vector<1x128xi32>
    %397 = arith.sitofp %396 : vector<1x128xi32> to vector<1x128xf32>
    %c4_i32_66 = arith.constant 4 : i32
    %398 = vector.broadcast %c4_i32_66 : i32 to vector<1x1xi32>
    %399 = arith.cmpi eq, %393, %398 : vector<1x1xi32>
    %c5_i32_67 = arith.constant 5 : i32
    %400 = vector.broadcast %c5_i32_67 : i32 to vector<1x1xi32>
    %401 = arith.cmpi eq, %393, %400 : vector<1x1xi32>
    %402 = arith.ori %399, %401 : vector<1x1xi1>
    %c6_i32_68 = arith.constant 6 : i32
    %403 = vector.broadcast %c6_i32_68 : i32 to vector<1x1xi32>
    %404 = arith.cmpi eq, %393, %403 : vector<1x1xi32>
    %405 = arith.ori %402, %404 : vector<1x1xi1>
    %c3_i32_69 = arith.constant 3 : i32
    %406 = vector.broadcast %c3_i32_69 : i32 to vector<1x1xi32>
    %407 = arith.cmpi slt, %356, %406 : vector<1x1xi32>
    %408 = arith.andi %405, %407 : vector<1x1xi1>
    %c1_i32_70 = arith.constant 1 : i32
    %409 = vector.broadcast %c1_i32_70 : i32 to vector<1x1xi32>
    %410 = arith.addi %356, %409 : vector<1x1xi32>
    %411 = arith.select %408, %410, %356 : vector<1x1xi1>, vector<1x1xi32>
    %cst_71 = arith.constant dense<0.000000e+00> : vector<1x32xf32>
    %412 = tpu.matmul %397, %5, %cst_71 {dimension_numbers = #tpu.dot_dimension_numbers<[1], [0], [0], [1], [0, 0, 1, 1], [], []>} : vector<1x128xf32>, vector<128x32xf32>, vector<1x32xf32> -> vector<1x32xf32>
    %c7_i32_72 = arith.constant 7 : i32
    %413 = vector.broadcast %c7_i32_72 : i32 to vector<1x1xi32>
    %414 = arith.minsi %411, %413 : vector<1x1xi32>
    %415 = vector.broadcast %414 : vector<1x1xi32> to vector<8x1xi32>
    %416 = arith.cmpi eq, %1, %415 : vector<8x1xi32>
    %417 = arith.extui %416 : vector<8x1xi1> to vector<8x1xi32>
    %418 = arith.sitofp %417 : vector<8x1xi32> to vector<8x1xf32>
    %419 = vector.broadcast %418 : vector<8x1xf32> to vector<8x32xf32>
    %420 = arith.mulf %419, %4 : vector<8x32xf32>
    %cst_73 = arith.constant dense<0.000000e+00> : vector<32xf32>
    %421 = vector.multi_reduction <add>, %420, %cst_73 [0] : vector<8x32xf32> to vector<32xf32>
    %422 = vector.shape_cast %421 : vector<32xf32> to vector<1x32xf32>
    %423 = arith.addf %412, %422 : vector<1x32xf32>
    %424 = arith.addf %423, %241 : vector<1x32xf32>
    %cst_74 = arith.constant dense<0.000000e+00> : vector<1x32xf32>
    %425 = tpu.matmul %424, %2, %cst_74 {dimension_numbers = #tpu.dot_dimension_numbers<[1], [0], [0], [1], [0, 0, 1, 1], [], []>} : vector<1x32xf32>, vector<32x32xf32>, vector<1x32xf32> -> vector<1x32xf32>
    %426 = arith.addf %425, %3 : vector<1x32xf32>
    %427 = math.tanh %426 : vector<1x32xf32>
    %cst_75 = arith.constant dense<0.000000e+00> : vector<1x128xf32>
    %428 = tpu.matmul %427, %6, %cst_75 {dimension_numbers = #tpu.dot_dimension_numbers<[1], [0], [0], [1], [0, 0, 1, 1], [], []>} : vector<1x32xf32>, vector<32x128xf32>, vector<1x128xf32> -> vector<1x128xf32>
    %429 = arith.addf %428, %7 : vector<1x128xf32>
    %cst_76 = arith.constant dense<0xFF800000> : vector<1xf32>
    %430 = vector.multi_reduction <maximumf>, %429, %cst_76 [1] : vector<1x128xf32> to vector<1xf32>
    %431 = vector.shape_cast %430 : vector<1xf32> to vector<1x1xf32>
    %432 = vector.broadcast %431 : vector<1x1xf32> to vector<1x128xf32>
    %433 = arith.subf %429, %432 : vector<1x128xf32>
    %434 = math.exp %433 : vector<1x128xf32>
    %cst_77 = arith.constant dense<0.000000e+00> : vector<1xf32>
    %435 = vector.multi_reduction <add>, %434, %cst_77 [1] : vector<1x128xf32> to vector<1xf32>
    %436 = vector.shape_cast %435 : vector<1xf32> to vector<1x1xf32>
    %437 = math.log %436 : vector<1x1xf32>
    %438 = arith.addf %437, %431 : vector<1x1xf32>
    %439 = vector.broadcast %438 : vector<1x1xf32> to vector<1x128xf32>
    %440 = arith.subf %429, %439 : vector<1x128xf32>
    %c3_78 = arith.constant 3 : index
    %c0_79 = arith.constant 0 : index
    %441 = vector.load %arg5[%c3_78, %c0_79] : memref<8x128xf32, #tpu.memory_space<vmem>>, vector<1x128xf32>
    tpu.vector_store %arg5[%c3_78, %c0_79], %440 {strides = array<i32>} : memref<8x128xf32, #tpu.memory_space<vmem>>, vector<1x128xf32>,
    %442 = arith.subf %431, %438 : vector<1x1xf32>
    %443 = vector.broadcast %442 : vector<1x1xf32> to vector<1x128xf32>
    %444 = arith.cmpf oeq, %440, %443 : vector<1x128xf32>
    %c2147483647_i32_80 = arith.constant 2147483647 : i32
    %445 = vector.broadcast %c2147483647_i32_80 : i32 to vector<1x128xi32>
    %446 = arith.select %444, %0, %445 : vector<1x128xi1>, vector<1x128xi32>
    %cst_81 = arith.constant dense<2147483647> : vector<1xi32>
    %447 = vector.multi_reduction <minsi>, %446, %cst_81 [1] : vector<1x128xi32> to vector<1xi32>
    %448 = vector.shape_cast %447 : vector<1xi32> to vector<1x1xi32>
    %449 = vector.broadcast %448 : vector<1x1xi32> to vector<1x128xi32>
    %450 = arith.cmpi eq, %0, %449 : vector<1x128xi32>
    %451 = arith.extui %450 : vector<1x128xi1> to vector<1x128xi32>
    %452 = arith.sitofp %451 : vector<1x128xi32> to vector<1x128xf32>
    %c4_i32_82 = arith.constant 4 : i32
    %453 = vector.broadcast %c4_i32_82 : i32 to vector<1x1xi32>
    %454 = arith.cmpi eq, %448, %453 : vector<1x1xi32>
    %c5_i32_83 = arith.constant 5 : i32
    %455 = vector.broadcast %c5_i32_83 : i32 to vector<1x1xi32>
    %456 = arith.cmpi eq, %448, %455 : vector<1x1xi32>
    %457 = arith.ori %454, %456 : vector<1x1xi1>
    %c6_i32_84 = arith.constant 6 : i32
    %458 = vector.broadcast %c6_i32_84 : i32 to vector<1x1xi32>
    %459 = arith.cmpi eq, %448, %458 : vector<1x1xi32>
    %460 = arith.ori %457, %459 : vector<1x1xi1>
    %c3_i32_85 = arith.constant 3 : i32
    %461 = vector.broadcast %c3_i32_85 : i32 to vector<1x1xi32>
    %462 = arith.cmpi slt, %411, %461 : vector<1x1xi32>
    %463 = arith.andi %460, %462 : vector<1x1xi1>
    %c1_i32_86 = arith.constant 1 : i32
    %464 = vector.broadcast %c1_i32_86 : i32 to vector<1x1xi32>
    %465 = arith.addi %411, %464 : vector<1x1xi32>
    %466 = arith.select %463, %465, %411 : vector<1x1xi1>, vector<1x1xi32>
    %cst_87 = arith.constant dense<0.000000e+00> : vector<1x32xf32>
    %467 = tpu.matmul %452, %5, %cst_87 {dimension_numbers = #tpu.dot_dimension_numbers<[1], [0], [0], [1], [0, 0, 1, 1], [], []>} : vector<1x128xf32>, vector<128x32xf32>, vector<1x32xf32> -> vector<1x32xf32>
    %c7_i32_88 = arith.constant 7 : i32
    %468 = vector.broadcast %c7_i32_88 : i32 to vector<1x1xi32>
    %469 = arith.minsi %466, %468 : vector<1x1xi32>
    %470 = vector.broadcast %469 : vector<1x1xi32> to vector<8x1xi32>
    %471 = arith.cmpi eq, %1, %470 : vector<8x1xi32>
    %472 = arith.extui %471 : vector<8x1xi1> to vector<8x1xi32>
    %473 = arith.sitofp %472 : vector<8x1xi32> to vector<8x1xf32>
    %474 = vector.broadcast %473 : vector<8x1xf32> to vector<8x32xf32>
    %475 = arith.mulf %474, %4 : vector<8x32xf32>
    %cst_89 = arith.constant dense<0.000000e+00> : vector<32xf32>
    %476 = vector.multi_reduction <add>, %475, %cst_89 [0] : vector<8x32xf32> to vector<32xf32>
    %477 = vector.shape_cast %476 : vector<32xf32> to vector<1x32xf32>
    %478 = arith.addf %467, %477 : vector<1x32xf32>
    %479 = arith.addf %478, %241 : vector<1x32xf32>
    %cst_90 = arith.constant dense<0.000000e+00> : vector<1x32xf32>
    %480 = tpu.matmul %479, %2, %cst_90 {dimension_numbers = #tpu.dot_dimension_numbers<[1], [0], [0], [1], [0, 0, 1, 1], [], []>} : vector<1x32xf32>, vector<32x32xf32>, vector<1x32xf32> -> vector<1x32xf32>
    %481 = arith.addf %480, %3 : vector<1x32xf32>
    %482 = math.tanh %481 : vector<1x32xf32>
    %cst_91 = arith.constant dense<0.000000e+00> : vector<1x128xf32>
    %483 = tpu.matmul %482, %6, %cst_91 {dimension_numbers = #tpu.dot_dimension_numbers<[1], [0], [0], [1], [0, 0, 1, 1], [], []>} : vector<1x32xf32>, vector<32x128xf32>, vector<1x128xf32> -> vector<1x128xf32>
    %484 = arith.addf %483, %7 : vector<1x128xf32>
    %cst_92 = arith.constant dense<0xFF800000> : vector<1xf32>
    %485 = vector.multi_reduction <maximumf>, %484, %cst_92 [1] : vector<1x128xf32> to vector<1xf32>
    %486 = vector.shape_cast %485 : vector<1xf32> to vector<1x1xf32>
    %487 = vector.broadcast %486 : vector<1x1xf32> to vector<1x128xf32>
    %488 = arith.subf %484, %487 : vector<1x128xf32>
    %489 = math.exp %488 : vector<1x128xf32>
    %cst_93 = arith.constant dense<0.000000e+00> : vector<1xf32>
    %490 = vector.multi_reduction <add>, %489, %cst_93 [1] : vector<1x128xf32> to vector<1xf32>
    %491 = vector.shape_cast %490 : vector<1xf32> to vector<1x1xf32>
    %492 = math.log %491 : vector<1x1xf32>
    %493 = arith.addf %492, %486 : vector<1x1xf32>
    %494 = vector.broadcast %493 : vector<1x1xf32> to vector<1x128xf32>
    %495 = arith.subf %484, %494 : vector<1x128xf32>
    %c4_94 = arith.constant 4 : index
    %c0_95 = arith.constant 0 : index
    %496 = vector.load %arg5[%c4_94, %c0_95] : memref<8x128xf32, #tpu.memory_space<vmem>>, vector<1x128xf32>
    tpu.vector_store %arg5[%c4_94, %c0_95], %495 {strides = array<i32>} : memref<8x128xf32, #tpu.memory_space<vmem>>, vector<1x128xf32>,
    %497 = arith.subf %486, %493 : vector<1x1xf32>
    %498 = vector.broadcast %497 : vector<1x1xf32> to vector<1x128xf32>
    %499 = arith.cmpf oeq, %495, %498 : vector<1x128xf32>
    %c2147483647_i32_96 = arith.constant 2147483647 : i32
    %500 = vector.broadcast %c2147483647_i32_96 : i32 to vector<1x128xi32>
    %501 = arith.select %499, %0, %500 : vector<1x128xi1>, vector<1x128xi32>
    %cst_97 = arith.constant dense<2147483647> : vector<1xi32>
    %502 = vector.multi_reduction <minsi>, %501, %cst_97 [1] : vector<1x128xi32> to vector<1xi32>
    %503 = vector.shape_cast %502 : vector<1xi32> to vector<1x1xi32>
    %504 = vector.broadcast %503 : vector<1x1xi32> to vector<1x128xi32>
    %505 = arith.cmpi eq, %0, %504 : vector<1x128xi32>
    %506 = arith.extui %505 : vector<1x128xi1> to vector<1x128xi32>
    %507 = arith.sitofp %506 : vector<1x128xi32> to vector<1x128xf32>
    %c4_i32_98 = arith.constant 4 : i32
    %508 = vector.broadcast %c4_i32_98 : i32 to vector<1x1xi32>
    %509 = arith.cmpi eq, %503, %508 : vector<1x1xi32>
    %c5_i32_99 = arith.constant 5 : i32
    %510 = vector.broadcast %c5_i32_99 : i32 to vector<1x1xi32>
    %511 = arith.cmpi eq, %503, %510 : vector<1x1xi32>
    %512 = arith.ori %509, %511 : vector<1x1xi1>
    %c6_i32_100 = arith.constant 6 : i32
    %513 = vector.broadcast %c6_i32_100 : i32 to vector<1x1xi32>
    %514 = arith.cmpi eq, %503, %513 : vector<1x1xi32>
    %515 = arith.ori %512, %514 : vector<1x1xi1>
    %c3_i32_101 = arith.constant 3 : i32
    %516 = vector.broadcast %c3_i32_101 : i32 to vector<1x1xi32>
    %517 = arith.cmpi slt, %466, %516 : vector<1x1xi32>
    %518 = arith.andi %515, %517 : vector<1x1xi1>
    %c1_i32_102 = arith.constant 1 : i32
    %519 = vector.broadcast %c1_i32_102 : i32 to vector<1x1xi32>
    %520 = arith.addi %466, %519 : vector<1x1xi32>
    %521 = arith.select %518, %520, %466 : vector<1x1xi1>, vector<1x1xi32>
    %cst_103 = arith.constant dense<0.000000e+00> : vector<1x32xf32>
    %522 = tpu.matmul %507, %5, %cst_103 {dimension_numbers = #tpu.dot_dimension_numbers<[1], [0], [0], [1], [0, 0, 1, 1], [], []>} : vector<1x128xf32>, vector<128x32xf32>, vector<1x32xf32> -> vector<1x32xf32>
    %c7_i32_104 = arith.constant 7 : i32
    %523 = vector.broadcast %c7_i32_104 : i32 to vector<1x1xi32>
    %524 = arith.minsi %521, %523 : vector<1x1xi32>
    %525 = vector.broadcast %524 : vector<1x1xi32> to vector<8x1xi32>
    %526 = arith.cmpi eq, %1, %525 : vector<8x1xi32>
    %527 = arith.extui %526 : vector<8x1xi1> to vector<8x1xi32>
    %528 = arith.sitofp %527 : vector<8x1xi32> to vector<8x1xf32>
    %529 = vector.broadcast %528 : vector<8x1xf32> to vector<8x32xf32>
    %530 = arith.mulf %529, %4 : vector<8x32xf32>
    %cst_105 = arith.constant dense<0.000000e+00> : vector<32xf32>
    %531 = vector.multi_reduction <add>, %530, %cst_105 [0] : vector<8x32xf32> to vector<32xf32>
    %532 = vector.shape_cast %531 : vector<32xf32> to vector<1x32xf32>
    %533 = arith.addf %522, %532 : vector<1x32xf32>
    %534 = arith.addf %533, %241 : vector<1x32xf32>
    %cst_106 = arith.constant dense<0.000000e+00> : vector<1x32xf32>
    %535 = tpu.matmul %534, %2, %cst_106 {dimension_numbers = #tpu.dot_dimension_numbers<[1], [0], [0], [1], [0, 0, 1, 1], [], []>} : vector<1x32xf32>, vector<32x32xf32>, vector<1x32xf32> -> vector<1x32xf32>
    %536 = arith.addf %535, %3 : vector<1x32xf32>
    %537 = math.tanh %536 : vector<1x32xf32>
    %cst_107 = arith.constant dense<0.000000e+00> : vector<1x128xf32>
    %538 = tpu.matmul %537, %6, %cst_107 {dimension_numbers = #tpu.dot_dimension_numbers<[1], [0], [0], [1], [0, 0, 1, 1], [], []>} : vector<1x32xf32>, vector<32x128xf32>, vector<1x128xf32> -> vector<1x128xf32>
    %539 = arith.addf %538, %7 : vector<1x128xf32>
    %cst_108 = arith.constant dense<0xFF800000> : vector<1xf32>
    %540 = vector.multi_reduction <maximumf>, %539, %cst_108 [1] : vector<1x128xf32> to vector<1xf32>
    %541 = vector.shape_cast %540 : vector<1xf32> to vector<1x1xf32>
    %542 = vector.broadcast %541 : vector<1x1xf32> to vector<1x128xf32>
    %543 = arith.subf %539, %542 : vector<1x128xf32>
    %544 = math.exp %543 : vector<1x128xf32>
    %cst_109 = arith.constant dense<0.000000e+00> : vector<1xf32>
    %545 = vector.multi_reduction <add>, %544, %cst_109 [1] : vector<1x128xf32> to vector<1xf32>
    %546 = vector.shape_cast %545 : vector<1xf32> to vector<1x1xf32>
    %547 = math.log %546 : vector<1x1xf32>
    %548 = arith.addf %547, %541 : vector<1x1xf32>
    %549 = vector.broadcast %548 : vector<1x1xf32> to vector<1x128xf32>
    %550 = arith.subf %539, %549 : vector<1x128xf32>
    %c5_110 = arith.constant 5 : index
    %c0_111 = arith.constant 0 : index
    %551 = vector.load %arg5[%c5_110, %c0_111] : memref<8x128xf32, #tpu.memory_space<vmem>>, vector<1x128xf32>
    tpu.vector_store %arg5[%c5_110, %c0_111], %550 {strides = array<i32>} : memref<8x128xf32, #tpu.memory_space<vmem>>, vector<1x128xf32>,
    %552 = arith.subf %541, %548 : vector<1x1xf32>
    %553 = vector.broadcast %552 : vector<1x1xf32> to vector<1x128xf32>
    %554 = arith.cmpf oeq, %550, %553 : vector<1x128xf32>
    %c2147483647_i32_112 = arith.constant 2147483647 : i32
    %555 = vector.broadcast %c2147483647_i32_112 : i32 to vector<1x128xi32>
    %556 = arith.select %554, %0, %555 : vector<1x128xi1>, vector<1x128xi32>
    %cst_113 = arith.constant dense<2147483647> : vector<1xi32>
    %557 = vector.multi_reduction <minsi>, %556, %cst_113 [1] : vector<1x128xi32> to vector<1xi32>
    %558 = vector.shape_cast %557 : vector<1xi32> to vector<1x1xi32>
    %559 = vector.broadcast %558 : vector<1x1xi32> to vector<1x128xi32>
    %560 = arith.cmpi eq, %0, %559 : vector<1x128xi32>
    %561 = arith.extui %560 : vector<1x128xi1> to vector<1x128xi32>
    %562 = arith.sitofp %561 : vector<1x128xi32> to vector<1x128xf32>
    %c4_i32_114 = arith.constant 4 : i32
    %563 = vector.broadcast %c4_i32_114 : i32 to vector<1x1xi32>
    %564 = arith.cmpi eq, %558, %563 : vector<1x1xi32>
    %c5_i32_115 = arith.constant 5 : i32
    %565 = vector.broadcast %c5_i32_115 : i32 to vector<1x1xi32>
    %566 = arith.cmpi eq, %558, %565 : vector<1x1xi32>
    %567 = arith.ori %564, %566 : vector<1x1xi1>
    %c6_i32_116 = arith.constant 6 : i32
    %568 = vector.broadcast %c6_i32_116 : i32 to vector<1x1xi32>
    %569 = arith.cmpi eq, %558, %568 : vector<1x1xi32>
    %570 = arith.ori %567, %569 : vector<1x1xi1>
    %c3_i32_117 = arith.constant 3 : i32
    %571 = vector.broadcast %c3_i32_117 : i32 to vector<1x1xi32>
    %572 = arith.cmpi slt, %521, %571 : vector<1x1xi32>
    %573 = arith.andi %570, %572 : vector<1x1xi1>
    %c1_i32_118 = arith.constant 1 : i32
    %574 = vector.broadcast %c1_i32_118 : i32 to vector<1x1xi32>
    %575 = arith.addi %521, %574 : vector<1x1xi32>
    %576 = arith.select %573, %575, %521 : vector<1x1xi1>, vector<1x1xi32>
    %cst_119 = arith.constant dense<0.000000e+00> : vector<1x32xf32>
    %577 = tpu.matmul %562, %5, %cst_119 {dimension_numbers = #tpu.dot_dimension_numbers<[1], [0], [0], [1], [0, 0, 1, 1], [], []>} : vector<1x128xf32>, vector<128x32xf32>, vector<1x32xf32> -> vector<1x32xf32>
    %c7_i32_120 = arith.constant 7 : i32
    %578 = vector.broadcast %c7_i32_120 : i32 to vector<1x1xi32>
    %579 = arith.minsi %576, %578 : vector<1x1xi32>
    %580 = vector.broadcast %579 : vector<1x1xi32> to vector<8x1xi32>
    %581 = arith.cmpi eq, %1, %580 : vector<8x1xi32>
    %582 = arith.extui %581 : vector<8x1xi1> to vector<8x1xi32>
    %583 = arith.sitofp %582 : vector<8x1xi32> to vector<8x1xf32>
    %584 = vector.broadcast %583 : vector<8x1xf32> to vector<8x32xf32>
    %585 = arith.mulf %584, %4 : vector<8x32xf32>
    %cst_121 = arith.constant dense<0.000000e+00> : vector<32xf32>
    %586 = vector.multi_reduction <add>, %585, %cst_121 [0] : vector<8x32xf32> to vector<32xf32>
    %587 = vector.shape_cast %586 : vector<32xf32> to vector<1x32xf32>
    %588 = arith.addf %577, %587 : vector<1x32xf32>
    %589 = arith.addf %588, %241 : vector<1x32xf32>
    %cst_122 = arith.constant dense<0.000000e+00> : vector<1x32xf32>
    %590 = tpu.matmul %589, %2, %cst_122 {dimension_numbers = #tpu.dot_dimension_numbers<[1], [0], [0], [1], [0, 0, 1, 1], [], []>} : vector<1x32xf32>, vector<32x32xf32>, vector<1x32xf32> -> vector<1x32xf32>
    %591 = arith.addf %590, %3 : vector<1x32xf32>
    %592 = math.tanh %591 : vector<1x32xf32>
    %cst_123 = arith.constant dense<0.000000e+00> : vector<1x128xf32>
    %593 = tpu.matmul %592, %6, %cst_123 {dimension_numbers = #tpu.dot_dimension_numbers<[1], [0], [0], [1], [0, 0, 1, 1], [], []>} : vector<1x32xf32>, vector<32x128xf32>, vector<1x128xf32> -> vector<1x128xf32>
    %594 = arith.addf %593, %7 : vector<1x128xf32>
    %cst_124 = arith.constant dense<0xFF800000> : vector<1xf32>
    %595 = vector.multi_reduction <maximumf>, %594, %cst_124 [1] : vector<1x128xf32> to vector<1xf32>
    %596 = vector.shape_cast %595 : vector<1xf32> to vector<1x1xf32>
    %597 = vector.broadcast %596 : vector<1x1xf32> to vector<1x128xf32>
    %598 = arith.subf %594, %597 : vector<1x128xf32>
    %599 = math.exp %598 : vector<1x128xf32>
    %cst_125 = arith.constant dense<0.000000e+00> : vector<1xf32>
    %600 = vector.multi_reduction <add>, %599, %cst_125 [1] : vector<1x128xf32> to vector<1xf32>
    %601 = vector.shape_cast %600 : vector<1xf32> to vector<1x1xf32>
    %602 = math.log %601 : vector<1x1xf32>
    %603 = arith.addf %602, %596 : vector<1x1xf32>
    %604 = vector.broadcast %603 : vector<1x1xf32> to vector<1x128xf32>
    %605 = arith.subf %594, %604 : vector<1x128xf32>
    %c6_126 = arith.constant 6 : index
    %c0_127 = arith.constant 0 : index
    %606 = vector.load %arg5[%c6_126, %c0_127] : memref<8x128xf32, #tpu.memory_space<vmem>>, vector<1x128xf32>
    tpu.vector_store %arg5[%c6_126, %c0_127], %605 {strides = array<i32>} : memref<8x128xf32, #tpu.memory_space<vmem>>, vector<1x128xf32>,
    %607 = arith.subf %596, %603 : vector<1x1xf32>
    %608 = vector.broadcast %607 : vector<1x1xf32> to vector<1x128xf32>
    %609 = arith.cmpf oeq, %605, %608 : vector<1x128xf32>
    %c2147483647_i32_128 = arith.constant 2147483647 : i32
    %610 = vector.broadcast %c2147483647_i32_128 : i32 to vector<1x128xi32>
    %611 = arith.select %609, %0, %610 : vector<1x128xi1>, vector<1x128xi32>
    %cst_129 = arith.constant dense<2147483647> : vector<1xi32>
    %612 = vector.multi_reduction <minsi>, %611, %cst_129 [1] : vector<1x128xi32> to vector<1xi32>
    %613 = vector.shape_cast %612 : vector<1xi32> to vector<1x1xi32>
    %614 = vector.broadcast %613 : vector<1x1xi32> to vector<1x128xi32>
    %615 = arith.cmpi eq, %0, %614 : vector<1x128xi32>
    %616 = arith.extui %615 : vector<1x128xi1> to vector<1x128xi32>
    %617 = arith.sitofp %616 : vector<1x128xi32> to vector<1x128xf32>
    %c4_i32_130 = arith.constant 4 : i32
    %618 = vector.broadcast %c4_i32_130 : i32 to vector<1x1xi32>
    %619 = arith.cmpi eq, %613, %618 : vector<1x1xi32>
    %c5_i32_131 = arith.constant 5 : i32
    %620 = vector.broadcast %c5_i32_131 : i32 to vector<1x1xi32>
    %621 = arith.cmpi eq, %613, %620 : vector<1x1xi32>
    %622 = arith.ori %619, %621 : vector<1x1xi1>
    %c6_i32_132 = arith.constant 6 : i32
    %623 = vector.broadcast %c6_i32_132 : i32 to vector<1x1xi32>
    %624 = arith.cmpi eq, %613, %623 : vector<1x1xi32>
    %625 = arith.ori %622, %624 : vector<1x1xi1>
    %c3_i32_133 = arith.constant 3 : i32
    %626 = vector.broadcast %c3_i32_133 : i32 to vector<1x1xi32>
    %627 = arith.cmpi slt, %576, %626 : vector<1x1xi32>
    %628 = arith.andi %625, %627 : vector<1x1xi1>
    %c1_i32_134 = arith.constant 1 : i32
    %629 = vector.broadcast %c1_i32_134 : i32 to vector<1x1xi32>
    %630 = arith.addi %576, %629 : vector<1x1xi32>
    %631 = arith.select %628, %630, %576 : vector<1x1xi1>, vector<1x1xi32>
    %cst_135 = arith.constant dense<0.000000e+00> : vector<1x32xf32>
    %632 = tpu.matmul %617, %5, %cst_135 {dimension_numbers = #tpu.dot_dimension_numbers<[1], [0], [0], [1], [0, 0, 1, 1], [], []>} : vector<1x128xf32>, vector<128x32xf32>, vector<1x32xf32> -> vector<1x32xf32>
    %c7_i32_136 = arith.constant 7 : i32
    %633 = vector.broadcast %c7_i32_136 : i32 to vector<1x1xi32>
    %634 = arith.minsi %631, %633 : vector<1x1xi32>
    %635 = vector.broadcast %634 : vector<1x1xi32> to vector<8x1xi32>
    %636 = arith.cmpi eq, %1, %635 : vector<8x1xi32>
    %637 = arith.extui %636 : vector<8x1xi1> to vector<8x1xi32>
    %638 = arith.sitofp %637 : vector<8x1xi32> to vector<8x1xf32>
    %639 = vector.broadcast %638 : vector<8x1xf32> to vector<8x32xf32>
    %640 = arith.mulf %639, %4 : vector<8x32xf32>
    %cst_137 = arith.constant dense<0.000000e+00> : vector<32xf32>
    %641 = vector.multi_reduction <add>, %640, %cst_137 [0] : vector<8x32xf32> to vector<32xf32>
    %642 = vector.shape_cast %641 : vector<32xf32> to vector<1x32xf32>
    %643 = arith.addf %632, %642 : vector<1x32xf32>
    %644 = arith.addf %643, %241 : vector<1x32xf32>
    %cst_138 = arith.constant dense<0.000000e+00> : vector<1x32xf32>
    %645 = tpu.matmul %644, %2, %cst_138 {dimension_numbers = #tpu.dot_dimension_numbers<[1], [0], [0], [1], [0, 0, 1, 1], [], []>} : vector<1x32xf32>, vector<32x32xf32>, vector<1x32xf32> -> vector<1x32xf32>
    %646 = arith.addf %645, %3 : vector<1x32xf32>
    %647 = math.tanh %646 : vector<1x32xf32>
    %cst_139 = arith.constant dense<0.000000e+00> : vector<1x128xf32>
    %648 = tpu.matmul %647, %6, %cst_139 {dimension_numbers = #tpu.dot_dimension_numbers<[1], [0], [0], [1], [0, 0, 1, 1], [], []>} : vector<1x32xf32>, vector<32x128xf32>, vector<1x128xf32> -> vector<1x128xf32>
    %649 = arith.addf %648, %7 : vector<1x128xf32>
    %cst_140 = arith.constant dense<0xFF800000> : vector<1xf32>
    %650 = vector.multi_reduction <maximumf>, %649, %cst_140 [1] : vector<1x128xf32> to vector<1xf32>
    %651 = vector.shape_cast %650 : vector<1xf32> to vector<1x1xf32>
    %652 = vector.broadcast %651 : vector<1x1xf32> to vector<1x128xf32>
    %653 = arith.subf %649, %652 : vector<1x128xf32>
    %654 = math.exp %653 : vector<1x128xf32>
    %cst_141 = arith.constant dense<0.000000e+00> : vector<1xf32>
    %655 = vector.multi_reduction <add>, %654, %cst_141 [1] : vector<1x128xf32> to vector<1xf32>
    %656 = vector.shape_cast %655 : vector<1xf32> to vector<1x1xf32>
    %657 = math.log %656 : vector<1x1xf32>
    %658 = arith.addf %657, %651 : vector<1x1xf32>
    %659 = vector.broadcast %658 : vector<1x1xf32> to vector<1x128xf32>
    %660 = arith.subf %649, %659 : vector<1x128xf32>
    %c7_142 = arith.constant 7 : index
    %c0_143 = arith.constant 0 : index
    %661 = vector.load %arg5[%c7_142, %c0_143] : memref<8x128xf32, #tpu.memory_space<vmem>>, vector<1x128xf32>
    tpu.vector_store %arg5[%c7_142, %c0_143], %660 {strides = array<i32>} : memref<8x128xf32, #tpu.memory_space<vmem>>, vector<1x128xf32>,
    return
  }
  func.func @transform_0(%arg0: i32, %arg1: memref<4x16xi32, #tpu.memory_space<smem>>, %arg2: memref<4x16xi32, #tpu.memory_space<smem>>) -> (i32, i32) {
    %c0_i32 = arith.constant 0 : i32
    %c0_i32_0 = arith.constant 0 : i32
    %c0_i32_1 = arith.constant 0 : i32
    return %c0_i32, %c0_i32_0 : i32, i32
  }
  func.func @transform_1(%arg0: i32, %arg1: memref<4x16xi32, #tpu.memory_space<smem>>, %arg2: memref<4x16xi32, #tpu.memory_space<smem>>) -> (i32, i32) {
    %c0_i32 = arith.constant 0 : i32
    %c0_i32_0 = arith.constant 0 : i32
    %c0_i32_1 = arith.constant 0 : i32
    return %c0_i32, %c0_i32_0 : i32, i32
  }
  func.func @transform_2(%arg0: i32, %arg1: memref<4x16xi32, #tpu.memory_space<smem>>, %arg2: memref<4x16xi32, #tpu.memory_space<smem>>) -> (i32, i32) {
    %c0_i32 = arith.constant 0 : i32
    %c0_i32_0 = arith.constant 0 : i32
    return %arg0, %c0_i32 : i32, i32
  }
}

</mosaic_0001>

<llo_original>
// kernel: decode_fn.1
$region0: #{decode_fn.1}
  #allocation0 [shape = 'u32[]', space=smem, size = 0x4, offset = 0x4, fixed_abs, tag = 'smem constant byte address 0x4 - core index']
  #allocation1 [shape = 'u32[144,128]{1,0:T(1,128)}', space=vmem, size = 0x12000, scoped, tag = 'internal scratch']
  #allocation2 [shape = 's32[1]{0}', space=sflag, size = 0x4, scoped, tag = 'scoped memory for decode_fn.1']
  #allocation3 [shape = 'u8[2048]{0}', space=smem, size = 0x800, scoped, tag = 'prefetched SMEM operand 0']
  #allocation4 [shape = 'u8[2048]{0}', space=smem, size = 0x800, scoped, tag = 'prefetched SMEM operand 1']
  %s0 = inlined_call_operand.vmem [shape: s32[4,16], index: 0, kind: input, shape index: {}]
  %s1 = inlined_call_operand.vmem [shape: s32[4,16], index: 1, kind: input, shape index: {}]
  %s2 = inlined_call_operand.vmem [shape: f32[176,32], index: 2, kind: input, shape index: {}]
  %s3 = inlined_call_operand.vmem [shape: f32[40,128], index: 3, kind: input, shape index: {}]
  %s4 = inlined_call_operand.hbm [shape: f32[32,128], index: 4, kind: output, shape index: {}]
  %s5 = sld [smem:[#allocation0]]
  $region41: #{decode_fn.1} parent=0
    _
  %s7 = ssub.s32 1, %s5
  %s8 = scalar_select 0, %s7, %s5
  %s9 = sshll.u32 %s0, 4
  %s10 = int_to_ptr.vmem [resolvable:$true] %s9
  %12 = dma.vmem_to_smem %s10, 64, [#allocation3], [#allocation2]
  %s13 = sshll.u32 %s1, 4
  %s14 = int_to_ptr.vmem [resolvable:$true] %s13
  %16 = dma.vmem_to_smem %s14, 64, [#allocation4], [#allocation2]
  %17 = dma.done [#allocation2], 128
  %18 = sfence
  $region1: #{decode_fn.1} parent=0
    #allocation5 [shape = 'u8[8192]{0}', space=vmem, size = 0x2000, scoped, tag = 'output window, operand 0']
    #allocation6 [shape = 's32[2]{0}', space=sflag, size = 0x8, scoped, tag = 'scoped memory for decode_fn.1']
    %19 = vsyncpa [#allocation6], 0
    %s20 = scalar_lea.sflag [#allocation6], 1
    %21 = vsyncpa %s20, 0
    loop: start=0, step=1, limit=6
    $region2: #{decode_fn.1} parent=1 // loop_pre_header
      _
    $region3: #{decode_fn.1} parent=1 // loop_header
      %s23 = sphi 0, %s27
      %p24 = scmp.ge.s32.totalorder %s23, 6
      %s31 = sphi 0, %s31
      %s33 = sphi 0, %s31
      %s34 = sphi 0, %s33
      %s48 = sphi 0, %s34
      %s52 = sphi 0, %s52
      %s54 = sphi 0, %s52
      %s55 = sphi 0, %s54
      %s69 = sphi 0, %s55
      %s75 = sphi 0, %s77
      %s78 = sphi 0, %s75
      %s79 = sphi 0, %s78
      %s95 = sphi 0, %s79
    $region4: #{decode_fn.1} parent=1 // loop_header_branch
      %26 = sbr.rel (%p24) target = $region8
    $region5: #{decode_fn.1} parent=1 // loop_body
      %s28 = ssub.s32 %s23, 1
      %s29 = ssub.s32 %s23, 2
      %s30 = sadd.s32 %s23, 1
      %s32 = sadd.s32 %s31, 1
      %p35 = scmp.eq.s32.totalorder %s23, 3
      %p36 = scmp.ne.s32.totalorder %s31, %s33
      %p37 = scmp.eq.s32.totalorder %s23, 0
      %p38 = por %p36, %p37
      %p39 = scmp.ne.s32.totalorder %s31, %s33
      %p40 = scmp.eq.s32.totalorder %s28, 3
      %p41 = por %p39, %p40
      %p42 = scmp.ne.s32.totalorder %s33, %s34
      %p43 = scmp.eq.s32.totalorder %s28, 0
      %p44 = por %p42, %p43
      %p45 = scmp.ne.s32.totalorder %s33, %s34
      %p46 = scmp.eq.s32.totalorder %s29, 3
      %p47 = por %p45, %p46
      %p49 = scmp.ne.s32.totalorder %s34, %s48
      %p50 = scmp.eq.s32.totalorder %s29, 0
      %p51 = por %p49, %p50
      %s53 = sadd.s32 %s52, 1
      %p56 = scmp.eq.s32.totalorder %s23, 3
      %p57 = scmp.ne.s32.totalorder %s52, %s54
      %p58 = scmp.eq.s32.totalorder %s23, 0
      %p59 = por %p57, %p58
      %p60 = scmp.ne.s32.totalorder %s52, %s54
      %p61 = scmp.eq.s32.totalorder %s28, 3
      %p62 = por %p60, %p61
      %p63 = scmp.ne.s32.totalorder %s54, %s55
      %p64 = scmp.eq.s32.totalorder %s28, 0
      %p65 = por %p63, %p64
      %p66 = scmp.ne.s32.totalorder %s54, %s55
      %p67 = scmp.eq.s32.totalorder %s29, 3
      %p68 = por %p66, %p67
      %p70 = scmp.ne.s32.totalorder %s55, %s69
      %p71 = scmp.eq.s32.totalorder %s29, 0
      %p72 = por %p70, %p71
      %s73 = ssub.s32 %s23, %s30
      %p74 = scmp.eq.s32.totalorder %s73, 0
      %s76 = sadd.s32 %s75, 1
      %s77 = scalar_select %p74, %s75, %s76
      %p80 = pneg %p74
      %p81 = scmp.eq.s32.totalorder %s23, 3
      %p82 = por %p80, %p81
      %p83 = scmp.ne.s32.totalorder %s75, %s78
      %p84 = scmp.eq.s32.totalorder %s23, 0
      %p85 = por %p83, %p84
      %p86 = scmp.ne.s32.totalorder %s75, %s78
      %p87 = scmp.eq.s32.totalorder %s28, 3
      %p88 = por %p86, %p87
      %p89 = scmp.ne.s32.totalorder %s78, %s79
      %p90 = scmp.eq.s32.totalorder %s28, 0
      %p91 = por %p89, %p90
      %p92 = scmp.ne.s32.totalorder %s78, %s79
      %p93 = scmp.eq.s32.totalorder %s29, 3
      %p94 = por %p92, %p93
      %p96 = scmp.ne.s32.totalorder %s79, %s95
      %p97 = scmp.eq.s32.totalorder %s29, 0
      %p98 = por %p96, %p97
      %p99 = scmp.le.s32.totalorder 1, %s23
      %p100 = scmp.lt.s32.totalorder %s23, 5
      %p101 = pnand %p99, %p100
      %p102 = pneg %p101
      // Predicated region
      $region9: #{decode_fn.1} parent=5 // pred_check
        _
      $region10: #{decode_fn.1} parent=5 // pred_check_branch
        %104 = sbr.rel (%p101) target = $region12
      $region11: #{decode_fn.1} parent=5 // pred_region
        %s105 = ssub.s32 %s23, 1
        // Predicated region
        $region13: #{decode_fn.1} parent=11 // pred_check
          %p106 = pneg %p44
        $region14: #{decode_fn.1} parent=11 // pred_check_branch
          %108 = sbr.rel (%p106) target = $region16
        $region15: #{decode_fn.1} parent=11 // pred_region
          _
        $region16: #{decode_fn.1} parent=11 // pred_fallthru
          _
        // Predicated region
        $region17: #{decode_fn.1} parent=11 // pred_check
          %p109 = pneg %p65
        $region18: #{decode_fn.1} parent=11 // pred_check_branch
          %111 = sbr.rel (%p109) target = $region20
        $region19: #{decode_fn.1} parent=11 // pred_region
          _
        $region20: #{decode_fn.1} parent=11 // pred_fallthru
          _
      $region12: #{decode_fn.1} parent=5 // pred_fallthru
        _
      %p112 = scmp.lt.s32.totalorder %s23, 4
      // Predicated region
      $region21: #{decode_fn.1} parent=5 // pred_check
        %p113 = pneg %p112
      $region22: #{decode_fn.1} parent=5 // pred_check_branch
        %115 = sbr.rel (%p113) target = $region24
      $region23: #{decode_fn.1} parent=5 // pred_region
        _
      $region24: #{decode_fn.1} parent=5 // pred_fallthru
        _
      %p116 = scmp.le.s32.totalorder 1, %s23
      %p117 = scmp.lt.s32.totalorder %s23, 5
      %p118 = pnand %p116, %p117
      %p119 = pneg %p118
      // Predicated region
      $region25: #{decode_fn.1} parent=5 // pred_check
        _
      $region26: #{decode_fn.1} parent=5 // pred_check_branch
        %121 = sbr.rel (%p118) target = $region28
      $region27: #{decode_fn.1} parent=5 // pred_region
        %s122 = ssub.s32 %s23, 1
        %p123 = pneg %p44
        %p124 = pneg %p41
        %p125 = pneg %p65
        %p126 = pneg %p62
        %p127 = pneg %p91
        %p128 = pneg %p88
        %s129 = sand.u32 %s78, 1
        %s130 = scalar_lea.sflag [#allocation6], %s129
        %s131 = sand.u32 %s78, 1
        %s132 = smul.addr %s131, 8
        %s133 = scalar_lea.vmem [#allocation5], %s132
        %v134 = vlaneseq
        %v135 = vand.u32 %v134, 127
        %v136 = vlaneseq
        %v137 = vshrl.u32 %v136, 7
        %v138 = vld [vmem:[%s2] sm:$0xff]
        %v139 = vld [vmem:[%s2 + $0x8] sm:$0xff]
        %v140 = vld [vmem:[%s2 + $0x10] sm:$0xff]
        %v141 = vld [vmem:[%s2 + $0x18] sm:$0xff]
        %v142 = vld [vmem:[%s2 + $0x20] sm:$0x1]
        %v143 = vld [vmem:[%s2 + $0x28] sm:$0xff]
        %v144 = vld [vmem:[%s2 + $0x30] sm:$0xff]
        %v145 = vld [vmem:[%s2 + $0x38] sm:$0xff]
        %v146 = vld [vmem:[%s2 + $0x40] sm:$0xff]
        %v147 = vld [vmem:[%s2 + $0x48] sm:$0xff]
        %v148 = vld [vmem:[%s2 + $0x50] sm:$0xff]
        %v149 = vld [vmem:[%s2 + $0x58] sm:$0xff]
        %v150 = vld [vmem:[%s2 + $0x60] sm:$0xff]
        %v151 = vld [vmem:[%s2 + $0x68] sm:$0xff]
        %v152 = vld [vmem:[%s2 + $0x70] sm:$0xff]
        %v153 = vld [vmem:[%s2 + $0x78] sm:$0xff]
        %v154 = vld [vmem:[%s2 + $0x80] sm:$0xff]
        %v155 = vld [vmem:[%s2 + $0x88] sm:$0xff]
        %v156 = vld [vmem:[%s2 + $0x90] sm:$0xff]
        %v157 = vld [vmem:[%s2 + $0x98] sm:$0xff]
        %v158 = vld [vmem:[%s2 + $0xa0] sm:$0xff]
        %v159 = vld [vmem:[%s2 + $0xa8] sm:$0xff]
        %v160 = vld [vmem:[%s3] sm:$0xff]
        %v161 = vld [vmem:[%s3 + $0x8] sm:$0xff]
        %v162 = vld [vmem:[%s3 + $0x10] sm:$0xff]
        %v163 = vld [vmem:[%s3 + $0x18] sm:$0xff]
        %v164 = vld [vmem:[%s3 + $0x20] sm:$0x1]
        %s165 = smul.u32 %s28, 128
        %s166 = sld [smem:[#allocation3 + %s165]]
        %v167 = vstv %s166
        %vm168 = vcmp.eq.s32.totalorder %v135, %v167
        %v169 = vsel %vm168, 1, 0
        %v170 = vcvt.s32.f32 %v169
        %v171 = vadd.f32 %v170, 0.0
        %s172 = sld [smem:[#allocation4 + %s165]]
        %v173 = vstv %s172
        %vm174 = vcmp.eq.s32.totalorder %v137, %v173
        %v175 = vsel %vm174, 1, 0
        %v176 = vcvt.s32.f32 %v175
        %v177 = vadd.f32 %v176, 0.0
        %s178 = sadd.s32 %s165, 1
        %s179 = sld [smem:[#allocation3 + %s178]]
        %v180 = vstv %s179
        %vm181 = vcmp.eq.s32.totalorder %v135, %v180
        %v182 = vsel %vm181, 1, 0
        %v183 = vcvt.s32.f32 %v182
        %v184 = vadd.f32 %v171, %v183
        %s185 = sld [smem:[#allocation4 + %s178]]
        %v186 = vstv %s185
        %vm187 = vcmp.eq.s32.totalorder %v137, %v186
        %v188 = vsel %vm187, 1, 0
        %v189 = vcvt.s32.f32 %v188
        %v190 = vadd.f32 %v177, %v189
        %s191 = sadd.s32 %s165, 2
        %s192 = sld [smem:[#allocation3 + %s191]]
        %v193 = vstv %s192
        %vm194 = vcmp.eq.s32.totalorder %v135, %v193
        %v195 = vsel %vm194, 1, 0
        %v196 = vcvt.s32.f32 %v195
        %v197 = vadd.f32 %v184, %v196
        %s198 = sld [smem:[#allocation4 + %s191]]
        %v199 = vstv %s198
        %vm200 = vcmp.eq.s32.totalorder %v137, %v199
        %v201 = vsel %vm200, 1, 0
        %v202 = vcvt.s32.f32 %v201
        %v203 = vadd.f32 %v190, %v202
        %s204 = sadd.s32 %s165, 3
        %s205 = sld [smem:[#allocation3 + %s204]]
        %v206 = vstv %s205
        %vm207 = vcmp.eq.s32.totalorder %v135, %v206
        %v208 = vsel %vm207, 1, 0
        %v209 = vcvt.s32.f32 %v208
        %v210 = vadd.f32 %v197, %v209
        %s211 = sld [smem:[#allocation4 + %s204]]
        %v212 = vstv %s211
        %vm213 = vcmp.eq.s32.totalorder %v137, %v212
        %v214 = vsel %vm213, 1, 0
        %v215 = vcvt.s32.f32 %v214
        %v216 = vadd.f32 %v203, %v215
        %s217 = sadd.s32 %s165, 4
        %s218 = sld [smem:[#allocation3 + %s217]]
        %v219 = vstv %s218
        %vm220 = vcmp.eq.s32.totalorder %v135, %v219
        %v221 = vsel %vm220, 1, 0
        %v222 = vcvt.s32.f32 %v221
        %v223 = vadd.f32 %v210, %v222
        %s224 = sld [smem:[#allocation4 + %s217]]
        %v225 = vstv %s224
        %vm226 = vcmp.eq.s32.totalorder %v137, %v225
        %v227 = vsel %vm226, 1, 0
        %v228 = vcvt.s32.f32 %v227
        %v229 = vadd.f32 %v216, %v228
        %s230 = sadd.s32 %s165, 5
        %s231 = sld [smem:[#allocation3 + %s230]]
        %v232 = vstv %s231
        %vm233 = vcmp.eq.s32.totalorder %v135, %v232
        %v234 = vsel %vm233, 1, 0
        %v235 = vcvt.s32.f32 %v234
        %v236 = vadd.f32 %v223, %v235
        %s237 = sld [smem:[#allocation4 + %s230]]
        %v238 = vstv %s237
        %vm239 = vcmp.eq.s32.totalorder %v137, %v238
        %v240 = vsel %vm239, 1, 0
        %v241 = vcvt.s32.f32 %v240
        %v242 = vadd.f32 %v229, %v241
        %s243 = sadd.s32 %s165, 6
        %s244 = sld [smem:[#allocation3 + %s243]]
        %v245 = vstv %s244
        %vm246 = vcmp.eq.s32.totalorder %v135, %v245
        %v247 = vsel %vm246, 1, 0
        %v248 = vcvt.s32.f32 %v247
        %v249 = vadd.f32 %v236, %v248
        %s250 = sld [smem:[#allocation4 + %s243]]
        %v251 = vstv %s250
        %vm252 = vcmp.eq.s32.totalorder %v137, %v251
        %v253 = vsel %vm252, 1, 0
        %v254 = vcvt.s32.f32 %v253
        %v255 = vadd.f32 %v242, %v254
        %s256 = sadd.s32 %s165, 7
        %s257 = sld [smem:[#allocation3 + %s256]]
        %v258 = vstv %s257
        %vm259 = vcmp.eq.s32.totalorder %v135, %v258
        %v260 = vsel %vm259, 1, 0
        %v261 = vcvt.s32.f32 %v260
        %v262 = vadd.f32 %v249, %v261
        %s263 = sld [smem:[#allocation4 + %s256]]
        %v264 = vstv %s263
        %vm265 = vcmp.eq.s32.totalorder %v137, %v264
        %v266 = vsel %vm265, 1, 0
        %v267 = vcvt.s32.f32 %v266
        %v268 = vadd.f32 %v255, %v267
        %s269 = sadd.s32 %s165, 8
        %s270 = sld [smem:[#allocation3 + %s269]]
        %v271 = vstv %s270
        %vm272 = vcmp.eq.s32.totalorder %v135, %v271
        %v273 = vsel %vm272, 1, 0
        %v274 = vcvt.s32.f32 %v273
        %v275 = vadd.f32 %v262, %v274
        %s276 = sld [smem:[#allocation4 + %s269]]
        %v277 = vstv %s276
        %vm278 = vcmp.eq.s32.totalorder %v137, %v277
        %v279 = vsel %vm278, 1, 0
        %v280 = vcvt.s32.f32 %v279
        %v281 = vadd.f32 %v268, %v280
        %s282 = sadd.s32 %s165, 9
        %s283 = sld [smem:[#allocation3 + %s282]]
        %v284 = vstv %s283
        %vm285 = vcmp.eq.s32.totalorder %v135, %v284
        %v286 = vsel %vm285, 1, 0
        %v287 = vcvt.s32.f32 %v286
        %v288 = vadd.f32 %v275, %v287
        %s289 = sld [smem:[#allocation4 + %s282]]
        %v290 = vstv %s289
        %vm291 = vcmp.eq.s32.totalorder %v137, %v290
        %v292 = vsel %vm291, 1, 0
        %v293 = vcvt.s32.f32 %v292
        %v294 = vadd.f32 %v281, %v293
        %s295 = sadd.s32 %s165, 10
        %s296 = sld [smem:[#allocation3 + %s295]]
        %v297 = vstv %s296
        %vm298 = vcmp.eq.s32.totalorder %v135, %v297
        %v299 = vsel %vm298, 1, 0
        %v300 = vcvt.s32.f32 %v299
        %v301 = vadd.f32 %v288, %v300
        %s302 = sld [smem:[#allocation4 + %s295]]
        %v303 = vstv %s302
        %vm304 = vcmp.eq.s32.totalorder %v137, %v303
        %v305 = vsel %vm304, 1, 0
        %v306 = vcvt.s32.f32 %v305
        %v307 = vadd.f32 %v294, %v306
        %s308 = sadd.s32 %s165, 11
        %s309 = sld [smem:[#allocation3 + %s308]]
        %v310 = vstv %s309
        %vm311 = vcmp.eq.s32.totalorder %v135, %v310
        %v312 = vsel %vm311, 1, 0
        %v313 = vcvt.s32.f32 %v312
        %v314 = vadd.f32 %v301, %v313
        %s315 = sld [smem:[#allocation4 + %s308]]
        %v316 = vstv %s315
        %vm317 = vcmp.eq.s32.totalorder %v137, %v316
        %v318 = vsel %vm317, 1, 0
        %v319 = vcvt.s32.f32 %v318
        %v320 = vadd.f32 %v307, %v319
        %s321 = sadd.s32 %s165, 12
        %s322 = sld [smem:[#allocation3 + %s321]]
        %v323 = vstv %s322
        %vm324 = vcmp.eq.s32.totalorder %v135, %v323
        %v325 = vsel %vm324, 1, 0
        %v326 = vcvt.s32.f32 %v325
        %v327 = vadd.f32 %v314, %v326
        %s328 = sld [smem:[#allocation4 + %s321]]
        %v329 = vstv %s328
        %vm330 = vcmp.eq.s32.totalorder %v137, %v329
        %v331 = vsel %vm330, 1, 0
        %v332 = vcvt.s32.f32 %v331
        %v333 = vadd.f32 %v320, %v332
        %s334 = sadd.s32 %s165, 13
        %s335 = sld [smem:[#allocation3 + %s334]]
        %v336 = vstv %s335
        %vm337 = vcmp.eq.s32.totalorder %v135, %v336
        %v338 = vsel %vm337, 1, 0
        %v339 = vcvt.s32.f32 %v338
        %v340 = vadd.f32 %v327, %v339
        %s341 = sld [smem:[#allocation4 + %s334]]
        %v342 = vstv %s341
        %vm343 = vcmp.eq.s32.totalorder %v137, %v342
        %v344 = vsel %vm343, 1, 0
        %v345 = vcvt.s32.f32 %v344
        %v346 = vadd.f32 %v333, %v345
        %s347 = sadd.s32 %s165, 14
        %s348 = sld [smem:[#allocation3 + %s347]]
        %v349 = vstv %s348
        %vm350 = vcmp.eq.s32.totalorder %v135, %v349
        %v351 = vsel %vm350, 1, 0
        %v352 = vcvt.s32.f32 %v351
        %v353 = vadd.f32 %v340, %v352
        %s354 = sld [smem:[#allocation4 + %s347]]
        %v355 = vstv %s354
        %vm356 = vcmp.eq.s32.totalorder %v137, %v355
        %v357 = vsel %vm356, 1, 0
        %v358 = vcvt.s32.f32 %v357
        %v359 = vadd.f32 %v346, %v358
        %s360 = sadd.s32 %s165, 15
        %s361 = sld [smem:[#allocation3 + %s360]]
        %v362 = vstv %s361
        %vm363 = vcmp.eq.s32.totalorder %v135, %v362
        %v364 = vsel %vm363, 1, 0
        %v365 = vcvt.s32.f32 %v364
        %v366 = vadd.f32 %v353, %v365
        %s367 = sld [smem:[#allocation4 + %s360]]
        %v368 = vstv %s367
        %vm369 = vcmp.eq.s32.totalorder %v137, %v368
        %v370 = vsel %vm369, 1, 0
        %v371 = vcvt.s32.f32 %v370
        %v372 = vadd.f32 %v359, %v371
        %v373 = vmul.f32 %v372, %v143
        %vm374 = vcmask 261120
        %v375 = vsel %vm374, %v373, 0.0
        %v376 = vrot.slane %v375, 4
        %v377 = vadd.f32 %v375, %v376
        %v378 = vrot.slane %v377, 2
        %v379 = vadd.f32 %v377, %v378
        %v380 = vrot.slane %v379, 1
        %v381 = vadd.f32 %v379, %v380
        %382 = vmatprep.subr.mxu0 0.0
        %383 = vmatpush1.msra.mxu0 %v144
        %384 = vmatprep.subr.mxu0 0.0
        %385 = vmatpush1.msra.mxu0 %v145
        %386 = vmatprep.subr.mxu0 0.0
        %387 = vmatpush1.msra.mxu0 %v146
        %388 = vmatprep.subr.mxu0 0.0
        %389 = vmatpush1.msra.mxu0 %v147
        %390 = vmatprep.subr.mxu0 0.0
        %391 = vmatpush1.msra.mxu0 %v148
        %392 = vmatprep.subr.mxu0 0.0
        %393 = vmatpush1.msra.mxu0 %v149
        %394 = vmatprep.subr.mxu0 0.0
        %395 = vmatpush1.msra.mxu0 %v150
        %396 = vmatprep.subr.mxu0 0.0
        %397 = vmatpush1.msra.mxu0 %v151
        %398 = vmatprep.subr.mxu0 0.0
        %399 = vmatpush1.msra.mxu0 %v152
        %400 = vmatprep.subr.mxu0 0.0
        %401 = vmatpush1.msra.mxu0 %v153
        %402 = vmatprep.subr.mxu0 0.0
        %403 = vmatpush1.msra.mxu0 %v154
        %404 = vmatprep.subr.mxu0 0.0
        %405 = vmatpush1.msra.mxu0 %v155
        %406 = vmatprep.subr.mxu0 0.0
        %407 = vmatpush1.msra.mxu0 %v156
        %408 = vmatprep.subr.mxu0 0.0
        %409 = vmatpush1.msra.mxu0 %v157
        %410 = vmatprep.subr.mxu0 0.0
        %411 = vmatpush1.msra.mxu0 %v158
        %412 = vmatprep.subr.mxu0 0.0
        %413 = vmatpush1.msra.mxu0 %v159
        %414 = vmatprep.subr.mxu0 0.0
        %415 = vmatpush1.msra.mxu0 0.0
        %416 = vmatprep.subr.mxu0 0.0
        %417 = vmatpush1.msra.mxu0 0.0
        %418 = vmatprep.subr.mxu0 0.0
        %419 = vmatpush1.msra.mxu0 0.0
        %420 = vmatprep.subr.mxu0 0.0
        %421 = vmatpush1.msra.mxu0 0.0
        %422 = vmatprep.subr.mxu0 0.0
        %423 = vmatpush1.msra.mxu0 0.0
        %424 = vmatprep.subr.mxu0 0.0
        %425 = vmatpush1.msra.mxu0 0.0
        %426 = vmatprep.subr.mxu0 0.0
        %427 = vmatpush1.msra.mxu0 0.0
        %428 = vmatprep.subr.mxu0 0.0
        %429 = vmatpush1.msra.mxu0 0.0
        %430 = vmatprep.subr.mxu0 0.0
        %431 = vmatpush1.msra.mxu0 0.0
        %432 = vmatprep.subr.mxu0 0.0
        %433 = vmatpush1.msra.mxu0 0.0
        %434 = vmatprep.subr.mxu0 0.0
        %435 = vmatpush1.msra.mxu0 0.0
        %436 = vmatprep.subr.mxu0 0.0
        %437 = vmatpush1.msra.mxu0 0.0
        %438 = vmatprep.subr.mxu0 0.0
        %439 = vmatpush1.msra.mxu0 0.0
        %440 = vmatprep.subr.mxu0 0.0
        %441 = vmatpush1.msra.mxu0 0.0
        %442 = vmatprep.subr.mxu0 0.0
        %443 = vmatpush1.msra.mxu0 0.0
        %444 = vmatprep.subr.mxu0 0.0
        %445 = vmatpush1.msra.mxu0 0.0
        %446 = vmatprep.mubr.f32.mxu0 0.0
        %447 = vmatmul.mubr.f32.gmra.mrb[0].mxu0 %v366
        %v448 = vpop.f32.mrb[0].mxu0
        %v449 = vadd.f32 %v381, %v448
        %v450 = vpop.f32.mrb[0].mxu0
        %451 = vdwg.mxu0
        %v452 = vmul.f32 %v449, 0.0625
        %vm453 = vcmp.eq.s32.totalorder %v135, 1
        %v454 = vsel %vm453, 1, 0
        %v455 = vcvt.s32.f32 %v454
        %vm456 = vcmp.eq.s32.totalorder %v137, 0
        %v457 = vsel %vm456, 1, 0
        %v458 = vcvt.s32.f32 %v457
        %v459 = vmul.f32 %v458, %v143
        %v460 = vsel %vm374, %v459, 0.0
        %v461 = vrot.slane %v460, 4
        %v462 = vadd.f32 %v460, %v461
        %v463 = vrot.slane %v462, 2
        %v464 = vadd.f32 %v462, %v463
        %v465 = vrot.slane %v464, 1
        %v466 = vadd.f32 %v464, %v465
        %467 = vmatprep.subr.mxu0 0.0
        %468 = vmatpush1.msra.mxu0 %v144
        %469 = vmatprep.subr.mxu0 0.0
        %470 = vmatpush1.msra.mxu0 %v145
        %471 = vmatprep.subr.mxu0 0.0
        %472 = vmatpush1.msra.mxu0 %v146
        %473 = vmatprep.subr.mxu0 0.0
        %474 = vmatpush1.msra.mxu0 %v147
        %475 = vmatprep.subr.mxu0 0.0
        %476 = vmatpush1.msra.mxu0 %v148
        %477 = vmatprep.subr.mxu0 0.0
        %478 = vmatpush1.msra.mxu0 %v149
        %479 = vmatprep.subr.mxu0 0.0
        %480 = vmatpush1.msra.mxu0 %v150
        %481 = vmatprep.subr.mxu0 0.0
        %482 = vmatpush1.msra.mxu0 %v151
        %483 = vmatprep.subr.mxu0 0.0
        %484 = vmatpush1.msra.mxu0 %v152
        %485 = vmatprep.subr.mxu0 0.0
        %486 = vmatpush1.msra.mxu0 %v153
        %487 = vmatprep.subr.mxu0 0.0
        %488 = vmatpush1.msra.mxu0 %v154
        %489 = vmatprep.subr.mxu0 0.0
        %490 = vmatpush1.msra.mxu0 %v155
        %491 = vmatprep.subr.mxu0 0.0
        %492 = vmatpush1.msra.mxu0 %v156
        %493 = vmatprep.subr.mxu0 0.0
        %494 = vmatpush1.msra.mxu0 %v157
        %495 = vmatprep.subr.mxu0 0.0
        %496 = vmatpush1.msra.mxu0 %v158
        %497 = vmatprep.subr.mxu0 0.0
        %498 = vmatpush1.msra.mxu0 %v159
        %499 = vmatprep.subr.mxu0 0.0
        %500 = vmatpush1.msra.mxu0 0.0
        %501 = vmatprep.subr.mxu0 0.0
        %502 = vmatpush1.msra.mxu0 0.0
        %503 = vmatprep.subr.mxu0 0.0
        %504 = vmatpush1.msra.mxu0 0.0
        %505 = vmatprep.subr.mxu0 0.0
        %506 = vmatpush1.msra.mxu0 0.0
        %507 = vmatprep.subr.mxu0 0.0
        %508 = vmatpush1.msra.mxu0 0.0
        %509 = vmatprep.subr.mxu0 0.0
        %510 = vmatpush1.msra.mxu0 0.0
        %511 = vmatprep.subr.mxu0 0.0
        %512 = vmatpush1.msra.mxu0 0.0
        %513 = vmatprep.subr.mxu0 0.0
        %514 = vmatpush1.msra.mxu0 0.0
        %515 = vmatprep.subr.mxu0 0.0
        %516 = vmatpush1.msra.mxu0 0.0
        %517 = vmatprep.subr.mxu0 0.0
        %518 = vmatpush1.msra.mxu0 0.0
        %519 = vmatprep.subr.mxu0 0.0
        %520 = vmatpush1.msra.mxu0 0.0
        %521 = vmatprep.subr.mxu0 0.0
        %522 = vmatpush1.msra.mxu0 0.0
        %523 = vmatprep.subr.mxu0 0.0
        %524 = vmatpush1.msra.mxu0 0.0
        %525 = vmatprep.subr.mxu0 0.0
        %526 = vmatpush1.msra.mxu0 0.0
        %527 = vmatprep.subr.mxu0 0.0
        %528 = vmatpush1.msra.mxu0 0.0
        %529 = vmatprep.subr.mxu0 0.0
        %530 = vmatpush1.msra.mxu0 0.0
        %531 = vmatprep.mubr.f32.mxu0 0.0
        %532 = vmatmul.mubr.f32.gmra.mrb[0].mxu0 %v455
        %v533 = vpop.f32.mrb[0].mxu0
        %v534 = vadd.f32 %v466, %v533
        %v535 = vpop.f32.mrb[0].mxu0
        %536 = vdwg.mxu0
        %v537 = vadd.f32 %v534, %v452
        %v539 = vsel %vm374, %v537, 0
        %541 = vmatprep.subr.mxu0 0.0
        %542 = vmatpush1.msra.mxu0 %v138
        %543 = vmatprep.subr.mxu0 0.0
        %544 = vmatpush1.msra.mxu0 %v139
        %545 = vmatprep.subr.mxu0 0.0
        %546 = vmatpush1.msra.mxu0 %v140
        %547 = vmatprep.subr.mxu0 0.0
        %548 = vmatpush1.msra.mxu0 %v141
        %549 = vmatprep.subr.mxu0 0.0
        %550 = vmatpush1.msra.mxu0 0.0
        %551 = vmatprep.subr.mxu0 0.0
        %552 = vmatpush1.msra.mxu0 0.0
        %553 = vmatprep.subr.mxu0 0.0
        %554 = vmatpush1.msra.mxu0 0.0
        %555 = vmatprep.subr.mxu0 0.0
        %556 = vmatpush1.msra.mxu0 0.0
        %557 = vmatprep.subr.mxu0 0.0
        %558 = vmatpush1.msra.mxu0 0.0
        %559 = vmatprep.subr.mxu0 0.0
        %560 = vmatpush1.msra.mxu0 0.0
        %561 = vmatprep.subr.mxu0 0.0
        %562 = vmatpush1.msra.mxu0 0.0
        %563 = vmatprep.subr.mxu0 0.0
        %564 = vmatpush1.msra.mxu0 0.0
        %565 = vmatprep.subr.mxu0 0.0
        %566 = vmatpush1.msra.mxu0 0.0
        %567 = vmatprep.subr.mxu0 0.0
        %568 = vmatpush1.msra.mxu0 0.0
        %569 = vmatprep.subr.mxu0 0.0
        %570 = vmatpush1.msra.mxu0 0.0
        %571 = vmatprep.subr.mxu0 0.0
        %572 = vmatpush1.msra.mxu0 0.0
        %573 = vmatprep.subr.mxu0 0.0
        %574 = vmatpush1.msra.mxu0 0.0
        %575 = vmatprep.subr.mxu0 0.0
        %576 = vmatpush1.msra.mxu0 0.0
        %577 = vmatprep.subr.mxu0 0.0
        %578 = vmatpush1.msra.mxu0 0.0
        %579 = vmatprep.subr.mxu0 0.0
        %580 = vmatpush1.msra.mxu0 0.0
        %581 = vmatprep.subr.mxu0 0.0
        %582 = vmatpush1.msra.mxu0 0.0
        %583 = vmatprep.subr.mxu0 0.0
        %584 = vmatpush1.msra.mxu0 0.0
        %585 = vmatprep.subr.mxu0 0.0
        %586 = vmatpush1.msra.mxu0 0.0
        %587 = vmatprep.subr.mxu0 0.0
        %588 = vmatpush1.msra.mxu0 0.0
        %589 = vmatprep.subr.mxu0 0.0
        %590 = vmatpush1.msra.mxu0 0.0
        %591 = vmatprep.subr.mxu0 0.0
        %592 = vmatpush1.msra.mxu0 0.0
        %593 = vmatprep.subr.mxu0 0.0
        %594 = vmatpush1.msra.mxu0 0.0
        %595 = vmatprep.subr.mxu0 0.0
        %596 = vmatpush1.msra.mxu0 0.0
        %597 = vmatprep.subr.mxu0 0.0
        %598 = vmatpush1.msra.mxu0 0.0
        %599 = vmatprep.subr.mxu0 0.0
        %600 = vmatpush1.msra.mxu0 0.0
        %601 = vmatprep.subr.mxu0 0.0
        %602 = vmatpush1.msra.mxu0 0.0
        %603 = vmatprep.subr.mxu0 0.0
        %604 = vmatpush1.msra.mxu0 0.0
        %605 = vmatprep.mubr.f32.mxu0 0.0
        %606 = vmatmul.mubr.f32.gmra.mrb[0].mxu0 %v539
        %v607 = vpop.f32.mrb[0].mxu0
        %v608 = vadd.f32 %v142, %v607
        %v609 = vpop.f32.mrb[0].mxu0
        %610 = vdwg.mxu0
        %v611 = vtanh.pop %v608
        %v613 = vsel %vm374, %v611, 0
        %615 = vmatprep.subr.mxu0 0.0
        %616 = vmatpush1.msra.mxu0 %v160
        %617 = vmatprep.subr.mxu0 0.0
        %618 = vmatpush1.msra.mxu0 %v161
        %619 = vmatprep.subr.mxu0 0.0
        %620 = vmatpush1.msra.mxu0 %v162
        %621 = vmatprep.subr.mxu0 0.0
        %622 = vmatpush1.msra.mxu0 %v163
        %623 = vmatprep.subr.mxu0 0.0
        %624 = vmatpush1.msra.mxu0 0.0
        %625 = vmatprep.subr.mxu0 0.0
        %626 = vmatpush1.msra.mxu0 0.0
        %627 = vmatprep.subr.mxu0 0.0
        %628 = vmatpush1.msra.mxu0 0.0
        %629 = vmatprep.subr.mxu0 0.0
        %630 = vmatpush1.msra.mxu0 0.0
        %631 = vmatprep.subr.mxu0 0.0
        %632 = vmatpush1.msra.mxu0 0.0
        %633 = vmatprep.subr.mxu0 0.0
        %634 = vmatpush1.msra.mxu0 0.0
        %635 = vmatprep.subr.mxu0 0.0
        %636 = vmatpush1.msra.mxu0 0.0
        %637 = vmatprep.subr.mxu0 0.0
        %638 = vmatpush1.msra.mxu0 0.0
        %639 = vmatprep.subr.mxu0 0.0
        %640 = vmatpush1.msra.mxu0 0.0
        %641 = vmatprep.subr.mxu0 0.0
        %642 = vmatpush1.msra.mxu0 0.0
        %643 = vmatprep.subr.mxu0 0.0
        %644 = vmatpush1.msra.mxu0 0.0
        %645 = vmatprep.subr.mxu0 0.0
        %646 = vmatpush1.msra.mxu0 0.0
        %647 = vmatprep.subr.mxu0 0.0
        %648 = vmatpush1.msra.mxu0 0.0
        %649 = vmatprep.subr.mxu0 0.0
        %650 = vmatpush1.msra.mxu0 0.0
        %651 = vmatprep.subr.mxu0 0.0
        %652 = vmatpush1.msra.mxu0 0.0
        %653 = vmatprep.subr.mxu0 0.0
        %654 = vmatpush1.msra.mxu0 0.0
        %655 = vmatprep.subr.mxu0 0.0
        %656 = vmatpush1.msra.mxu0 0.0
        %657 = vmatprep.subr.mxu0 0.0
        %658 = vmatpush1.msra.mxu0 0.0
        %659 = vmatprep.subr.mxu0 0.0
        %660 = vmatpush1.msra.mxu0 0.0
        %661 = vmatprep.subr.mxu0 0.0
        %662 = vmatpush1.msra.mxu0 0.0
        %663 = vmatprep.subr.mxu0 0.0
        %664 = vmatpush1.msra.mxu0 0.0
        %665 = vmatprep.subr.mxu0 0.0
        %666 = vmatpush1.msra.mxu0 0.0
        %667 = vmatprep.subr.mxu0 0.0
        %668 = vmatpush1.msra.mxu0 0.0
        %669 = vmatprep.subr.mxu0 0.0
        %670 = vmatpush1.msra.mxu0 0.0
        %671 = vmatprep.subr.mxu0 0.0
        %672 = vmatpush1.msra.mxu0 0.0
        %673 = vmatprep.subr.mxu0 0.0
        %674 = vmatpush1.msra.mxu0 0.0
        %675 = vmatprep.subr.mxu0 0.0
        %676 = vmatpush1.msra.mxu0 0.0
        %677 = vmatprep.subr.mxu0 0.0
        %678 = vmatpush1.msra.mxu0 0.0
        %679 = vmatprep.mubr.f32.mxu0 0.0
        %680 = vmatmul.mubr.f32.gmra.mrb[0].mxu0 %v613
        %v681 = vpop.f32.mrb[0].mxu0
        %v682 = vadd.f32 %v164, %v681
        %v683 = vpop.f32.mrb[0].mxu0
        %684 = vdwg.mxu0
        %vm685 = vcmask 1040384
        %v686 = vsel %vm685, %v682, -inf
        %687 = vmax.xlane.f32.xlu0 %v686
        %v688 = vpop.xlane.xlu0 %687
        %v689 = vsub.f32 %v682, %v688
        %v690 = vmul.f32 %v689, 1.442695
        %v691 = vpow.pop %v690
        %v692 = vsel %vm685, %v691, 0.0
        %693 = vadd.xlane.f32.xlu0 %v692
        %v694 = vpop.xlane.xlu0 %693
        %v695 = vlog2.pop %v694
        %v696 = vmul.f32 %v695, 0.6931472
        %v697 = vadd.f32 %v696, %v688
        %v698 = vsub.f32 %v682, %v697
        %699 = vst [vmem:[%s133] sm:$0x1] %v698
        %v700 = vsub.f32 %v688, %v697
        %vm701 = vcmp.eq.f32.partialorder %v698, %v700
        %v702 = vsel %vm701, %v135, 2147483647
        %v703 = vsel %vm685, %v702, 2147483647
        %v704 = vand.u32 %v703, 65535
        %v705 = vshra.s32 %v703, 16
        %v706 = vcvt.s32.f32 %v704
        %v707 = vcvt.s32.f32 %v705
        %708 = vmin.xlane.f32.xlu0 %v707
        %v709 = vpop.xlane.xlu0 %708
        %vm710 = vcmp.eq.f32.partialorder %v707, %v709
        %v711 = vsel %vm710, %v706, inf
        %712 = vmin.xlane.f32.xlu0 %v711
        %v713 = vpop.xlane.xlu0 %712
        %v714 = vcvt.f32.s32 %v713
        %v715 = vcvt.f32.s32 %v709
        %v716 = vshll.u32 %v715, 16
        %v717 = vadd.s32 %v716, %v714
        %vm718 = vcmp.eq.s32.totalorder %v135, %v717
        %v719 = vsel %vm718, 1, 0
        %v720 = vcvt.s32.f32 %v719
        %vm721 = vcmp.eq.s32.totalorder %v717, 4
        %vm722 = vcmp.eq.s32.totalorder %v717, 5
        %vm723 = vmor %vm721, %vm722
        %vm724 = vcmp.eq.s32.totalorder %v717, 6
        %vm725 = vmor %vm723, %vm724
        %v726 = vsel %vm725, 1, 0
        %vm727 = vcmp.lt.s32.totalorder %v726, 7
        %v728 = vsel %vm727, %v726, 7
        %v729 = vlaneseq
        %v730 = vshrl.u32 %v729, 7
        %v731 = vsub.s32 0, %v730
        %v732 = vrot.slane %v728, %v731
        %vm733 = vcmp.eq.s32.totalorder %v137, %v732
        %v734 = vsel %vm733, 1, 0
        %v735 = vcvt.s32.f32 %v734
        %v736 = vmul.f32 %v735, %v143
        %v737 = vsel %vm374, %v736, 0.0
        %v738 = vrot.slane %v737, 4
        %v739 = vadd.f32 %v737, %v738
        %v740 = vrot.slane %v739, 2
        %v741 = vadd.f32 %v739, %v740
        %v742 = vrot.slane %v741, 1
        %v743 = vadd.f32 %v741, %v742
        %744 = vmatprep.subr.mxu0 0.0
        %745 = vmatpush1.msra.mxu0 %v144
        %746 = vmatprep.subr.mxu0 0.0
        %747 = vmatpush1.msra.mxu0 %v145
        %748 = vmatprep.subr.mxu0 0.0
        %749 = vmatpush1.msra.mxu0 %v146
        %750 = vmatprep.subr.mxu0 0.0
        %751 = vmatpush1.msra.mxu0 %v147
        %752 = vmatprep.subr.mxu0 0.0
        %753 = vmatpush1.msra.mxu0 %v148
        %754 = vmatprep.subr.mxu0 0.0
        %755 = vmatpush1.msra.mxu0 %v149
        %756 = vmatprep.subr.mxu0 0.0
        %757 = vmatpush1.msra.mxu0 %v150
        %758 = vmatprep.subr.mxu0 0.0
        %759 = vmatpush1.msra.mxu0 %v151
        %760 = vmatprep.subr.mxu0 0.0
        %761 = vmatpush1.msra.mxu0 %v152
        %762 = vmatprep.subr.mxu0 0.0
        %763 = vmatpush1.msra.mxu0 %v153
        %764 = vmatprep.subr.mxu0 0.0
        %765 = vmatpush1.msra.mxu0 %v154
        %766 = vmatprep.subr.mxu0 0.0
        %767 = vmatpush1.msra.mxu0 %v155
        %768 = vmatprep.subr.mxu0 0.0
        %769 = vmatpush1.msra.mxu0 %v156
        %770 = vmatprep.subr.mxu0 0.0
        %771 = vmatpush1.msra.mxu0 %v157
        %772 = vmatprep.subr.mxu0 0.0
        %773 = vmatpush1.msra.mxu0 %v158
        %774 = vmatprep.subr.mxu0 0.0
        %775 = vmatpush1.msra.mxu0 %v159
        %776 = vmatprep.subr.mxu0 0.0
        %777 = vmatpush1.msra.mxu0 0.0
        %778 = vmatprep.subr.mxu0 0.0
        %779 = vmatpush1.msra.mxu0 0.0
        %780 = vmatprep.subr.mxu0 0.0
        %781 = vmatpush1.msra.mxu0 0.0
        %782 = vmatprep.subr.mxu0 0.0
        %783 = vmatpush1.msra.mxu0 0.0
        %784 = vmatprep.subr.mxu0 0.0
        %785 = vmatpush1.msra.mxu0 0.0
        %786 = vmatprep.subr.mxu0 0.0
        %787 = vmatpush1.msra.mxu0 0.0
        %788 = vmatprep.subr.mxu0 0.0
        %789 = vmatpush1.msra.mxu0 0.0
        %790 = vmatprep.subr.mxu0 0.0
        %791 = vmatpush1.msra.mxu0 0.0
        %792 = vmatprep.subr.mxu0 0.0
        %793 = vmatpush1.msra.mxu0 0.0
        %794 = vmatprep.subr.mxu0 0.0
        %795 = vmatpush1.msra.mxu0 0.0
        %796 = vmatprep.subr.mxu0 0.0
        %797 = vmatpush1.msra.mxu0 0.0
        %798 = vmatprep.subr.mxu0 0.0
        %799 = vmatpush1.msra.mxu0 0.0
        %800 = vmatprep.subr.mxu0 0.0
        %801 = vmatpush1.msra.mxu0 0.0
        %802 = vmatprep.subr.mxu0 0.0
        %803 = vmatpush1.msra.mxu0 0.0
        %804 = vmatprep.subr.mxu0 0.0
        %805 = vmatpush1.msra.mxu0 0.0
        %806 = vmatprep.subr.mxu0 0.0
        %807 = vmatpush1.msra.mxu0 0.0
        %808 = vmatprep.mubr.f32.mxu0 0.0
        %809 = vmatmul.mubr.f32.gmra.mrb[0].mxu0 %v720
        %v810 = vpop.f32.mrb[0].mxu0
        %v811 = vadd.f32 %v743, %v810
        %v812 = vpop.f32.mrb[0].mxu0
        %813 = vdwg.mxu0
        %v814 = vadd.f32 %v811, %v452
        %v816 = vsel %vm374, %v814, 0
        %818 = vmatprep.subr.mxu0 0.0
        %819 = vmatpush1.msra.mxu0 %v138
        %820 = vmatprep.subr.mxu0 0.0
        %821 = vmatpush1.msra.mxu0 %v139
        %822 = vmatprep.subr.mxu0 0.0
        %823 = vmatpush1.msra.mxu0 %v140
        %824 = vmatprep.subr.mxu0 0.0
        %825 = vmatpush1.msra.mxu0 %v141
        %826 = vmatprep.subr.mxu0 0.0
        %827 = vmatpush1.msra.mxu0 0.0
        %828 = vmatprep.subr.mxu0 0.0
        %829 = vmatpush1.msra.mxu0 0.0
        %830 = vmatprep.subr.mxu0 0.0
        %831 = vmatpush1.msra.mxu0 0.0
        %832 = vmatprep.subr.mxu0 0.0
        %833 = vmatpush1.msra.mxu0 0.0
        %834 = vmatprep.subr.mxu0 0.0
        %835 = vmatpush1.msra.mxu0 0.0
        %836 = vmatprep.subr.mxu0 0.0
        %837 = vmatpush1.msra.mxu0 0.0
        %838 = vmatprep.subr.mxu0 0.0
        %839 = vmatpush1.msra.mxu0 0.0
        %840 = vmatprep.subr.mxu0 0.0
        %841 = vmatpush1.msra.mxu0 0.0
        %842 = vmatprep.subr.mxu0 0.0
        %843 = vmatpush1.msra.mxu0 0.0
        %844 = vmatprep.subr.mxu0 0.0
        %845 = vmatpush1.msra.mxu0 0.0
        %846 = vmatprep.subr.mxu0 0.0
        %847 = vmatpush1.msra.mxu0 0.0
        %848 = vmatprep.subr.mxu0 0.0
        %849 = vmatpush1.msra.mxu0 0.0
        %850 = vmatprep.subr.mxu0 0.0
        %851 = vmatpush1.msra.mxu0 0.0
        %852 = vmatprep.subr.mxu0 0.0
        %853 = vmatpush1.msra.mxu0 0.0
        %854 = vmatprep.subr.mxu0 0.0
        %855 = vmatpush1.msra.mxu0 0.0
        %856 = vmatprep.subr.mxu0 0.0
        %857 = vmatpush1.msra.mxu0 0.0
        %858 = vmatprep.subr.mxu0 0.0
        %859 = vmatpush1.msra.mxu0 0.0
        %860 = vmatprep.subr.mxu0 0.0
        %861 = vmatpush1.msra.mxu0 0.0
        %862 = vmatprep.subr.mxu0 0.0
        %863 = vmatpush1.msra.mxu0 0.0
        %864 = vmatprep.subr.mxu0 0.0
        %865 = vmatpush1.msra.mxu0 0.0
        %866 = vmatprep.subr.mxu0 0.0
        %867 = vmatpush1.msra.mxu0 0.0
        %868 = vmatprep.subr.mxu0 0.0
        %869 = vmatpush1.msra.mxu0 0.0
        %870 = vmatprep.subr.mxu0 0.0
        %871 = vmatpush1.msra.mxu0 0.0
        %872 = vmatprep.subr.mxu0 0.0
        %873 = vmatpush1.msra.mxu0 0.0
        %874 = vmatprep.subr.mxu0 0.0
        %875 = vmatpush1.msra.mxu0 0.0
        %876 = vmatprep.subr.mxu0 0.0
        %877 = vmatpush1.msra.mxu0 0.0
        %878 = vmatprep.subr.mxu0 0.0
        %879 = vmatpush1.msra.mxu0 0.0
        %880 = vmatprep.subr.mxu0 0.0
        %881 = vmatpush1.msra.mxu0 0.0
        %882 = vmatprep.mubr.f32.mxu0 0.0
        %883 = vmatmul.mubr.f32.gmra.mrb[0].mxu0 %v816
        %v884 = vpop.f32.mrb[0].mxu0
        %v885 = vadd.f32 %v142, %v884
        %v886 = vpop.f32.mrb[0].mxu0
        %887 = vdwg.mxu0
        %v888 = vtanh.pop %v885
        %v890 = vsel %vm374, %v888, 0
        %892 = vmatprep.subr.mxu0 0.0
        %893 = vmatpush1.msra.mxu0 %v160
        %894 = vmatprep.subr.mxu0 0.0
        %895 = vmatpush1.msra.mxu0 %v161
        %896 = vmatprep.subr.mxu0 0.0
        %897 = vmatpush1.msra.mxu0 %v162
        %898 = vmatprep.subr.mxu0 0.0
        %899 = vmatpush1.msra.mxu0 %v163
        %900 = vmatprep.subr.mxu0 0.0
        %901 = vmatpush1.msra.mxu0 0.0
        %902 = vmatprep.subr.mxu0 0.0
        %903 = vmatpush1.msra.mxu0 0.0
        %904 = vmatprep.subr.mxu0 0.0
        %905 = vmatpush1.msra.mxu0 0.0
        %906 = vmatprep.subr.mxu0 0.0
        %907 = vmatpush1.msra.mxu0 0.0
        %908 = vmatprep.subr.mxu0 0.0
        %909 = vmatpush1.msra.mxu0 0.0
        %910 = vmatprep.subr.mxu0 0.0
        %911 = vmatpush1.msra.mxu0 0.0
        %912 = vmatprep.subr.mxu0 0.0
        %913 = vmatpush1.msra.mxu0 0.0
        %914 = vmatprep.subr.mxu0 0.0
        %915 = vmatpush1.msra.mxu0 0.0
        %916 = vmatprep.subr.mxu0 0.0
        %917 = vmatpush1.msra.mxu0 0.0
        %918 = vmatprep.subr.mxu0 0.0
        %919 = vmatpush1.msra.mxu0 0.0
        %920 = vmatprep.subr.mxu0 0.0
        %921 = vmatpush1.msra.mxu0 0.0
        %922 = vmatprep.subr.mxu0 0.0
        %923 = vmatpush1.msra.mxu0 0.0
        %924 = vmatprep.subr.mxu0 0.0
        %925 = vmatpush1.msra.mxu0 0.0
        %926 = vmatprep.subr.mxu0 0.0
        %927 = vmatpush1.msra.mxu0 0.0
        %928 = vmatprep.subr.mxu0 0.0
        %929 = vmatpush1.msra.mxu0 0.0
        %930 = vmatprep.subr.mxu0 0.0
        %931 = vmatpush1.msra.mxu0 0.0
        %932 = vmatprep.subr.mxu0 0.0
        %933 = vmatpush1.msra.mxu0 0.0
        %934 = vmatprep.subr.mxu0 0.0
        %935 = vmatpush1.msra.mxu0 0.0
        %936 = vmatprep.subr.mxu0 0.0
        %937 = vmatpush1.msra.mxu0 0.0
        %938 = vmatprep.subr.mxu0 0.0
        %939 = vmatpush1.msra.mxu0 0.0
        %940 = vmatprep.subr.mxu0 0.0
        %941 = vmatpush1.msra.mxu0 0.0
        %942 = vmatprep.subr.mxu0 0.0
        %943 = vmatpush1.msra.mxu0 0.0
        %944 = vmatprep.subr.mxu0 0.0
        %945 = vmatpush1.msra.mxu0 0.0
        %946 = vmatprep.subr.mxu0 0.0
        %947 = vmatpush1.msra.mxu0 0.0
        %948 = vmatprep.subr.mxu0 0.0
        %949 = vmatpush1.msra.mxu0 0.0
        %950 = vmatprep.subr.mxu0 0.0
        %951 = vmatpush1.msra.mxu0 0.0
        %952 = vmatprep.subr.mxu0 0.0
        %953 = vmatpush1.msra.mxu0 0.0
        %954 = vmatprep.subr.mxu0 0.0
        %955 = vmatpush1.msra.mxu0 0.0
        %956 = vmatprep.mubr.f32.mxu0 0.0
        %957 = vmatmul.mubr.f32.gmra.mrb[0].mxu0 %v890
        %v958 = vpop.f32.mrb[0].mxu0
        %v959 = vadd.f32 %v164, %v958
        %v960 = vpop.f32.mrb[0].mxu0
        %961 = vdwg.mxu0
        %v962 = vsel %vm685, %v959, -inf
        %963 = vmax.xlane.f32.xlu0 %v962
        %v964 = vpop.xlane.xlu0 %963
        %v965 = vsub.f32 %v959, %v964
        %v966 = vmul.f32 %v965, 1.442695
        %v967 = vpow.pop %v966
        %v968 = vsel %vm685, %v967, 0.0
        %969 = vadd.xlane.f32.xlu0 %v968
        %v970 = vpop.xlane.xlu0 %969
        %v971 = vlog2.pop %v970
        %v972 = vmul.f32 %v971, 0.6931472
        %v973 = vadd.f32 %v972, %v964
        %v974 = vsub.f32 %v959, %v973
        %975 = vst [vmem:[%s133 + $0x1] sm:$0x1] %v974
        %v976 = vsub.f32 %v964, %v973
        %vm977 = vcmp.eq.f32.partialorder %v974, %v976
        %v978 = vsel %vm977, %v135, 2147483647
        %v979 = vsel %vm685, %v978, 2147483647
        %v980 = vand.u32 %v979, 65535
        %v981 = vshra.s32 %v979, 16
        %v982 = vcvt.s32.f32 %v980
        %v983 = vcvt.s32.f32 %v981
        %984 = vmin.xlane.f32.xlu0 %v983
        %v985 = vpop.xlane.xlu0 %984
        %vm986 = vcmp.eq.f32.partialorder %v983, %v985
        %v987 = vsel %vm986, %v982, inf
        %988 = vmin.xlane.f32.xlu0 %v987
        %v989 = vpop.xlane.xlu0 %988
        %v990 = vcvt.f32.s32 %v989
        %v991 = vcvt.f32.s32 %v985
        %v992 = vshll.u32 %v991, 16
        %v993 = vadd.s32 %v992, %v990
        %vm994 = vcmp.eq.s32.totalorder %v135, %v993
        %v995 = vsel %vm994, 1, 0
        %v996 = vcvt.s32.f32 %v995
        %vm997 = vcmp.eq.s32.totalorder %v993, 4
        %vm998 = vcmp.eq.s32.totalorder %v993, 5
        %vm999 = vmor %vm997, %vm998
        %vm1000 = vcmp.eq.s32.totalorder %v993, 6
        %vm1001 = vmor %vm999, %vm1000
        %vm1002 = vcmp.lt.s32.totalorder %v726, 3
        %vm1003 = vmand %vm1001, %vm1002
        %v1004 = vadd.s32 %v726, 1
        %v1005 = vsel %vm1003, %v1004, %v726
        %vm1006 = vcmp.lt.s32.totalorder %v1005, 7
        %v1007 = vsel %vm1006, %v1005, 7
        %v1008 = vlaneseq
        %v1009 = vshrl.u32 %v1008, 7
        %v1010 = vsub.s32 0, %v1009
        %v1011 = vrot.slane %v1007, %v1010
        %vm1012 = vcmp.eq.s32.totalorder %v137, %v1011
        %v1013 = vsel %vm1012, 1, 0
        %v1014 = vcvt.s32.f32 %v1013
        %v1015 = vmul.f32 %v1014, %v143
        %v1016 = vsel %vm374, %v1015, 0.0
        %v1017 = vrot.slane %v1016, 4
        %v1018 = vadd.f32 %v1016, %v1017
        %v1019 = vrot.slane %v1018, 2
        %v1020 = vadd.f32 %v1018, %v1019
        %v1021 = vrot.slane %v1020, 1
        %v1022 = vadd.f32 %v1020, %v1021
        %1023 = vmatprep.subr.mxu0 0.0
        %1024 = vmatpush1.msra.mxu0 %v144
        %1025 = vmatprep.subr.mxu0 0.0
        %1026 = vmatpush1.msra.mxu0 %v145
        %1027 = vmatprep.subr.mxu0 0.0
        %1028 = vmatpush1.msra.mxu0 %v146
        %1029 = vmatprep.subr.mxu0 0.0
        %1030 = vmatpush1.msra.mxu0 %v147
        %1031 = vmatprep.subr.mxu0 0.0
        %1032 = vmatpush1.msra.mxu0 %v148
        %1033 = vmatprep.subr.mxu0 0.0
        %1034 = vmatpush1.msra.mxu0 %v149
        %1035 = vmatprep.subr.mxu0 0.0
        %1036 = vmatpush1.msra.mxu0 %v150
        %1037 = vmatprep.subr.mxu0 0.0
        %1038 = vmatpush1.msra.mxu0 %v151
        %1039 = vmatprep.subr.mxu0 0.0
        %1040 = vmatpush1.msra.mxu0 %v152
        %1041 = vmatprep.subr.mxu0 0.0
        %1042 = vmatpush1.msra.mxu0 %v153
        %1043 = vmatprep.subr.mxu0 0.0
        %1044 = vmatpush1.msra.mxu0 %v154
        %1045 = vmatprep.subr.mxu0 0.0
        %1046 = vmatpush1.msra.mxu0 %v155
        %1047 = vmatprep.subr.mxu0 0.0
        %1048 = vmatpush1.msra.mxu0 %v156
        %1049 = vmatprep.subr.mxu0 0.0
        %1050 = vmatpush1.msra.mxu0 %v157
        %1051 = vmatprep.subr.mxu0 0.0
        %1052 = vmatpush1.msra.mxu0 %v158
        %1053 = vmatprep.subr.mxu0 0.0
        %1054 = vmatpush1.msra.mxu0 %v159
        %1055 = vmatprep.subr.mxu0 0.0
        %1056 = vmatpush1.msra.mxu0 0.0
        %1057 = vmatprep.subr.mxu0 0.0
        %1058 = vmatpush1.msra.mxu0 0.0
        %1059 = vmatprep.subr.mxu0 0.0
        %1060 = vmatpush1.msra.mxu0 0.0
        %1061 = vmatprep.subr.mxu0 0.0
        %1062 = vmatpush1.msra.mxu0 0.0
        %1063 = vmatprep.subr.mxu0 0.0
        %1064 = vmatpush1.msra.mxu0 0.0
        %1065 = vmatprep.subr.mxu0 0.0
        %1066 = vmatpush1.msra.mxu0 0.0
        %1067 = vmatprep.subr.mxu0 0.0
        %1068 = vmatpush1.msra.mxu0 0.0
        %1069 = vmatprep.subr.mxu0 0.0
        %1070 = vmatpush1.msra.mxu0 0.0
        %1071 = vmatprep.subr.mxu0 0.0
        %1072 = vmatpush1.msra.mxu0 0.0
        %1073 = vmatprep.subr.mxu0 0.0
        %1074 = vmatpush1.msra.mxu0 0.0
        %1075 = vmatprep.subr.mxu0 0.0
        %1076 = vmatpush1.msra.mxu0 0.0
        %1077 = vmatprep.subr.mxu0 0.0
        %1078 = vmatpush1.msra.mxu0 0.0
        %1079 = vmatprep.subr.mxu0 0.0
        %1080 = vmatpush1.msra.mxu0 0.0
        %1081 = vmatprep.subr.mxu0 0.0
        %1082 = vmatpush1.msra.mxu0 0.0
        %1083 = vmatprep.subr.mxu0 0.0
        %1084 = vmatpush1.msra.mxu0 0.0
        %1085 = vmatprep.subr.mxu0 0.0
        %1086 = vmatpush1.msra.mxu0 0.0
        %1087 = vmatprep.mubr.f32.mxu0 0.0
        %1088 = vmatmul.mubr.f32.gmra.mrb[0].mxu0 %v996
        %v1089 = vpop.f32.mrb[0].mxu0
        %v1090 = vadd.f32 %v1022, %v1089
        %v1091 = vpop.f32.mrb[0].mxu0
        %1092 = vdwg.mxu0
        %v1093 = vadd.f32 %v1090, %v452
        %v1095 = vsel %vm374, %v1093, 0
        %1097 = vmatprep.subr.mxu0 0.0
        %1098 = vmatpush1.msra.mxu0 %v138
        %1099 = vmatprep.subr.mxu0 0.0
        %1100 = vmatpush1.msra.mxu0 %v139
        %1101 = vmatprep.subr.mxu0 0.0
        %1102 = vmatpush1.msra.mxu0 %v140
        %1103 = vmatprep.subr.mxu0 0.0
        %1104 = vmatpush1.msra.mxu0 %v141
        %1105 = vmatprep.subr.mxu0 0.0
        %1106 = vmatpush1.msra.mxu0 0.0
        %1107 = vmatprep.subr.mxu0 0.0
        %1108 = vmatpush1.msra.mxu0 0.0
        %1109 = vmatprep.subr.mxu0 0.0
        %1110 = vmatpush1.msra.mxu0 0.0
        %1111 = vmatprep.subr.mxu0 0.0
        %1112 = vmatpush1.msra.mxu0 0.0
        %1113 = vmatprep.subr.mxu0 0.0
        %1114 = vmatpush1.msra.mxu0 0.0
        %1115 = vmatprep.subr.mxu0 0.0
        %1116 = vmatpush1.msra.mxu0 0.0
        %1117 = vmatprep.subr.mxu0 0.0
        %1118 = vmatpush1.msra.mxu0 0.0
        %1119 = vmatprep.subr.mxu0 0.0
        %1120 = vmatpush1.msra.mxu0 0.0
        %1121 = vmatprep.subr.mxu0 0.0
        %1122 = vmatpush1.msra.mxu0 0.0
        %1123 = vmatprep.subr.mxu0 0.0
        %1124 = vmatpush1.msra.mxu0 0.0
        %1125 = vmatprep.subr.mxu0 0.0
        %1126 = vmatpush1.msra.mxu0 0.0
        %1127 = vmatprep.subr.mxu0 0.0
        %1128 = vmatpush1.msra.mxu0 0.0
        %1129 = vmatprep.subr.mxu0 0.0
        %1130 = vmatpush1.msra.mxu0 0.0
        %1131 = vmatprep.subr.mxu0 0.0
        %1132 = vmatpush1.msra.mxu0 0.0
        %1133 = vmatprep.subr.mxu0 0.0
        %1134 = vmatpush1.msra.mxu0 0.0
        %1135 = vmatprep.subr.mxu0 0.0
        %1136 = vmatpush1.msra.mxu0 0.0
        %1137 = vmatprep.subr.mxu0 0.0
        %1138 = vmatpush1.msra.mxu0 0.0
        %1139 = vmatprep.subr.mxu0 0.0
        %1140 = vmatpush1.msra.mxu0 0.0
        %1141 = vmatprep.subr.mxu0 0.0
        %1142 = vmatpush1.msra.mxu0 0.0
        %1143 = vmatprep.subr.mxu0 0.0
        %1144 = vmatpush1.msra.mxu0 0.0
        %1145 = vmatprep.subr.mxu0 0.0
        %1146 = vmatpush1.msra.mxu0 0.0
        %1147 = vmatprep.subr.mxu0 0.0
        %1148 = vmatpush1.msra.mxu0 0.0
        %1149 = vmatprep.subr.mxu0 0.0
        %1150 = vmatpush1.msra.mxu0 0.0
        %1151 = vmatprep.subr.mxu0 0.0
        %1152 = vmatpush1.msra.mxu0 0.0
        %1153 = vmatprep.subr.mxu0 0.0
        %1154 = vmatpush1.msra.mxu0 0.0
        %1155 = vmatprep.subr.mxu0 0.0
        %1156 = vmatpush1.msra.mxu0 0.0
        %1157 = vmatprep.subr.mxu0 0.0
        %1158 = vmatpush1.msra.mxu0 0.0
        %1159 = vmatprep.subr.mxu0 0.0
        %1160 = vmatpush1.msra.mxu0 0.0
        %1161 = vmatprep.mubr.f32.mxu0 0.0
        %1162 = vmatmul.mubr.f32.gmra.mrb[0].mxu0 %v1095
        %v1163 = vpop.f32.mrb[0].mxu0
        %v1164 = vadd.f32 %v142, %v1163
        %v1165 = vpop.f32.mrb[0].mxu0
        %1166 = vdwg.mxu0
        %v1167 = vtanh.pop %v1164
        %v1169 = vsel %vm374, %v1167, 0
        %1171 = vmatprep.subr.mxu0 0.0
        %1172 = vmatpush1.msra.mxu0 %v160
        %1173 = vmatprep.subr.mxu0 0.0
        %1174 = vmatpush1.msra.mxu0 %v161
        %1175 = vmatprep.subr.mxu0 0.0
        %1176 = vmatpush1.msra.mxu0 %v162
        %1177 = vmatprep.subr.mxu0 0.0
        %1178 = vmatpush1.msra.mxu0 %v163
        %1179 = vmatprep.subr.mxu0 0.0
        %1180 = vmatpush1.msra.mxu0 0.0
        %1181 = vmatprep.subr.mxu0 0.0
        %1182 = vmatpush1.msra.mxu0 0.0
        %1183 = vmatprep.subr.mxu0 0.0
        %1184 = vmatpush1.msra.mxu0 0.0
        %1185 = vmatprep.subr.mxu0 0.0
        %1186 = vmatpush1.msra.mxu0 0.0
        %1187 = vmatprep.subr.mxu0 0.0
        %1188 = vmatpush1.msra.mxu0 0.0
        %1189 = vmatprep.subr.mxu0 0.0
        %1190 = vmatpush1.msra.mxu0 0.0
        %1191 = vmatprep.subr.mxu0 0.0
        %1192 = vmatpush1.msra.mxu0 0.0
        %1193 = vmatprep.subr.mxu0 0.0
        %1194 = vmatpush1.msra.mxu0 0.0
        %1195 = vmatprep.subr.mxu0 0.0
        %1196 = vmatpush1.msra.mxu0 0.0
        %1197 = vmatprep.subr.mxu0 0.0
        %1198 = vmatpush1.msra.mxu0 0.0
        %1199 = vmatprep.subr.mxu0 0.0
        %1200 = vmatpush1.msra.mxu0 0.0
        %1201 = vmatprep.subr.mxu0 0.0
        %1202 = vmatpush1.msra.mxu0 0.0
        %1203 = vmatprep.subr.mxu0 0.0
        %1204 = vmatpush1.msra.mxu0 0.0
        %1205 = vmatprep.subr.mxu0 0.0
        %1206 = vmatpush1.msra.mxu0 0.0
        %1207 = vmatprep.subr.mxu0 0.0
        %1208 = vmatpush1.msra.mxu0 0.0
        %1209 = vmatprep.subr.mxu0 0.0
        %1210 = vmatpush1.msra.mxu0 0.0
        %1211 = vmatprep.subr.mxu0 0.0
        %1212 = vmatpush1.msra.mxu0 0.0
        %1213 = vmatprep.subr.mxu0 0.0
        %1214 = vmatpush1.msra.mxu0 0.0
        %1215 = vmatprep.subr.mxu0 0.0
        %1216 = vmatpush1.msra.mxu0 0.0
        %1217 = vmatprep.subr.mxu0 0.0
        %1218 = vmatpush1.msra.mxu0 0.0
        %1219 = vmatprep.subr.mxu0 0.0
        %1220 = vmatpush1.msra.mxu0 0.0
        %1221 = vmatprep.subr.mxu0 0.0
        %1222 = vmatpush1.msra.mxu0 0.0
        %1223 = vmatprep.subr.mxu0 0.0
        %1224 = vmatpush1.msra.mxu0 0.0
        %1225 = vmatprep.subr.mxu0 0.0
        %1226 = vmatpush1.msra.mxu0 0.0
        %1227 = vmatprep.subr.mxu0 0.0
        %1228 = vmatpush1.msra.mxu0 0.0
        %1229 = vmatprep.subr.mxu0 0.0
        %1230 = vmatpush1.msra.mxu0 0.0
        %1231 = vmatprep.subr.mxu0 0.0
        %1232 = vmatpush1.msra.mxu0 0.0
        %1233 = vmatprep.subr.mxu0 0.0
        %1234 = vmatpush1.msra.mxu0 0.0
        %1235 = vmatprep.mubr.f32.mxu0 0.0
        %1236 = vmatmul.mubr.f32.gmra.mrb[0].mxu0 %v1169
        %v1237 = vpop.f32.mrb[0].mxu0
        %v1238 = vadd.f32 %v164, %v1237
        %v1239 = vpop.f32.mrb[0].mxu0
        %1240 = vdwg.mxu0
        %v1241 = vsel %vm685, %v1238, -inf
        %1242 = vmax.xlane.f32.xlu0 %v1241
        %v1243 = vpop.xlane.xlu0 %1242
        %v1244 = vsub.f32 %v1238, %v1243
        %v1245 = vmul.f32 %v1244, 1.442695
        %v1246 = vpow.pop %v1245
        %v1247 = vsel %vm685, %v1246, 0.0
        %1248 = vadd.xlane.f32.xlu0 %v1247
        %v1249 = vpop.xlane.xlu0 %1248
        %v1250 = vlog2.pop %v1249
        %v1251 = vmul.f32 %v1250, 0.6931472
        %v1252 = vadd.f32 %v1251, %v1243
        %v1253 = vsub.f32 %v1238, %v1252
        %1254 = vst [vmem:[%s133 + $0x2] sm:$0x1] %v1253
        %v1255 = vsub.f32 %v1243, %v1252
        %vm1256 = vcmp.eq.f32.partialorder %v1253, %v1255
        %v1257 = vsel %vm1256, %v135, 2147483647
        %v1258 = vsel %vm685, %v1257, 2147483647
        %v1259 = vand.u32 %v1258, 65535
        %v1260 = vshra.s32 %v1258, 16
        %v1261 = vcvt.s32.f32 %v1259
        %v1262 = vcvt.s32.f32 %v1260
        %1263 = vmin.xlane.f32.xlu0 %v1262
        %v1264 = vpop.xlane.xlu0 %1263
        %vm1265 = vcmp.eq.f32.partialorder %v1262, %v1264
        %v1266 = vsel %vm1265, %v1261, inf
        %1267 = vmin.xlane.f32.xlu0 %v1266
        %v1268 = vpop.xlane.xlu0 %1267
        %v1269 = vcvt.f32.s32 %v1268
        %v1270 = vcvt.f32.s32 %v1264
        %v1271 = vshll.u32 %v1270, 16
        %v1272 = vadd.s32 %v1271, %v1269
        %vm1273 = vcmp.eq.s32.totalorder %v135, %v1272
        %v1274 = vsel %vm1273, 1, 0
        %v1275 = vcvt.s32.f32 %v1274
        %vm1276 = vcmp.eq.s32.totalorder %v1272, 4
        %vm1277 = vcmp.eq.s32.totalorder %v1272, 5
        %vm1278 = vmor %vm1276, %vm1277
        %vm1279 = vcmp.eq.s32.totalorder %v1272, 6
        %vm1280 = vmor %vm1278, %vm1279
        %vm1281 = vcmp.lt.s32.totalorder %v1005, 3
        %vm1282 = vmand %vm1280, %vm1281
        %v1283 = vadd.s32 %v1005, 1
        %v1284 = vsel %vm1282, %v1283, %v1005
        %vm1285 = vcmp.lt.s32.totalorder %v1284, 7
        %v1286 = vsel %vm1285, %v1284, 7
        %v1287 = vlaneseq
        %v1288 = vshrl.u32 %v1287, 7
        %v1289 = vsub.s32 0, %v1288
        %v1290 = vrot.slane %v1286, %v1289
        %vm1291 = vcmp.eq.s32.totalorder %v137, %v1290
        %v1292 = vsel %vm1291, 1, 0
        %v1293 = vcvt.s32.f32 %v1292
        %v1294 = vmul.f32 %v1293, %v143
        %v1295 = vsel %vm374, %v1294, 0.0
        %v1296 = vrot.slane %v1295, 4
        %v1297 = vadd.f32 %v1295, %v1296
        %v1298 = vrot.slane %v1297, 2
        %v1299 = vadd.f32 %v1297, %v1298
        %v1300 = vrot.slane %v1299, 1
        %v1301 = vadd.f32 %v1299, %v1300
        %1302 = vmatprep.subr.mxu0 0.0
        %1303 = vmatpush1.msra.mxu0 %v144
        %1304 = vmatprep.subr.mxu0 0.0
        %1305 = vmatpush1.msra.mxu0 %v145
        %1306 = vmatprep.subr.mxu0 0.0
        %1307 = vmatpush1.msra.mxu0 %v146
        %1308 = vmatprep.subr.mxu0 0.0
        %1309 = vmatpush1.msra.mxu0 %v147
        %1310 = vmatprep.subr.mxu0 0.0
        %1311 = vmatpush1.msra.mxu0 %v148
        %1312 = vmatprep.subr.mxu0 0.0
        %1313 = vmatpush1.msra.mxu0 %v149
        %1314 = vmatprep.subr.mxu0 0.0
        %1315 = vmatpush1.msra.mxu0 %v150
        %1316 = vmatprep.subr.mxu0 0.0
        %1317 = vmatpush1.msra.mxu0 %v151
        %1318 = vmatprep.subr.mxu0 0.0
        %1319 = vmatpush1.msra.mxu0 %v152
        %1320 = vmatprep.subr.mxu0 0.0
        %1321 = vmatpush1.msra.mxu0 %v153
        %1322 = vmatprep.subr.mxu0 0.0
        %1323 = vmatpush1.msra.mxu0 %v154
        %1324 = vmatprep.subr.mxu0 0.0
        %1325 = vmatpush1.msra.mxu0 %v155
        %1326 = vmatprep.subr.mxu0 0.0
        %1327 = vmatpush1.msra.mxu0 %v156
        %1328 = vmatprep.subr.mxu0 0.0
        %1329 = vmatpush1.msra.mxu0 %v157
        %1330 = vmatprep.subr.mxu0 0.0
        %1331 = vmatpush1.msra.mxu0 %v158
        %1332 = vmatprep.subr.mxu0 0.0
        %1333 = vmatpush1.msra.mxu0 %v159
        %1334 = vmatprep.subr.mxu0 0.0
        %1335 = vmatpush1.msra.mxu0 0.0
        %1336 = vmatprep.subr.mxu0 0.0
        %1337 = vmatpush1.msra.mxu0 0.0
        %1338 = vmatprep.subr.mxu0 0.0
        %1339 = vmatpush1.msra.mxu0 0.0
        %1340 = vmatprep.subr.mxu0 0.0
        %1341 = vmatpush1.msra.mxu0 0.0
        %1342 = vmatprep.subr.mxu0 0.0
        %1343 = vmatpush1.msra.mxu0 0.0
        %1344 = vmatprep.subr.mxu0 0.0
        %1345 = vmatpush1.msra.mxu0 0.0
        %1346 = vmatprep.subr.mxu0 0.0
        %1347 = vmatpush1.msra.mxu0 0.0
        %1348 = vmatprep.subr.mxu0 0.0
        %1349 = vmatpush1.msra.mxu0 0.0
        %1350 = vmatprep.subr.mxu0 0.0
        %1351 = vmatpush1.msra.mxu0 0.0
        %1352 = vmatprep.subr.mxu0 0.0
        %1353 = vmatpush1.msra.mxu0 0.0
        %1354 = vmatprep.subr.mxu0 0.0
        %1355 = vmatpush1.msra.mxu0 0.0
        %1356 = vmatprep.subr.mxu0 0.0
        %1357 = vmatpush1.msra.mxu0 0.0
        %1358 = vmatprep.subr.mxu0 0.0
        %1359 = vmatpush1.msra.mxu0 0.0
        %1360 = vmatprep.subr.mxu0 0.0
        %1361 = vmatpush1.msra.mxu0 0.0
        %1362 = vmatprep.subr.mxu0 0.0
        %1363 = vmatpush1.msra.mxu0 0.0
        %1364 = vmatprep.subr.mxu0 0.0
        %1365 = vmatpush1.msra.mxu0 0.0
        %1366 = vmatprep.mubr.f32.mxu0 0.0
        %1367 = vmatmul.mubr.f32.gmra.mrb[0].mxu0 %v1275
        %v1368 = vpop.f32.mrb[0].mxu0
        %v1369 = vadd.f32 %v1301, %v1368
        %v1370 = vpop.f32.mrb[0].mxu0
        %1371 = vdwg.mxu0
        %v1372 = vadd.f32 %v1369, %v452
        %v1374 = vsel %vm374, %v1372, 0
        %1376 = vmatprep.subr.mxu0 0.0
        %1377 = vmatpush1.msra.mxu0 %v138
        %1378 = vmatprep.subr.mxu0 0.0
        %1379 = vmatpush1.msra.mxu0 %v139
        %1380 = vmatprep.subr.mxu0 0.0
        %1381 = vmatpush1.msra.mxu0 %v140
        %1382 = vmatprep.subr.mxu0 0.0
        %1383 = vmatpush1.msra.mxu0 %v141
        %1384 = vmatprep.subr.mxu0 0.0
        %1385 = vmatpush1.msra.mxu0 0.0
        %1386 = vmatprep.subr.mxu0 0.0
        %1387 = vmatpush1.msra.mxu0 0.0
        %1388 = vmatprep.subr.mxu0 0.0
        %1389 = vmatpush1.msra.mxu0 0.0
        %1390 = vmatprep.subr.mxu0 0.0
        %1391 = vmatpush1.msra.mxu0 0.0
        %1392 = vmatprep.subr.mxu0 0.0
        %1393 = vmatpush1.msra.mxu0 0.0
        %1394 = vmatprep.subr.mxu0 0.0
        %1395 = vmatpush1.msra.mxu0 0.0
        %1396 = vmatprep.subr.mxu0 0.0
        %1397 = vmatpush1.msra.mxu0 0.0
        %1398 = vmatprep.subr.mxu0 0.0
        %1399 = vmatpush1.msra.mxu0 0.0
        %1400 = vmatprep.subr.mxu0 0.0
        %1401 = vmatpush1.msra.mxu0 0.0
        %1402 = vmatprep.subr.mxu0 0.0
        %1403 = vmatpush1.msra.mxu0 0.0
        %1404 = vmatprep.subr.mxu0 0.0
        %1405 = vmatpush1.msra.mxu0 0.0
        %1406 = vmatprep.subr.mxu0 0.0
        %1407 = vmatpush1.msra.mxu0 0.0
        %1408 = vmatprep.subr.mxu0 0.0
        %1409 = vmatpush1.msra.mxu0 0.0
        %1410 = vmatprep.subr.mxu0 0.0
        %1411 = vmatpush1.msra.mxu0 0.0
        %1412 = vmatprep.subr.mxu0 0.0
        %1413 = vmatpush1.msra.mxu0 0.0
        %1414 = vmatprep.subr.mxu0 0.0
        %1415 = vmatpush1.msra.mxu0 0.0
        %1416 = vmatprep.subr.mxu0 0.0
        %1417 = vmatpush1.msra.mxu0 0.0
        %1418 = vmatprep.subr.mxu0 0.0
        %1419 = vmatpush1.msra.mxu0 0.0
        %1420 = vmatprep.subr.mxu0 0.0
        %1421 = vmatpush1.msra.mxu0 0.0
        %1422 = vmatprep.subr.mxu0 0.0
        %1423 = vmatpush1.msra.mxu0 0.0
        %1424 = vmatprep.subr.mxu0 0.0
        %1425 = vmatpush1.msra.mxu0 0.0
        %1426 = vmatprep.subr.mxu0 0.0
        %1427 = vmatpush1.msra.mxu0 0.0
        %1428 = vmatprep.subr.mxu0 0.0
        %1429 = vmatpush1.msra.mxu0 0.0
        %1430 = vmatprep.subr.mxu0 0.0
        %1431 = vmatpush1.msra.mxu0 0.0
        %1432 = vmatprep.subr.mxu0 0.0
        %1433 = vmatpush1.msra.mxu0 0.0
        %1434 = vmatprep.subr.mxu0 0.0
        %1435 = vmatpush1.msra.mxu0 0.0
        %1436 = vmatprep.subr.mxu0 0.0
        %1437 = vmatpush1.msra.mxu0 0.0
        %1438 = vmatprep.subr.mxu0 0.0
        %1439 = vmatpush1.msra.mxu0 0.0
        %1440 = vmatprep.mubr.f32.mxu0 0.0
        %1441 = vmatmul.mubr.f32.gmra.mrb[0].mxu0 %v1374
        %v1442 = vpop.f32.mrb[0].mxu0
        %v1443 = vadd.f32 %v142, %v1442
        %v1444 = vpop.f32.mrb[0].mxu0
        %1445 = vdwg.mxu0
        %v1446 = vtanh.pop %v1443
        %v1448 = vsel %vm374, %v1446, 0
        %1450 = vmatprep.subr.mxu0 0.0
        %1451 = vmatpush1.msra.mxu0 %v160
        %1452 = vmatprep.subr.mxu0 0.0
        %1453 = vmatpush1.msra.mxu0 %v161
        %1454 = vmatprep.subr.mxu0 0.0
        %1455 = vmatpush1.msra.mxu0 %v162
        %1456 = vmatprep.subr.mxu0 0.0
        %1457 = vmatpush1.msra.mxu0 %v163
        %1458 = vmatprep.subr.mxu0 0.0
        %1459 = vmatpush1.msra.mxu0 0.0
        %1460 = vmatprep.subr.mxu0 0.0
        %1461 = vmatpush1.msra.mxu0 0.0
        %1462 = vmatprep.subr.mxu0 0.0
        %1463 = vmatpush1.msra.mxu0 0.0
        %1464 = vmatprep.subr.mxu0 0.0
        %1465 = vmatpush1.msra.mxu0 0.0
        %1466 = vmatprep.subr.mxu0 0.0
        %1467 = vmatpush1.msra.mxu0 0.0
        %1468 = vmatprep.subr.mxu0 0.0
        %1469 = vmatpush1.msra.mxu0 0.0
        %1470 = vmatprep.subr.mxu0 0.0
        %1471 = vmatpush1.msra.mxu0 0.0
        %1472 = vmatprep.subr.mxu0 0.0
        %1473 = vmatpush1.msra.mxu0 0.0
        %1474 = vmatprep.subr.mxu0 0.0
        %1475 = vmatpush1.msra.mxu0 0.0
        %1476 = vmatprep.subr.mxu0 0.0
        %1477 = vmatpush1.msra.mxu0 0.0
        %1478 = vmatprep.subr.mxu0 0.0
        %1479 = vmatpush1.msra.mxu0 0.0
        %1480 = vmatprep.subr.mxu0 0.0
        %1481 = vmatpush1.msra.mxu0 0.0
        %1482 = vmatprep.subr.mxu0 0.0
        %1483 = vmatpush1.msra.mxu0 0.0
        %1484 = vmatprep.subr.mxu0 0.0
        %1485 = vmatpush1.msra.mxu0 0.0
        %1486 = vmatprep.subr.mxu0 0.0
        %1487 = vmatpush1.msra.mxu0 0.0
        %1488 = vmatprep.subr.mxu0 0.0
        %1489 = vmatpush1.msra.mxu0 0.0
        %1490 = vmatprep.subr.mxu0 0.0
        %1491 = vmatpush1.msra.mxu0 0.0
        %1492 = vmatprep.subr.mxu0 0.0
        %1493 = vmatpush1.msra.mxu0 0.0
        %1494 = vmatprep.subr.mxu0 0.0
        %1495 = vmatpush1.msra.mxu0 0.0
        %1496 = vmatprep.subr.mxu0 0.0
        %1497 = vmatpush1.msra.mxu0 0.0
        %1498 = vmatprep.subr.mxu0 0.0
        %1499 = vmatpush1.msra.mxu0 0.0
        %1500 = vmatprep.subr.mxu0 0.0
        %1501 = vmatpush1.msra.mxu0 0.0
        %1502 = vmatprep.subr.mxu0 0.0
        %1503 = vmatpush1.msra.mxu0 0.0
        %1504 = vmatprep.subr.mxu0 0.0
        %1505 = vmatpush1.msra.mxu0 0.0
        %1506 = vmatprep.subr.mxu0 0.0
        %1507 = vmatpush1.msra.mxu0 0.0
        %1508 = vmatprep.subr.mxu0 0.0
        %1509 = vmatpush1.msra.mxu0 0.0
        %1510 = vmatprep.subr.mxu0 0.0
        %1511 = vmatpush1.msra.mxu0 0.0
        %1512 = vmatprep.subr.mxu0 0.0
        %1513 = vmatpush1.msra.mxu0 0.0
        %1514 = vmatprep.mubr.f32.mxu0 0.0
        %1515 = vmatmul.mubr.f32.gmra.mrb[0].mxu0 %v1448
        %v1516 = vpop.f32.mrb[0].mxu0
        %v1517 = vadd.f32 %v164, %v1516
        %v1518 = vpop.f32.mrb[0].mxu0
        %1519 = vdwg.mxu0
        %v1520 = vsel %vm685, %v1517, -inf
        %1521 = vmax.xlane.f32.xlu0 %v1520
        %v1522 = vpop.xlane.xlu0 %1521
        %v1523 = vsub.f32 %v1517, %v1522
        %v1524 = vmul.f32 %v1523, 1.442695
        %v1525 = vpow.pop %v1524
        %v1526 = vsel %vm685, %v1525, 0.0
        %1527 = vadd.xlane.f32.xlu0 %v1526
        %v1528 = vpop.xlane.xlu0 %1527
        %v1529 = vlog2.pop %v1528
        %v1530 = vmul.f32 %v1529, 0.6931472
        %v1531 = vadd.f32 %v1530, %v1522
        %v1532 = vsub.f32 %v1517, %v1531
        %1533 = vst [vmem:[%s133 + $0x3] sm:$0x1] %v1532
        %v1534 = vsub.f32 %v1522, %v1531
        %vm1535 = vcmp.eq.f32.partialorder %v1532, %v1534
        %v1536 = vsel %vm1535, %v135, 2147483647
        %v1537 = vsel %vm685, %v1536, 2147483647
        %v1538 = vand.u32 %v1537, 65535
        %v1539 = vshra.s32 %v1537, 16
        %v1540 = vcvt.s32.f32 %v1538
        %v1541 = vcvt.s32.f32 %v1539
        %1542 = vmin.xlane.f32.xlu0 %v1541
        %v1543 = vpop.xlane.xlu0 %1542
        %vm1544 = vcmp.eq.f32.partialorder %v1541, %v1543
        %v1545 = vsel %vm1544, %v1540, inf
        %1546 = vmin.xlane.f32.xlu0 %v1545
        %v1547 = vpop.xlane.xlu0 %1546
        %v1548 = vcvt.f32.s32 %v1547
        %v1549 = vcvt.f32.s32 %v1543
        %v1550 = vshll.u32 %v1549, 16
        %v1551 = vadd.s32 %v1550, %v1548
        %vm1552 = vcmp.eq.s32.totalorder %v135, %v1551
        %v1553 = vsel %vm1552, 1, 0
        %v1554 = vcvt.s32.f32 %v1553
        %vm1555 = vcmp.eq.s32.totalorder %v1551, 4
        %vm1556 = vcmp.eq.s32.totalorder %v1551, 5
        %vm1557 = vmor %vm1555, %vm1556
        %vm1558 = vcmp.eq.s32.totalorder %v1551, 6
        %vm1559 = vmor %vm1557, %vm1558
        %vm1560 = vcmp.lt.s32.totalorder %v1284, 3
        %vm1561 = vmand %vm1559, %vm1560
        %v1562 = vadd.s32 %v1284, 1
        %v1563 = vsel %vm1561, %v1562, %v1284
        %vm1564 = vcmp.lt.s32.totalorder %v1563, 7
        %v1565 = vsel %vm1564, %v1563, 7
        %v1566 = vlaneseq
        %v1567 = vshrl.u32 %v1566, 7
        %v1568 = vsub.s32 0, %v1567
        %v1569 = vrot.slane %v1565, %v1568
        %vm1570 = vcmp.eq.s32.totalorder %v137, %v1569
        %v1571 = vsel %vm1570, 1, 0
        %v1572 = vcvt.s32.f32 %v1571
        %v1573 = vmul.f32 %v1572, %v143
        %v1574 = vsel %vm374, %v1573, 0.0
        %v1575 = vrot.slane %v1574, 4
        %v1576 = vadd.f32 %v1574, %v1575
        %v1577 = vrot.slane %v1576, 2
        %v1578 = vadd.f32 %v1576, %v1577
        %v1579 = vrot.slane %v1578, 1
        %v1580 = vadd.f32 %v1578, %v1579
        %1581 = vmatprep.subr.mxu0 0.0
        %1582 = vmatpush1.msra.mxu0 %v144
        %1583 = vmatprep.subr.mxu0 0.0
        %1584 = vmatpush1.msra.mxu0 %v145
        %1585 = vmatprep.subr.mxu0 0.0
        %1586 = vmatpush1.msra.mxu0 %v146
        %1587 = vmatprep.subr.mxu0 0.0
        %1588 = vmatpush1.msra.mxu0 %v147
        %1589 = vmatprep.subr.mxu0 0.0
        %1590 = vmatpush1.msra.mxu0 %v148
        %1591 = vmatprep.subr.mxu0 0.0
        %1592 = vmatpush1.msra.mxu0 %v149
        %1593 = vmatprep.subr.mxu0 0.0
        %1594 = vmatpush1.msra.mxu0 %v150
        %1595 = vmatprep.subr.mxu0 0.0
        %1596 = vmatpush1.msra.mxu0 %v151
        %1597 = vmatprep.subr.mxu0 0.0
        %1598 = vmatpush1.msra.mxu0 %v152
        %1599 = vmatprep.subr.mxu0 0.0
        %1600 = vmatpush1.msra.mxu0 %v153
        %1601 = vmatprep.subr.mxu0 0.0
        %1602 = vmatpush1.msra.mxu0 %v154
        %1603 = vmatprep.subr.mxu0 0.0
        %1604 = vmatpush1.msra.mxu0 %v155
        %1605 = vmatprep.subr.mxu0 0.0
        %1606 = vmatpush1.msra.mxu0 %v156
        %1607 = vmatprep.subr.mxu0 0.0
        %1608 = vmatpush1.msra.mxu0 %v157
        %1609 = vmatprep.subr.mxu0 0.0
        %1610 = vmatpush1.msra.mxu0 %v158
        %1611 = vmatprep.subr.mxu0 0.0
        %1612 = vmatpush1.msra.mxu0 %v159
        %1613 = vmatprep.subr.mxu0 0.0
        %1614 = vmatpush1.msra.mxu0 0.0
        %1615 = vmatprep.subr.mxu0 0.0
        %1616 = vmatpush1.msra.mxu0 0.0
        %1617 = vmatprep.subr.mxu0 0.0
        %1618 = vmatpush1.msra.mxu0 0.0
        %1619 = vmatprep.subr.mxu0 0.0
        %1620 = vmatpush1.msra.mxu0 0.0
        %1621 = vmatprep.subr.mxu0 0.0
        %1622 = vmatpush1.msra.mxu0 0.0
        %1623 = vmatprep.subr.mxu0 0.0
        %1624 = vmatpush1.msra.mxu0 0.0
        %1625 = vmatprep.subr.mxu0 0.0
        %1626 = vmatpush1.msra.mxu0 0.0
        %1627 = vmatprep.subr.mxu0 0.0
        %1628 = vmatpush1.msra.mxu0 0.0
        %1629 = vmatprep.subr.mxu0 0.0
        %1630 = vmatpush1.msra.mxu0 0.0
        %1631 = vmatprep.subr.mxu0 0.0
        %1632 = vmatpush1.msra.mxu0 0.0
        %1633 = vmatprep.subr.mxu0 0.0
        %1634 = vmatpush1.msra.mxu0 0.0
        %1635 = vmatprep.subr.mxu0 0.0
        %1636 = vmatpush1.msra.mxu0 0.0
        %1637 = vmatprep.subr.mxu0 0.0
        %1638 = vmatpush1.msra.mxu0 0.0
        %1639 = vmatprep.subr.mxu0 0.0
        %1640 = vmatpush1.msra.mxu0 0.0
        %1641 = vmatprep.subr.mxu0 0.0
        %1642 = vmatpush1.msra.mxu0 0.0
        %1643 = vmatprep.subr.mxu0 0.0
        %1644 = vmatpush1.msra.mxu0 0.0
        %1645 = vmatprep.mubr.f32.mxu0 0.0
        %1646 = vmatmul.mubr.f32.gmra.mrb[0].mxu0 %v1554
        %v1647 = vpop.f32.mrb[0].mxu0
        %v1648 = vadd.f32 %v1580, %v1647
        %v1649 = vpop.f32.mrb[0].mxu0
        %1650 = vdwg.mxu0
        %v1651 = vadd.f32 %v1648, %v452
        %v1653 = vsel %vm374, %v1651, 0
        %1655 = vmatprep.subr.mxu0 0.0
        %1656 = vmatpush1.msra.mxu0 %v138
        %1657 = vmatprep.subr.mxu0 0.0
        %1658 = vmatpush1.msra.mxu0 %v139
        %1659 = vmatprep.subr.mxu0 0.0
        %1660 = vmatpush1.msra.mxu0 %v140
        %1661 = vmatprep.subr.mxu0 0.0
        %1662 = vmatpush1.msra.mxu0 %v141
        %1663 = vmatprep.subr.mxu0 0.0
        %1664 = vmatpush1.msra.mxu0 0.0
        %1665 = vmatprep.subr.mxu0 0.0
        %1666 = vmatpush1.msra.mxu0 0.0
        %1667 = vmatprep.subr.mxu0 0.0
        %1668 = vmatpush1.msra.mxu0 0.0
        %1669 = vmatprep.subr.mxu0 0.0
        %1670 = vmatpush1.msra.mxu0 0.0
        %1671 = vmatprep.subr.mxu0 0.0
        %1672 = vmatpush1.msra.mxu0 0.0
        %1673 = vmatprep.subr.mxu0 0.0
        %1674 = vmatpush1.msra.mxu0 0.0
        %1675 = vmatprep.subr.mxu0 0.0
        %1676 = vmatpush1.msra.mxu0 0.0
        %1677 = vmatprep.subr.mxu0 0.0
        %1678 = vmatpush1.msra.mxu0 0.0
        %1679 = vmatprep.subr.mxu0 0.0
        %1680 = vmatpush1.msra.mxu0 0.0
        %1681 = vmatprep.subr.mxu0 0.0
        %1682 = vmatpush1.msra.mxu0 0.0
        %1683 = vmatprep.subr.mxu0 0.0
        %1684 = vmatpush1.msra.mxu0 0.0
        %1685 = vmatprep.subr.mxu0 0.0
        %1686 = vmatpush1.msra.mxu0 0.0
        %1687 = vmatprep.subr.mxu0 0.0
        %1688 = vmatpush1.msra.mxu0 0.0
        %1689 = vmatprep.subr.mxu0 0.0
        %1690 = vmatpush1.msra.mxu0 0.0
        %1691 = vmatprep.subr.mxu0 0.0
        %1692 = vmatpush1.msra.mxu0 0.0
        %1693 = vmatprep.subr.mxu0 0.0
        %1694 = vmatpush1.msra.mxu0 0.0
        %1695 = vmatprep.subr.mxu0 0.0
        %1696 = vmatpush1.msra.mxu0 0.0
        %1697 = vmatprep.subr.mxu0 0.0
        %1698 = vmatpush1.msra.mxu0 0.0
        %1699 = vmatprep.subr.mxu0 0.0
        %1700 = vmatpush1.msra.mxu0 0.0
        %1701 = vmatprep.subr.mxu0 0.0
        %1702 = vmatpush1.msra.mxu0 0.0
        %1703 = vmatprep.subr.mxu0 0.0
        %1704 = vmatpush1.msra.mxu0 0.0
        %1705 = vmatprep.subr.mxu0 0.0
        %1706 = vmatpush1.msra.mxu0 0.0
        %1707 = vmatprep.subr.mxu0 0.0
        %1708 = vmatpush1.msra.mxu0 0.0
        %1709 = vmatprep.subr.mxu0 0.0
        %1710 = vmatpush1.msra.mxu0 0.0
        %1711 = vmatprep.subr.mxu0 0.0
        %1712 = vmatpush1.msra.mxu0 0.0
        %1713 = vmatprep.subr.mxu0 0.0
        %1714 = vmatpush1.msra.mxu0 0.0
        %1715 = vmatprep.subr.mxu0 0.0
        %1716 = vmatpush1.msra.mxu0 0.0
        %1717 = vmatprep.subr.mxu0 0.0
        %1718 = vmatpush1.msra.mxu0 0.0
        %1719 = vmatprep.mubr.f32.mxu0 0.0
        %1720 = vmatmul.mubr.f32.gmra.mrb[0].mxu0 %v1653
        %v1721 = vpop.f32.mrb[0].mxu0
        %v1722 = vadd.f32 %v142, %v1721
        %v1723 = vpop.f32.mrb[0].mxu0
        %1724 = vdwg.mxu0
        %v1725 = vtanh.pop %v1722
        %v1727 = vsel %vm374, %v1725, 0
        %1729 = vmatprep.subr.mxu0 0.0
        %1730 = vmatpush1.msra.mxu0 %v160
        %1731 = vmatprep.subr.mxu0 0.0
        %1732 = vmatpush1.msra.mxu0 %v161
        %1733 = vmatprep.subr.mxu0 0.0
        %1734 = vmatpush1.msra.mxu0 %v162
        %1735 = vmatprep.subr.mxu0 0.0
        %1736 = vmatpush1.msra.mxu0 %v163
        %1737 = vmatprep.subr.mxu0 0.0
        %1738 = vmatpush1.msra.mxu0 0.0
        %1739 = vmatprep.subr.mxu0 0.0
        %1740 = vmatpush1.msra.mxu0 0.0
        %1741 = vmatprep.subr.mxu0 0.0
        %1742 = vmatpush1.msra.mxu0 0.0
        %1743 = vmatprep.subr.mxu0 0.0
        %1744 = vmatpush1.msra.mxu0 0.0
        %1745 = vmatprep.subr.mxu0 0.0
        %1746 = vmatpush1.msra.mxu0 0.0
        %1747 = vmatprep.subr.mxu0 0.0
        %1748 = vmatpush1.msra.mxu0 0.0
        %1749 = vmatprep.subr.mxu0 0.0
        %1750 = vmatpush1.msra.mxu0 0.0
        %1751 = vmatprep.subr.mxu0 0.0
        %1752 = vmatpush1.msra.mxu0 0.0
        %1753 = vmatprep.subr.mxu0 0.0
        %1754 = vmatpush1.msra.mxu0 0.0
        %1755 = vmatprep.subr.mxu0 0.0
        %1756 = vmatpush1.msra.mxu0 0.0
        %1757 = vmatprep.subr.mxu0 0.0
        %1758 = vmatpush1.msra.mxu0 0.0
        %1759 = vmatprep.subr.mxu0 0.0
        %1760 = vmatpush1.msra.mxu0 0.0
        %1761 = vmatprep.subr.mxu0 0.0
        %1762 = vmatpush1.msra.mxu0 0.0
        %1763 = vmatprep.subr.mxu0 0.0
        %1764 = vmatpush1.msra.mxu0 0.0
        %1765 = vmatprep.subr.mxu0 0.0
        %1766 = vmatpush1.msra.mxu0 0.0
        %1767 = vmatprep.subr.mxu0 0.0
        %1768 = vmatpush1.msra.mxu0 0.0
        %1769 = vmatprep.subr.mxu0 0.0
        %1770 = vmatpush1.msra.mxu0 0.0
        %1771 = vmatprep.subr.mxu0 0.0
        %1772 = vmatpush1.msra.mxu0 0.0
        %1773 = vmatprep.subr.mxu0 0.0
        %1774 = vmatpush1.msra.mxu0 0.0
        %1775 = vmatprep.subr.mxu0 0.0
        %1776 = vmatpush1.msra.mxu0 0.0
        %1777 = vmatprep.subr.mxu0 0.0
        %1778 = vmatpush1.msra.mxu0 0.0
        %1779 = vmatprep.subr.mxu0 0.0
        %1780 = vmatpush1.msra.mxu0 0.0
        %1781 = vmatprep.subr.mxu0 0.0
        %1782 = vmatpush1.msra.mxu0 0.0
        %1783 = vmatprep.subr.mxu0 0.0
        %1784 = vmatpush1.msra.mxu0 0.0
        %1785 = vmatprep.subr.mxu0 0.0
        %1786 = vmatpush1.msra.mxu0 0.0
        %1787 = vmatprep.subr.mxu0 0.0
        %1788 = vmatpush1.msra.mxu0 0.0
        %1789 = vmatprep.subr.mxu0 0.0
        %1790 = vmatpush1.msra.mxu0 0.0
        %1791 = vmatprep.subr.mxu0 0.0
        %1792 = vmatpush1.msra.mxu0 0.0
        %1793 = vmatprep.mubr.f32.mxu0 0.0
        %1794 = vmatmul.mubr.f32.gmra.mrb[0].mxu0 %v1727
        %v1795 = vpop.f32.mrb[0].mxu0
        %v1796 = vadd.f32 %v164, %v1795
        %v1797 = vpop.f32.mrb[0].mxu0
        %1798 = vdwg.mxu0
        %v1799 = vsel %vm685, %v1796, -inf
        %1800 = vmax.xlane.f32.xlu0 %v1799
        %v1801 = vpop.xlane.xlu0 %1800
        %v1802 = vsub.f32 %v1796, %v1801
        %v1803 = vmul.f32 %v1802, 1.442695
        %v1804 = vpow.pop %v1803
        %v1805 = vsel %vm685, %v1804, 0.0
        %1806 = vadd.xlane.f32.xlu0 %v1805
        %v1807 = vpop.xlane.xlu0 %1806
        %v1808 = vlog2.pop %v1807
        %v1809 = vmul.f32 %v1808, 0.6931472
        %v1810 = vadd.f32 %v1809, %v1801
        %v1811 = vsub.f32 %v1796, %v1810
        %1812 = vst [vmem:[%s133 + $0x4] sm:$0x1] %v1811
        %v1813 = vsub.f32 %v1801, %v1810
        %vm1814 = vcmp.eq.f32.partialorder %v1811, %v1813
        %v1815 = vsel %vm1814, %v135, 2147483647
        %v1816 = vsel %vm685, %v1815, 2147483647
        %v1817 = vand.u32 %v1816, 65535
        %v1818 = vshra.s32 %v1816, 16
        %v1819 = vcvt.s32.f32 %v1817
        %v1820 = vcvt.s32.f32 %v1818
        %1821 = vmin.xlane.f32.xlu0 %v1820
        %v1822 = vpop.xlane.xlu0 %1821
        %vm1823 = vcmp.eq.f32.partialorder %v1820, %v1822
        %v1824 = vsel %vm1823, %v1819, inf
        %1825 = vmin.xlane.f32.xlu0 %v1824
        %v1826 = vpop.xlane.xlu0 %1825
        %v1827 = vcvt.f32.s32 %v1826
        %v1828 = vcvt.f32.s32 %v1822
        %v1829 = vshll.u32 %v1828, 16
        %v1830 = vadd.s32 %v1829, %v1827
        %vm1831 = vcmp.eq.s32.totalorder %v135, %v1830
        %v1832 = vsel %vm1831, 1, 0
        %v1833 = vcvt.s32.f32 %v1832
        %vm1834 = vcmp.eq.s32.totalorder %v1830, 4
        %vm1835 = vcmp.eq.s32.totalorder %v1830, 5
        %vm1836 = vmor %vm1834, %vm1835
        %vm1837 = vcmp.eq.s32.totalorder %v1830, 6
        %vm1838 = vmor %vm1836, %vm1837
        %vm1839 = vcmp.lt.s32.totalorder %v1563, 3
        %vm1840 = vmand %vm1838, %vm1839
        %v1841 = vadd.s32 %v1563, 1
        %v1842 = vsel %vm1840, %v1841, %v1563
        %vm1843 = vcmp.lt.s32.totalorder %v1842, 7
        %v1844 = vsel %vm1843, %v1842, 7
        %v1845 = vlaneseq
        %v1846 = vshrl.u32 %v1845, 7
        %v1847 = vsub.s32 0, %v1846
        %v1848 = vrot.slane %v1844, %v1847
        %vm1849 = vcmp.eq.s32.totalorder %v137, %v1848
        %v1850 = vsel %vm1849, 1, 0
        %v1851 = vcvt.s32.f32 %v1850
        %v1852 = vmul.f32 %v1851, %v143
        %v1853 = vsel %vm374, %v1852, 0.0
        %v1854 = vrot.slane %v1853, 4
        %v1855 = vadd.f32 %v1853, %v1854
        %v1856 = vrot.slane %v1855, 2
        %v1857 = vadd.f32 %v1855, %v1856
        %v1858 = vrot.slane %v1857, 1
        %v1859 = vadd.f32 %v1857, %v1858
        %1860 = vmatprep.subr.mxu0 0.0
        %1861 = vmatpush1.msra.mxu0 %v144
        %1862 = vmatprep.subr.mxu0 0.0
        %1863 = vmatpush1.msra.mxu0 %v145
        %1864 = vmatprep.subr.mxu0 0.0
        %1865 = vmatpush1.msra.mxu0 %v146
        %1866 = vmatprep.subr.mxu0 0.0
        %1867 = vmatpush1.msra.mxu0 %v147
        %1868 = vmatprep.subr.mxu0 0.0
        %1869 = vmatpush1.msra.mxu0 %v148
        %1870 = vmatprep.subr.mxu0 0.0
        %1871 = vmatpush1.msra.mxu0 %v149
        %1872 = vmatprep.subr.mxu0 0.0
        %1873 = vmatpush1.msra.mxu0 %v150
        %1874 = vmatprep.subr.mxu0 0.0
        %1875 = vmatpush1.msra.mxu0 %v151
        %1876 = vmatprep.subr.mxu0 0.0
        %1877 = vmatpush1.msra.mxu0 %v152
        %1878 = vmatprep.subr.mxu0 0.0
        %1879 = vmatpush1.msra.mxu0 %v153
        %1880 = vmatprep.subr.mxu0 0.0
        %1881 = vmatpush1.msra.mxu0 %v154
        %1882 = vmatprep.subr.mxu0 0.0
        %1883 = vmatpush1.msra.mxu0 %v155
        %1884 = vmatprep.subr.mxu0 0.0
        %1885 = vmatpush1.msra.mxu0 %v156
        %1886 = vmatprep.subr.mxu0 0.0
        %1887 = vmatpush1.msra.mxu0 %v157
        %1888 = vmatprep.subr.mxu0 0.0
        %1889 = vmatpush1.msra.mxu0 %v158
        %1890 = vmatprep.subr.mxu0 0.0
        %1891 = vmatpush1.msra.mxu0 %v159
        %1892 = vmatprep.subr.mxu0 0.0
        %1893 = vmatpush1.msra.mxu0 0.0
        %1894 = vmatprep.subr.mxu0 0.0
        %1895 = vmatpush1.msra.mxu0 0.0
        %1896 = vmatprep.subr.mxu0 0.0
        %1897 = vmatpush1.msra.mxu0 0.0
        %1898 = vmatprep.subr.mxu0 0.0
        %1899 = vmatpush1.msra.mxu0 0.0
        %1900 = vmatprep.subr.mxu0 0.0
        %1901 = vmatpush1.msra.mxu0 0.0
        %1902 = vmatprep.subr.mxu0 0.0
        %1903 = vmatpush1.msra.mxu0 0.0
        %1904 = vmatprep.subr.mxu0 0.0
        %1905 = vmatpush1.msra.mxu0 0.0
        %1906 = vmatprep.subr.mxu0 0.0
        %1907 = vmatpush1.msra.mxu0 0.0
        %1908 = vmatprep.subr.mxu0 0.0
        %1909 = vmatpush1.msra.mxu0 0.0
        %1910 = vmatprep.subr.mxu0 0.0
        %1911 = vmatpush1.msra.mxu0 0.0
        %1912 = vmatprep.subr.mxu0 0.0
        %1913 = vmatpush1.msra.mxu0 0.0
        %1914 = vmatprep.subr.mxu0 0.0
        %1915 = vmatpush1.msra.mxu0 0.0
        %1916 = vmatprep.subr.mxu0 0.0
        %1917 = vmatpush1.msra.mxu0 0.0
        %1918 = vmatprep.subr.mxu0 0.0
        %1919 = vmatpush1.msra.mxu0 0.0
        %1920 = vmatprep.subr.mxu0 0.0
        %1921 = vmatpush1.msra.mxu0 0.0
        %1922 = vmatprep.subr.mxu0 0.0
        %1923 = vmatpush1.msra.mxu0 0.0
        %1924 = vmatprep.mubr.f32.mxu0 0.0
        %1925 = vmatmul.mubr.f32.gmra.mrb[0].mxu0 %v1833
        %v1926 = vpop.f32.mrb[0].mxu0
        %v1927 = vadd.f32 %v1859, %v1926
        %v1928 = vpop.f32.mrb[0].mxu0
        %1929 = vdwg.mxu0
        %v1930 = vadd.f32 %v1927, %v452
        %v1932 = vsel %vm374, %v1930, 0
        %1934 = vmatprep.subr.mxu0 0.0
        %1935 = vmatpush1.msra.mxu0 %v138
        %1936 = vmatprep.subr.mxu0 0.0
        %1937 = vmatpush1.msra.mxu0 %v139
        %1938 = vmatprep.subr.mxu0 0.0
        %1939 = vmatpush1.msra.mxu0 %v140
        %1940 = vmatprep.subr.mxu0 0.0
        %1941 = vmatpush1.msra.mxu0 %v141
        %1942 = vmatprep.subr.mxu0 0.0
        %1943 = vmatpush1.msra.mxu0 0.0
        %1944 = vmatprep.subr.mxu0 0.0
        %1945 = vmatpush1.msra.mxu0 0.0
        %1946 = vmatprep.subr.mxu0 0.0
        %1947 = vmatpush1.msra.mxu0 0.0
        %1948 = vmatprep.subr.mxu0 0.0
        %1949 = vmatpush1.msra.mxu0 0.0
        %1950 = vmatprep.subr.mxu0 0.0
        %1951 = vmatpush1.msra.mxu0 0.0
        %1952 = vmatprep.subr.mxu0 0.0
        %1953 = vmatpush1.msra.mxu0 0.0
        %1954 = vmatprep.subr.mxu0 0.0
        %1955 = vmatpush1.msra.mxu0 0.0
        %1956 = vmatprep.subr.mxu0 0.0
        %1957 = vmatpush1.msra.mxu0 0.0
        %1958 = vmatprep.subr.mxu0 0.0
        %1959 = vmatpush1.msra.mxu0 0.0
        %1960 = vmatprep.subr.mxu0 0.0
        %1961 = vmatpush1.msra.mxu0 0.0
        %1962 = vmatprep.subr.mxu0 0.0
        %1963 = vmatpush1.msra.mxu0 0.0
        %1964 = vmatprep.subr.mxu0 0.0
        %1965 = vmatpush1.msra.mxu0 0.0
        %1966 = vmatprep.subr.mxu0 0.0
        %1967 = vmatpush1.msra.mxu0 0.0
        %1968 = vmatprep.subr.mxu0 0.0
        %1969 = vmatpush1.msra.mxu0 0.0
        %1970 = vmatprep.subr.mxu0 0.0
        %1971 = vmatpush1.msra.mxu0 0.0
        %1972 = vmatprep.subr.mxu0 0.0
        %1973 = vmatpush1.msra.mxu0 0.0
        %1974 = vmatprep.subr.mxu0 0.0
        %1975 = vmatpush1.msra.mxu0 0.0
        %1976 = vmatprep.subr.mxu0 0.0
        %1977 = vmatpush1.msra.mxu0 0.0
        %1978 = vmatprep.subr.mxu0 0.0
        %1979 = vmatpush1.msra.mxu0 0.0
        %1980 = vmatprep.subr.mxu0 0.0
        %1981 = vmatpush1.msra.mxu0 0.0
        %1982 = vmatprep.subr.mxu0 0.0
        %1983 = vmatpush1.msra.mxu0 0.0
        %1984 = vmatprep.subr.mxu0 0.0
        %1985 = vmatpush1.msra.mxu0 0.0
        %1986 = vmatprep.subr.mxu0 0.0
        %1987 = vmatpush1.msra.mxu0 0.0
        %1988 = vmatprep.subr.mxu0 0.0
        %1989 = vmatpush1.msra.mxu0 0.0
        %1990 = vmatprep.subr.mxu0 0.0
        %1991 = vmatpush1.msra.mxu0 0.0
        %1992 = vmatprep.subr.mxu0 0.0
        %1993 = vmatpush1.msra.mxu0 0.0
        %1994 = vmatprep.subr.mxu0 0.0
        %1995 = vmatpush1.msra.mxu0 0.0
        %1996 = vmatprep.subr.mxu0 0.0
        %1997 = vmatpush1.msra.mxu0 0.0
        %1998 = vmatprep.mubr.f32.mxu0 0.0
        %1999 = vmatmul.mubr.f32.gmra.mrb[0].mxu0 %v1932
        %v2000 = vpop.f32.mrb[0].mxu0
        %v2001 = vadd.f32 %v142, %v2000
        %v2002 = vpop.f32.mrb[0].mxu0
        %2003 = vdwg.mxu0
        %v2004 = vtanh.pop %v2001
        %v2006 = vsel %vm374, %v2004, 0
        %2008 = vmatprep.subr.mxu0 0.0
        %2009 = vmatpush1.msra.mxu0 %v160
        %2010 = vmatprep.subr.mxu0 0.0
        %2011 = vmatpush1.msra.mxu0 %v161
        %2012 = vmatprep.subr.mxu0 0.0
        %2013 = vmatpush1.msra.mxu0 %v162
        %2014 = vmatprep.subr.mxu0 0.0
        %2015 = vmatpush1.msra.mxu0 %v163
        %2016 = vmatprep.subr.mxu0 0.0
        %2017 = vmatpush1.msra.mxu0 0.0
        %2018 = vmatprep.subr.mxu0 0.0
        %2019 = vmatpush1.msra.mxu0 0.0
        %2020 = vmatprep.subr.mxu0 0.0
        %2021 = vmatpush1.msra.mxu0 0.0
        %2022 = vmatprep.subr.mxu0 0.0
        %2023 = vmatpush1.msra.mxu0 0.0
        %2024 = vmatprep.subr.mxu0 0.0
        %2025 = vmatpush1.msra.mxu0 0.0
        %2026 = vmatprep.subr.mxu0 0.0
        %2027 = vmatpush1.msra.mxu0 0.0
        %2028 = vmatprep.subr.mxu0 0.0
        %2029 = vmatpush1.msra.mxu0 0.0
        %2030 = vmatprep.subr.mxu0 0.0
        %2031 = vmatpush1.msra.mxu0 0.0
        %2032 = vmatprep.subr.mxu0 0.0
        %2033 = vmatpush1.msra.mxu0 0.0
        %2034 = vmatprep.subr.mxu0 0.0
        %2035 = vmatpush1.msra.mxu0 0.0
        %2036 = vmatprep.subr.mxu0 0.0
        %2037 = vmatpush1.msra.mxu0 0.0
        %2038 = vmatprep.subr.mxu0 0.0
        %2039 = vmatpush1.msra.mxu0 0.0
        %2040 = vmatprep.subr.mxu0 0.0
        %2041 = vmatpush1.msra.mxu0 0.0
        %2042 = vmatprep.subr.mxu0 0.0
        %2043 = vmatpush1.msra.mxu0 0.0
        %2044 = vmatprep.subr.mxu0 0.0
        %2045 = vmatpush1.msra.mxu0 0.0
        %2046 = vmatprep.subr.mxu0 0.0
        %2047 = vmatpush1.msra.mxu0 0.0
        %2048 = vmatprep.subr.mxu0 0.0
        %2049 = vmatpush1.msra.mxu0 0.0
        %2050 = vmatprep.subr.mxu0 0.0
        %2051 = vmatpush1.msra.mxu0 0.0
        %2052 = vmatprep.subr.mxu0 0.0
        %2053 = vmatpush1.msra.mxu0 0.0
        %2054 = vmatprep.subr.mxu0 0.0
        %2055 = vmatpush1.msra.mxu0 0.0
        %2056 = vmatprep.subr.mxu0 0.0
        %2057 = vmatpush1.msra.mxu0 0.0
        %2058 = vmatprep.subr.mxu0 0.0
        %2059 = vmatpush1.msra.mxu0 0.0
        %2060 = vmatprep.subr.mxu0 0.0
        %2061 = vmatpush1.msra.mxu0 0.0
        %2062 = vmatprep.subr.mxu0 0.0
        %2063 = vmatpush1.msra.mxu0 0.0
        %2064 = vmatprep.subr.mxu0 0.0
        %2065 = vmatpush1.msra.mxu0 0.0
        %2066 = vmatprep.subr.mxu0 0.0
        %2067 = vmatpush1.msra.mxu0 0.0
        %2068 = vmatprep.subr.mxu0 0.0
        %2069 = vmatpush1.msra.mxu0 0.0
        %2070 = vmatprep.subr.mxu0 0.0
        %2071 = vmatpush1.msra.mxu0 0.0
        %2072 = vmatprep.mubr.f32.mxu0 0.0
        %2073 = vmatmul.mubr.f32.gmra.mrb[0].mxu0 %v2006
        %v2074 = vpop.f32.mrb[0].mxu0
        %v2075 = vadd.f32 %v164, %v2074
        %v2076 = vpop.f32.mrb[0].mxu0
        %2077 = vdwg.mxu0
        %v2078 = vsel %vm685, %v2075, -inf
        %2079 = vmax.xlane.f32.xlu0 %v2078
        %v2080 = vpop.xlane.xlu0 %2079
        %v2081 = vsub.f32 %v2075, %v2080
        %v2082 = vmul.f32 %v2081, 1.442695
        %v2083 = vpow.pop %v2082
        %v2084 = vsel %vm685, %v2083, 0.0
        %2085 = vadd.xlane.f32.xlu0 %v2084
        %v2086 = vpop.xlane.xlu0 %2085
        %v2087 = vlog2.pop %v2086
        %v2088 = vmul.f32 %v2087, 0.6931472
        %v2089 = vadd.f32 %v2088, %v2080
        %v2090 = vsub.f32 %v2075, %v2089
        %2091 = vst [vmem:[%s133 + $0x5] sm:$0x1] %v2090
        %v2092 = vsub.f32 %v2080, %v2089
        %vm2093 = vcmp.eq.f32.partialorder %v2090, %v2092
        %v2094 = vsel %vm2093, %v135, 2147483647
        %v2095 = vsel %vm685, %v2094, 2147483647
        %v2096 = vand.u32 %v2095, 65535
        %v2097 = vshra.s32 %v2095, 16
        %v2098 = vcvt.s32.f32 %v2096
        %v2099 = vcvt.s32.f32 %v2097
        %2100 = vmin.xlane.f32.xlu0 %v2099
        %v2101 = vpop.xlane.xlu0 %2100
        %vm2102 = vcmp.eq.f32.partialorder %v2099, %v2101
        %v2103 = vsel %vm2102, %v2098, inf
        %2104 = vmin.xlane.f32.xlu0 %v2103
        %v2105 = vpop.xlane.xlu0 %2104
        %v2106 = vcvt.f32.s32 %v2105
        %v2107 = vcvt.f32.s32 %v2101
        %v2108 = vshll.u32 %v2107, 16
        %v2109 = vadd.s32 %v2108, %v2106
        %vm2110 = vcmp.eq.s32.totalorder %v135, %v2109
        %v2111 = vsel %vm2110, 1, 0
        %v2112 = vcvt.s32.f32 %v2111
        %vm2113 = vcmp.eq.s32.totalorder %v2109, 4
        %vm2114 = vcmp.eq.s32.totalorder %v2109, 5
        %vm2115 = vmor %vm2113, %vm2114
        %vm2116 = vcmp.eq.s32.totalorder %v2109, 6
        %vm2117 = vmor %vm2115, %vm2116
        %vm2118 = vcmp.lt.s32.totalorder %v1842, 3
        %vm2119 = vmand %vm2117, %vm2118
        %v2120 = vadd.s32 %v1842, 1
        %v2121 = vsel %vm2119, %v2120, %v1842
        %vm2122 = vcmp.lt.s32.totalorder %v2121, 7
        %v2123 = vsel %vm2122, %v2121, 7
        %v2124 = vlaneseq
        %v2125 = vshrl.u32 %v2124, 7
        %v2126 = vsub.s32 0, %v2125
        %v2127 = vrot.slane %v2123, %v2126
        %vm2128 = vcmp.eq.s32.totalorder %v137, %v2127
        %v2129 = vsel %vm2128, 1, 0
        %v2130 = vcvt.s32.f32 %v2129
        %v2131 = vmul.f32 %v2130, %v143
        %v2132 = vsel %vm374, %v2131, 0.0
        %v2133 = vrot.slane %v2132, 4
        %v2134 = vadd.f32 %v2132, %v2133
        %v2135 = vrot.slane %v2134, 2
        %v2136 = vadd.f32 %v2134, %v2135
        %v2137 = vrot.slane %v2136, 1
        %v2138 = vadd.f32 %v2136, %v2137
        %2139 = vmatprep.subr.mxu0 0.0
        %2140 = vmatpush1.msra.mxu0 %v144
        %2141 = vmatprep.subr.mxu0 0.0
        %2142 = vmatpush1.msra.mxu0 %v145
        %2143 = vmatprep.subr.mxu0 0.0
        %2144 = vmatpush1.msra.mxu0 %v146
        %2145 = vmatprep.subr.mxu0 0.0
        %2146 = vmatpush1.msra.mxu0 %v147
        %2147 = vmatprep.subr.mxu0 0.0
        %2148 = vmatpush1.msra.mxu0 %v148
        %2149 = vmatprep.subr.mxu0 0.0
        %2150 = vmatpush1.msra.mxu0 %v149
        %2151 = vmatprep.subr.mxu0 0.0
        %2152 = vmatpush1.msra.mxu0 %v150
        %2153 = vmatprep.subr.mxu0 0.0
        %2154 = vmatpush1.msra.mxu0 %v151
        %2155 = vmatprep.subr.mxu0 0.0
        %2156 = vmatpush1.msra.mxu0 %v152
        %2157 = vmatprep.subr.mxu0 0.0
        %2158 = vmatpush1.msra.mxu0 %v153
        %2159 = vmatprep.subr.mxu0 0.0
        %2160 = vmatpush1.msra.mxu0 %v154
        %2161 = vmatprep.subr.mxu0 0.0
        %2162 = vmatpush1.msra.mxu0 %v155
        %2163 = vmatprep.subr.mxu0 0.0
        %2164 = vmatpush1.msra.mxu0 %v156
        %2165 = vmatprep.subr.mxu0 0.0
        %2166 = vmatpush1.msra.mxu0 %v157
        %2167 = vmatprep.subr.mxu0 0.0
        %2168 = vmatpush1.msra.mxu0 %v158
        %2169 = vmatprep.subr.mxu0 0.0
        %2170 = vmatpush1.msra.mxu0 %v159
        %2171 = vmatprep.subr.mxu0 0.0
        %2172 = vmatpush1.msra.mxu0 0.0
        %2173 = vmatprep.subr.mxu0 0.0
        %2174 = vmatpush1.msra.mxu0 0.0
        %2175 = vmatprep.subr.mxu0 0.0
        %2176 = vmatpush1.msra.mxu0 0.0
        %2177 = vmatprep.subr.mxu0 0.0
        %2178 = vmatpush1.msra.mxu0 0.0
        %2179 = vmatprep.subr.mxu0 0.0
        %2180 = vmatpush1.msra.mxu0 0.0
        %2181 = vmatprep.subr.mxu0 0.0
        %2182 = vmatpush1.msra.mxu0 0.0
        %2183 = vmatprep.subr.mxu0 0.0
        %2184 = vmatpush1.msra.mxu0 0.0
        %2185 = vmatprep.subr.mxu0 0.0
        %2186 = vmatpush1.msra.mxu0 0.0
        %2187 = vmatprep.subr.mxu0 0.0
        %2188 = vmatpush1.msra.mxu0 0.0
        %2189 = vmatprep.subr.mxu0 0.0
        %2190 = vmatpush1.msra.mxu0 0.0
        %2191 = vmatprep.subr.mxu0 0.0
        %2192 = vmatpush1.msra.mxu0 0.0
        %2193 = vmatprep.subr.mxu0 0.0
        %2194 = vmatpush1.msra.mxu0 0.0
        %2195 = vmatprep.subr.mxu0 0.0
        %2196 = vmatpush1.msra.mxu0 0.0
        %2197 = vmatprep.subr.mxu0 0.0
        %2198 = vmatpush1.msra.mxu0 0.0
        %2199 = vmatprep.subr.mxu0 0.0
        %2200 = vmatpush1.msra.mxu0 0.0
        %2201 = vmatprep.subr.mxu0 0.0
        %2202 = vmatpush1.msra.mxu0 0.0
        %2203 = vmatprep.mubr.f32.mxu0 0.0
        %2204 = vmatmul.mubr.f32.gmra.mrb[0].mxu0 %v2112
        %v2205 = vpop.f32.mrb[0].mxu0
        %v2206 = vadd.f32 %v2138, %v2205
        %v2207 = vpop.f32.mrb[0].mxu0
        %2208 = vdwg.mxu0
        %v2209 = vadd.f32 %v2206, %v452
        %v2211 = vsel %vm374, %v2209, 0
        %2213 = vmatprep.subr.mxu0 0.0
        %2214 = vmatpush1.msra.mxu0 %v138
        %2215 = vmatprep.subr.mxu0 0.0
        %2216 = vmatpush1.msra.mxu0 %v139
        %2217 = vmatprep.subr.mxu0 0.0
        %2218 = vmatpush1.msra.mxu0 %v140
        %2219 = vmatprep.subr.mxu0 0.0
        %2220 = vmatpush1.msra.mxu0 %v141
        %2221 = vmatprep.subr.mxu0 0.0
        %2222 = vmatpush1.msra.mxu0 0.0
        %2223 = vmatprep.subr.mxu0 0.0
        %2224 = vmatpush1.msra.mxu0 0.0
        %2225 = vmatprep.subr.mxu0 0.0
        %2226 = vmatpush1.msra.mxu0 0.0
        %2227 = vmatprep.subr.mxu0 0.0
        %2228 = vmatpush1.msra.mxu0 0.0
        %2229 = vmatprep.subr.mxu0 0.0
        %2230 = vmatpush1.msra.mxu0 0.0
        %2231 = vmatprep.subr.mxu0 0.0
        %2232 = vmatpush1.msra.mxu0 0.0
        %2233 = vmatprep.subr.mxu0 0.0
        %2234 = vmatpush1.msra.mxu0 0.0
        %2235 = vmatprep.subr.mxu0 0.0
        %2236 = vmatpush1.msra.mxu0 0.0
        %2237 = vmatprep.subr.mxu0 0.0
        %2238 = vmatpush1.msra.mxu0 0.0
        %2239 = vmatprep.subr.mxu0 0.0
        %2240 = vmatpush1.msra.mxu0 0.0
        %2241 = vmatprep.subr.mxu0 0.0
        %2242 = vmatpush1.msra.mxu0 0.0
        %2243 = vmatprep.subr.mxu0 0.0
        %2244 = vmatpush1.msra.mxu0 0.0
        %2245 = vmatprep.subr.mxu0 0.0
        %2246 = vmatpush1.msra.mxu0 0.0
        %2247 = vmatprep.subr.mxu0 0.0
        %2248 = vmatpush1.msra.mxu0 0.0
        %2249 = vmatprep.subr.mxu0 0.0
        %2250 = vmatpush1.msra.mxu0 0.0
        %2251 = vmatprep.subr.mxu0 0.0
        %2252 = vmatpush1.msra.mxu0 0.0
        %2253 = vmatprep.subr.mxu0 0.0
        %2254 = vmatpush1.msra.mxu0 0.0
        %2255 = vmatprep.subr.mxu0 0.0
        %2256 = vmatpush1.msra.mxu0 0.0
        %2257 = vmatprep.subr.mxu0 0.0
        %2258 = vmatpush1.msra.mxu0 0.0
        %2259 = vmatprep.subr.mxu0 0.0
        %2260 = vmatpush1.msra.mxu0 0.0
        %2261 = vmatprep.subr.mxu0 0.0
        %2262 = vmatpush1.msra.mxu0 0.0
        %2263 = vmatprep.subr.mxu0 0.0
        %2264 = vmatpush1.msra.mxu0 0.0
        %2265 = vmatprep.subr.mxu0 0.0
        %2266 = vmatpush1.msra.mxu0 0.0
        %2267 = vmatprep.subr.mxu0 0.0
        %2268 = vmatpush1.msra.mxu0 0.0
        %2269 = vmatprep.subr.mxu0 0.0
        %2270 = vmatpush1.msra.mxu0 0.0
        %2271 = vmatprep.subr.mxu0 0.0
        %2272 = vmatpush1.msra.mxu0 0.0
        %2273 = vmatprep.subr.mxu0 0.0
        %2274 = vmatpush1.msra.mxu0 0.0
        %2275 = vmatprep.subr.mxu0 0.0
        %2276 = vmatpush1.msra.mxu0 0.0
        %2277 = vmatprep.mubr.f32.mxu0 0.0
        %2278 = vmatmul.mubr.f32.gmra.mrb[0].mxu0 %v2211
        %v2279 = vpop.f32.mrb[0].mxu0
        %v2280 = vadd.f32 %v142, %v2279
        %v2281 = vpop.f32.mrb[0].mxu0
        %2282 = vdwg.mxu0
        %v2283 = vtanh.pop %v2280
        %v2285 = vsel %vm374, %v2283, 0
        %2287 = vmatprep.subr.mxu0 0.0
        %2288 = vmatpush1.msra.mxu0 %v160
        %2289 = vmatprep.subr.mxu0 0.0
        %2290 = vmatpush1.msra.mxu0 %v161
        %2291 = vmatprep.subr.mxu0 0.0
        %2292 = vmatpush1.msra.mxu0 %v162
        %2293 = vmatprep.subr.mxu0 0.0
        %2294 = vmatpush1.msra.mxu0 %v163
        %2295 = vmatprep.subr.mxu0 0.0
        %2296 = vmatpush1.msra.mxu0 0.0
        %2297 = vmatprep.subr.mxu0 0.0
        %2298 = vmatpush1.msra.mxu0 0.0
        %2299 = vmatprep.subr.mxu0 0.0
        %2300 = vmatpush1.msra.mxu0 0.0
        %2301 = vmatprep.subr.mxu0 0.0
        %2302 = vmatpush1.msra.mxu0 0.0
        %2303 = vmatprep.subr.mxu0 0.0
        %2304 = vmatpush1.msra.mxu0 0.0
        %2305 = vmatprep.subr.mxu0 0.0
        %2306 = vmatpush1.msra.mxu0 0.0
        %2307 = vmatprep.subr.mxu0 0.0
        %2308 = vmatpush1.msra.mxu0 0.0
        %2309 = vmatprep.subr.mxu0 0.0
        %2310 = vmatpush1.msra.mxu0 0.0
        %2311 = vmatprep.subr.mxu0 0.0
        %2312 = vmatpush1.msra.mxu0 0.0
        %2313 = vmatprep.subr.mxu0 0.0
        %2314 = vmatpush1.msra.mxu0 0.0
        %2315 = vmatprep.subr.mxu0 0.0
        %2316 = vmatpush1.msra.mxu0 0.0
        %2317 = vmatprep.subr.mxu0 0.0
        %2318 = vmatpush1.msra.mxu0 0.0
        %2319 = vmatprep.subr.mxu0 0.0
        %2320 = vmatpush1.msra.mxu0 0.0
        %2321 = vmatprep.subr.mxu0 0.0
        %2322 = vmatpush1.msra.mxu0 0.0
        %2323 = vmatprep.subr.mxu0 0.0
        %2324 = vmatpush1.msra.mxu0 0.0
        %2325 = vmatprep.subr.mxu0 0.0
        %2326 = vmatpush1.msra.mxu0 0.0
        %2327 = vmatprep.subr.mxu0 0.0
        %2328 = vmatpush1.msra.mxu0 0.0
        %2329 = vmatprep.subr.mxu0 0.0
        %2330 = vmatpush1.msra.mxu0 0.0
        %2331 = vmatprep.subr.mxu0 0.0
        %2332 = vmatpush1.msra.mxu0 0.0
        %2333 = vmatprep.subr.mxu0 0.0
        %2334 = vmatpush1.msra.mxu0 0.0
        %2335 = vmatprep.subr.mxu0 0.0
        %2336 = vmatpush1.msra.mxu0 0.0
        %2337 = vmatprep.subr.mxu0 0.0
        %2338 = vmatpush1.msra.mxu0 0.0
        %2339 = vmatprep.subr.mxu0 0.0
        %2340 = vmatpush1.msra.mxu0 0.0
        %2341 = vmatprep.subr.mxu0 0.0
        %2342 = vmatpush1.msra.mxu0 0.0
        %2343 = vmatprep.subr.mxu0 0.0
        %2344 = vmatpush1.msra.mxu0 0.0
        %2345 = vmatprep.subr.mxu0 0.0
        %2346 = vmatpush1.msra.mxu0 0.0
        %2347 = vmatprep.subr.mxu0 0.0
        %2348 = vmatpush1.msra.mxu0 0.0
        %2349 = vmatprep.subr.mxu0 0.0
        %2350 = vmatpush1.msra.mxu0 0.0
        %2351 = vmatprep.mubr.f32.mxu0 0.0
        %2352 = vmatmul.mubr.f32.gmra.mrb[0].mxu0 %v2285
        %v2353 = vpop.f32.mrb[0].mxu0
        %v2354 = vadd.f32 %v164, %v2353
        %v2355 = vpop.f32.mrb[0].mxu0
        %2356 = vdwg.mxu0
        %v2357 = vsel %vm685, %v2354, -inf
        %2358 = vmax.xlane.f32.xlu0 %v2357
        %v2359 = vpop.xlane.xlu0 %2358
        %v2360 = vsub.f32 %v2354, %v2359
        %v2361 = vmul.f32 %v2360, 1.442695
        %v2362 = vpow.pop %v2361
        %v2363 = vsel %vm685, %v2362, 0.0
        %2364 = vadd.xlane.f32.xlu0 %v2363
        %v2365 = vpop.xlane.xlu0 %2364
        %v2366 = vlog2.pop %v2365
        %v2367 = vmul.f32 %v2366, 0.6931472
        %v2368 = vadd.f32 %v2367, %v2359
        %v2369 = vsub.f32 %v2354, %v2368
        %2370 = vst [vmem:[%s133 + $0x6] sm:$0x1] %v2369
        %v2371 = vsub.f32 %v2359, %v2368
        %vm2372 = vcmp.eq.f32.partialorder %v2369, %v2371
        %v2373 = vsel %vm2372, %v135, 2147483647
        %v2374 = vsel %vm685, %v2373, 2147483647
        %v2375 = vand.u32 %v2374, 65535
        %v2376 = vshra.s32 %v2374, 16
        %v2377 = vcvt.s32.f32 %v2375
        %v2378 = vcvt.s32.f32 %v2376
        %2379 = vmin.xlane.f32.xlu0 %v2378
        %v2380 = vpop.xlane.xlu0 %2379
        %vm2381 = vcmp.eq.f32.partialorder %v2378, %v2380
        %v2382 = vsel %vm2381, %v2377, inf
        %2383 = vmin.xlane.f32.xlu0 %v2382
        %v2384 = vpop.xlane.xlu0 %2383
        %v2385 = vcvt.f32.s32 %v2384
        %v2386 = vcvt.f32.s32 %v2380
        %v2387 = vshll.u32 %v2386, 16
        %v2388 = vadd.s32 %v2387, %v2385
        %vm2389 = vcmp.eq.s32.totalorder %v135, %v2388
        %v2390 = vsel %vm2389, 1, 0
        %v2391 = vcvt.s32.f32 %v2390
        %vm2392 = vcmp.eq.s32.totalorder %v2388, 4
        %vm2393 = vcmp.eq.s32.totalorder %v2388, 5
        %vm2394 = vmor %vm2392, %vm2393
        %vm2395 = vcmp.eq.s32.totalorder %v2388, 6
        %vm2396 = vmor %vm2394, %vm2395
        %vm2397 = vcmp.lt.s32.totalorder %v2121, 3
        %vm2398 = vmand %vm2396, %vm2397
        %v2399 = vadd.s32 %v2121, 1
        %v2400 = vsel %vm2398, %v2399, %v2121
        %vm2401 = vcmp.lt.s32.totalorder %v2400, 7
        %v2402 = vsel %vm2401, %v2400, 7
        %v2403 = vlaneseq
        %v2404 = vshrl.u32 %v2403, 7
        %v2405 = vsub.s32 0, %v2404
        %v2406 = vrot.slane %v2402, %v2405
        %vm2407 = vcmp.eq.s32.totalorder %v137, %v2406
        %v2408 = vsel %vm2407, 1, 0
        %v2409 = vcvt.s32.f32 %v2408
        %v2410 = vmul.f32 %v2409, %v143
        %v2411 = vsel %vm374, %v2410, 0.0
        %v2412 = vrot.slane %v2411, 4
        %v2413 = vadd.f32 %v2411, %v2412
        %v2414 = vrot.slane %v2413, 2
        %v2415 = vadd.f32 %v2413, %v2414
        %v2416 = vrot.slane %v2415, 1
        %v2417 = vadd.f32 %v2415, %v2416
        %2418 = vmatprep.subr.mxu0 0.0
        %2419 = vmatpush1.msra.mxu0 %v144
        %2420 = vmatprep.subr.mxu0 0.0
        %2421 = vmatpush1.msra.mxu0 %v145
        %2422 = vmatprep.subr.mxu0 0.0
        %2423 = vmatpush1.msra.mxu0 %v146
        %2424 = vmatprep.subr.mxu0 0.0
        %2425 = vmatpush1.msra.mxu0 %v147
        %2426 = vmatprep.subr.mxu0 0.0
        %2427 = vmatpush1.msra.mxu0 %v148
        %2428 = vmatprep.subr.mxu0 0.0
        %2429 = vmatpush1.msra.mxu0 %v149
        %2430 = vmatprep.subr.mxu0 0.0
        %2431 = vmatpush1.msra.mxu0 %v150
        %2432 = vmatprep.subr.mxu0 0.0
        %2433 = vmatpush1.msra.mxu0 %v151
        %2434 = vmatprep.subr.mxu0 0.0
        %2435 = vmatpush1.msra.mxu0 %v152
        %2436 = vmatprep.subr.mxu0 0.0
        %2437 = vmatpush1.msra.mxu0 %v153
        %2438 = vmatprep.subr.mxu0 0.0
        %2439 = vmatpush1.msra.mxu0 %v154
        %2440 = vmatprep.subr.mxu0 0.0
        %2441 = vmatpush1.msra.mxu0 %v155
        %2442 = vmatprep.subr.mxu0 0.0
        %2443 = vmatpush1.msra.mxu0 %v156
        %2444 = vmatprep.subr.mxu0 0.0
        %2445 = vmatpush1.msra.mxu0 %v157
        %2446 = vmatprep.subr.mxu0 0.0
        %2447 = vmatpush1.msra.mxu0 %v158
        %2448 = vmatprep.subr.mxu0 0.0
        %2449 = vmatpush1.msra.mxu0 %v159
        %2450 = vmatprep.subr.mxu0 0.0
        %2451 = vmatpush1.msra.mxu0 0.0
        %2452 = vmatprep.subr.mxu0 0.0
        %2453 = vmatpush1.msra.mxu0 0.0
        %2454 = vmatprep.subr.mxu0 0.0
        %2455 = vmatpush1.msra.mxu0 0.0
        %2456 = vmatprep.subr.mxu0 0.0
        %2457 = vmatpush1.msra.mxu0 0.0
        %2458 = vmatprep.subr.mxu0 0.0
        %2459 = vmatpush1.msra.mxu0 0.0
        %2460 = vmatprep.subr.mxu0 0.0
        %2461 = vmatpush1.msra.mxu0 0.0
        %2462 = vmatprep.subr.mxu0 0.0
        %2463 = vmatpush1.msra.mxu0 0.0
        %2464 = vmatprep.subr.mxu0 0.0
        %2465 = vmatpush1.msra.mxu0 0.0
        %2466 = vmatprep.subr.mxu0 0.0
        %2467 = vmatpush1.msra.mxu0 0.0
        %2468 = vmatprep.subr.mxu0 0.0
        %2469 = vmatpush1.msra.mxu0 0.0
        %2470 = vmatprep.subr.mxu0 0.0
        %2471 = vmatpush1.msra.mxu0 0.0
        %2472 = vmatprep.subr.mxu0 0.0
        %2473 = vmatpush1.msra.mxu0 0.0
        %2474 = vmatprep.subr.mxu0 0.0
        %2475 = vmatpush1.msra.mxu0 0.0
        %2476 = vmatprep.subr.mxu0 0.0
        %2477 = vmatpush1.msra.mxu0 0.0
        %2478 = vmatprep.subr.mxu0 0.0
        %2479 = vmatpush1.msra.mxu0 0.0
        %2480 = vmatprep.subr.mxu0 0.0
        %2481 = vmatpush1.msra.mxu0 0.0
        %2482 = vmatprep.mubr.f32.mxu0 0.0
        %2483 = vmatmul.mubr.f32.gmra.mrb[0].mxu0 %v2391
        %v2484 = vpop.f32.mrb[0].mxu0
        %v2485 = vadd.f32 %v2417, %v2484
        %v2486 = vpop.f32.mrb[0].mxu0
        %2487 = vdwg.mxu0
        %v2488 = vadd.f32 %v2485, %v452
        %v2490 = vsel %vm374, %v2488, 0
        %2492 = vmatprep.subr.mxu0 0.0
        %2493 = vmatpush1.msra.mxu0 %v138
        %2494 = vmatprep.subr.mxu0 0.0
        %2495 = vmatpush1.msra.mxu0 %v139
        %2496 = vmatprep.subr.mxu0 0.0
        %2497 = vmatpush1.msra.mxu0 %v140
        %2498 = vmatprep.subr.mxu0 0.0
        %2499 = vmatpush1.msra.mxu0 %v141
        %2500 = vmatprep.subr.mxu0 0.0
        %2501 = vmatpush1.msra.mxu0 0.0
        %2502 = vmatprep.subr.mxu0 0.0
        %2503 = vmatpush1.msra.mxu0 0.0
        %2504 = vmatprep.subr.mxu0 0.0
        %2505 = vmatpush1.msra.mxu0 0.0
        %2506 = vmatprep.subr.mxu0 0.0
        %2507 = vmatpush1.msra.mxu0 0.0
        %2508 = vmatprep.subr.mxu0 0.0
        %2509 = vmatpush1.msra.mxu0 0.0
        %2510 = vmatprep.subr.mxu0 0.0
        %2511 = vmatpush1.msra.mxu0 0.0
        %2512 = vmatprep.subr.mxu0 0.0
        %2513 = vmatpush1.msra.mxu0 0.0
        %2514 = vmatprep.subr.mxu0 0.0
        %2515 = vmatpush1.msra.mxu0 0.0
        %2516 = vmatprep.subr.mxu0 0.0
        %2517 = vmatpush1.msra.mxu0 0.0
        %2518 = vmatprep.subr.mxu0 0.0
        %2519 = vmatpush1.msra.mxu0 0.0
        %2520 = vmatprep.subr.mxu0 0.0
        %2521 = vmatpush1.msra.mxu0 0.0
        %2522 = vmatprep.subr.mxu0 0.0
        %2523 = vmatpush1.msra.mxu0 0.0
        %2524 = vmatprep.subr.mxu0 0.0
        %2525 = vmatpush1.msra.mxu0 0.0
        %2526 = vmatprep.subr.mxu0 0.0
        %2527 = vmatpush1.msra.mxu0 0.0
        %2528 = vmatprep.subr.mxu0 0.0
        %2529 = vmatpush1.msra.mxu0 0.0
        %2530 = vmatprep.subr.mxu0 0.0
        %2531 = vmatpush1.msra.mxu0 0.0
        %2532 = vmatprep.subr.mxu0 0.0
        %2533 = vmatpush1.msra.mxu0 0.0
        %2534 = vmatprep.subr.mxu0 0.0
        %2535 = vmatpush1.msra.mxu0 0.0
        %2536 = vmatprep.subr.mxu0 0.0
        %2537 = vmatpush1.msra.mxu0 0.0
        %2538 = vmatprep.subr.mxu0 0.0
        %2539 = vmatpush1.msra.mxu0 0.0
        %2540 = vmatprep.subr.mxu0 0.0
        %2541 = vmatpush1.msra.mxu0 0.0
        %2542 = vmatprep.subr.mxu0 0.0
        %2543 = vmatpush1.msra.mxu0 0.0
        %2544 = vmatprep.subr.mxu0 0.0
        %2545 = vmatpush1.msra.mxu0 0.0
        %2546 = vmatprep.subr.mxu0 0.0
        %2547 = vmatpush1.msra.mxu0 0.0
        %2548 = vmatprep.subr.mxu0 0.0
        %2549 = vmatpush1.msra.mxu0 0.0
        %2550 = vmatprep.subr.mxu0 0.0
        %2551 = vmatpush1.msra.mxu0 0.0
        %2552 = vmatprep.subr.mxu0 0.0
        %2553 = vmatpush1.msra.mxu0 0.0
        %2554 = vmatprep.subr.mxu0 0.0
        %2555 = vmatpush1.msra.mxu0 0.0
        %2556 = vmatprep.mubr.f32.mxu0 0.0
        %2557 = vmatmul.mubr.f32.gmra.mrb[0].mxu0 %v2490
        %v2558 = vpop.f32.mrb[0].mxu0
        %v2559 = vadd.f32 %v142, %v2558
        %v2560 = vpop.f32.mrb[0].mxu0
        %2561 = vdwg.mxu0
        %v2562 = vtanh.pop %v2559
        %v2564 = vsel %vm374, %v2562, 0
        %2566 = vmatprep.subr.mxu0 0.0
        %2567 = vmatpush1.msra.mxu0 %v160
        %2568 = vmatprep.subr.mxu0 0.0
        %2569 = vmatpush1.msra.mxu0 %v161
        %2570 = vmatprep.subr.mxu0 0.0
        %2571 = vmatpush1.msra.mxu0 %v162
        %2572 = vmatprep.subr.mxu0 0.0
        %2573 = vmatpush1.msra.mxu0 %v163
        %2574 = vmatprep.subr.mxu0 0.0
        %2575 = vmatpush1.msra.mxu0 0.0
        %2576 = vmatprep.subr.mxu0 0.0
        %2577 = vmatpush1.msra.mxu0 0.0
        %2578 = vmatprep.subr.mxu0 0.0
        %2579 = vmatpush1.msra.mxu0 0.0
        %2580 = vmatprep.subr.mxu0 0.0
        %2581 = vmatpush1.msra.mxu0 0.0
        %2582 = vmatprep.subr.mxu0 0.0
        %2583 = vmatpush1.msra.mxu0 0.0
        %2584 = vmatprep.subr.mxu0 0.0
        %2585 = vmatpush1.msra.mxu0 0.0
        %2586 = vmatprep.subr.mxu0 0.0
        %2587 = vmatpush1.msra.mxu0 0.0
        %2588 = vmatprep.subr.mxu0 0.0
        %2589 = vmatpush1.msra.mxu0 0.0
        %2590 = vmatprep.subr.mxu0 0.0
        %2591 = vmatpush1.msra.mxu0 0.0
        %2592 = vmatprep.subr.mxu0 0.0
        %2593 = vmatpush1.msra.mxu0 0.0
        %2594 = vmatprep.subr.mxu0 0.0
        %2595 = vmatpush1.msra.mxu0 0.0
        %2596 = vmatprep.subr.mxu0 0.0
        %2597 = vmatpush1.msra.mxu0 0.0
        %2598 = vmatprep.subr.mxu0 0.0
        %2599 = vmatpush1.msra.mxu0 0.0
        %2600 = vmatprep.subr.mxu0 0.0
        %2601 = vmatpush1.msra.mxu0 0.0
        %2602 = vmatprep.subr.mxu0 0.0
        %2603 = vmatpush1.msra.mxu0 0.0
        %2604 = vmatprep.subr.mxu0 0.0
        %2605 = vmatpush1.msra.mxu0 0.0
        %2606 = vmatprep.subr.mxu0 0.0
        %2607 = vmatpush1.msra.mxu0 0.0
        %2608 = vmatprep.subr.mxu0 0.0
        %2609 = vmatpush1.msra.mxu0 0.0
        %2610 = vmatprep.subr.mxu0 0.0
        %2611 = vmatpush1.msra.mxu0 0.0
        %2612 = vmatprep.subr.mxu0 0.0
        %2613 = vmatpush1.msra.mxu0 0.0
        %2614 = vmatprep.subr.mxu0 0.0
        %2615 = vmatpush1.msra.mxu0 0.0
        %2616 = vmatprep.subr.mxu0 0.0
        %2617 = vmatpush1.msra.mxu0 0.0
        %2618 = vmatprep.subr.mxu0 0.0
        %2619 = vmatpush1.msra.mxu0 0.0
        %2620 = vmatprep.subr.mxu0 0.0
        %2621 = vmatpush1.msra.mxu0 0.0
        %2622 = vmatprep.subr.mxu0 0.0
        %2623 = vmatpush1.msra.mxu0 0.0
        %2624 = vmatprep.subr.mxu0 0.0
        %2625 = vmatpush1.msra.mxu0 0.0
        %2626 = vmatprep.subr.mxu0 0.0
        %2627 = vmatpush1.msra.mxu0 0.0
        %2628 = vmatprep.subr.mxu0 0.0
        %2629 = vmatpush1.msra.mxu0 0.0
        %2630 = vmatprep.mubr.f32.mxu0 0.0
        %2631 = vmatmul.mubr.f32.gmra.mrb[0].mxu0 %v2564
        %v2632 = vpop.f32.mrb[0].mxu0
        %v2633 = vadd.f32 %v164, %v2632
        %v2634 = vpop.f32.mrb[0].mxu0
        %2635 = vdwg.mxu0
        %v2636 = vsel %vm685, %v2633, -inf
        %2637 = vmax.xlane.f32.xlu0 %v2636
        %v2638 = vpop.xlane.xlu0 %2637
        %v2639 = vsub.f32 %v2633, %v2638
        %v2640 = vmul.f32 %v2639, 1.442695
        %v2641 = vpow.pop %v2640
        %v2642 = vsel %vm685, %v2641, 0.0
        %2643 = vadd.xlane.f32.xlu0 %v2642
        %v2644 = vpop.xlane.xlu0 %2643
        %v2645 = vlog2.pop %v2644
        %v2646 = vmul.f32 %v2645, 0.6931472
        %v2647 = vadd.f32 %v2646, %v2638
        %v2648 = vsub.f32 %v2633, %v2647
        %2649 = vst [vmem:[%s133 + $0x7] sm:$0x1] %v2648
        %s2650 = sand.u32 %s78, 1
        %s2651 = scalar_lea.sflag [#allocation6], %s2650
        %s2652 = sand.u32 %s78, 1
        %s2653 = smul.addr %s2652, 8
        %s2654 = scalar_lea.vmem [#allocation5], %s2653
        // Predicated region
        $region29: #{decode_fn.1} parent=27 // pred_check
          %p2655 = pneg %p88
        $region30: #{decode_fn.1} parent=27 // pred_check_branch
          %2657 = sbr.rel (%p2655) target = $region32
        $region31: #{decode_fn.1} parent=27 // pred_region
          %s2659 = ssub.s32 128, 128
          %2660 = vsyncadd %s2651, %s2659
          %s2661 = smul.addr %s28, 128
          %s2662 = scalar_lea.hbm %s4, %s2661
          %s2664 = sshll.u32 %s2654, 4
          %s2665 = int_to_ptr.vmem [resolvable:$true] %s2664
          %2667 = dma.vmem_to_hbm [thread:$0]  %s2665, 128, %s2662, %s2651
        $region32: #{decode_fn.1} parent=27 // pred_fallthru
          _
      $region28: #{decode_fn.1} parent=5 // pred_fallthru
        _
      %p2668 = scmp.le.s32.totalorder 2, %s23
      // Predicated region
      $region33: #{decode_fn.1} parent=5 // pred_check
        %p2669 = pneg %p2668
      $region34: #{decode_fn.1} parent=5 // pred_check_branch
        %2671 = sbr.rel (%p2669) target = $region36
      $region35: #{decode_fn.1} parent=5 // pred_region
        %s2672 = ssub.s32 %s23, 2
        // Predicated region
        $region37: #{decode_fn.1} parent=35 // pred_check
          %p2673 = pneg %p94
        $region38: #{decode_fn.1} parent=35 // pred_check_branch
          %2675 = sbr.rel (%p2673) target = $region40
        $region39: #{decode_fn.1} parent=35 // pred_region
          %s2676 = sand.u32 %s79, 1
          %s2677 = scalar_lea.sflag [#allocation6], %s2676
          %s2678 = sand.u32 %s79, 1
          %s2679 = smul.addr %s2678, 8
          %s2680 = scalar_lea.vmem [#allocation5], %s2679
          %2681 = dma.done %s2677, 128
        $region40: #{decode_fn.1} parent=35 // pred_fallthru
          _
      $region36: #{decode_fn.1} parent=5 // pred_fallthru
        _
    $region6: #{decode_fn.1} parent=1 // loop_footer
      %s27 = sadd.s32 1, %s23
    $region7: #{decode_fn.1} parent=1 // loop_footer_branch
      %22 = sbr.rel target = $region3
    $region8: #{decode_fn.1} parent=1 // loop_exit
      _
    %2682 = vsyncpa [#allocation6], 1
    %s2683 = scalar_lea.sflag [#allocation6], 1
    %2684 = vsyncpa %s2683, 1

</llo_original>
